<compile_context>
chip_gen: v5e
topology: v5e:2x2
jax: 0.10.0
libtpu: 0.0.40
codegen_flags: <defaults>
</compile_context>

<pallas_src>
import functools

import jax
import jax.numpy as jnp
from jax import lax
from jax.experimental import pallas as pl
from jax.experimental.pallas import tpu as pltpu


# --------------------------------------------------------------------------
# Pallas kernel: per-pixel triangle coverage (+ fused flip & 2x2 avg pool)
# --------------------------------------------------------------------------
def _raster_kernel(coef_ref, o_ref, *, nf, render_size, offsets, inv_count,
                   stride, unroll):
    # coef_ref : SMEM (B, nf*9) f32  -- per face, per edge [A, B, C] with
    #            edge(x, y) = A*yp + B*xp + C in NDC coordinates.
    # o_ref    : VMEM (1, TH, W) f32 -- one row tile of the already-flipped
    #            (and, for anti-aliasing, 2x2-average-pooled) alpha map.
    b = pl.program_id(0)
    t = pl.program_id(1)
    _, th, w = o_ref.shape

    inv_is = 1.0 / float(render_size)
    row0 = t * th

    # Output-pixel row / column indices of this tile, kept separable: the edge
    # functions are affine, so only a (TH,1) column and a (1,W) row are needed.
    p = row0 + lax.broadcasted_iota(jnp.int32, (th, 1), 0)   # output rows
    q = lax.broadcasted_iota(jnp.int32, (1, w), 1)           # output cols

    acc = None
    for (dy, dx) in offsets:
        # Vertical flip folded in: output row y_out covers raster row IS-1-y_out.
        y_out = stride * p + dy
        y_r = (render_size - 1) - y_out
        x_r = stride * q + dx
        ycol = (2.0 * y_r.astype(jnp.float32) + 1.0 - render_size) * inv_is  # (TH,1)
        xrow = (2.0 * x_r.astype(jnp.float32) + 1.0 - render_size) * inv_is  # (1,W)

        def body(f, covered):
            base = f * 9
            a0 = coef_ref[b, base + 0]
            b0 = coef_ref[b, base + 1]
            c0 = coef_ref[b, base + 2]
            a1 = coef_ref[b, base + 3]
            b1 = coef_ref[b, base + 4]
            c1 = coef_ref[b, base + 5]
            a2 = coef_ref[b, base + 6]
            b2 = coef_ref[b, base + 7]
            c2 = coef_ref[b, base + 8]
            # Separable edge evaluation: small column/row terms + broadcast add.
            e0 = (a0 * ycol + c0) + (b0 * xrow)   # (TH, W)
            e1 = (a1 * ycol + c1) + (b1 * xrow)
            e2 = (a2 * ycol + c2) + (b2 * xrow)
            mn = jnp.minimum(jnp.minimum(e0, e1), e2)
            mx = jnp.maximum(jnp.maximum(e0, e1), e2)
            # Both windings in one test (the reference duplicates faces with
            # reversed vertex order; that face's edges are exactly -e_i).
            # Same-sign <=> (mn >= 0) | (mx <= 0) <=> mn * mx >= 0  (mn <= mx).
            inside = (mn * mx) >= 0.0
            return covered | inside

        covered = lax.fori_loop(0, nf, body, jnp.zeros((th, w), jnp.bool_),
                                unroll=unroll)
        if len(offsets) == 1:
            acc = covered.astype(jnp.float32)
        elif acc is None:
            acc = covered.astype(jnp.float32)
        else:
            acc = acc + covered.astype(jnp.float32)

    if len(offsets) == 1:
        o_ref[0, :, :] = acc                # non-AA: no scaling needed
    else:
        o_ref[0, :, :] = acc * inv_count    # fused 2x2 average pool


def _pick_tile_rows(out_rows, batch):
    # Prefer large tiles (amortize per-grid-step overhead) but keep >= 2 total
    # grid steps when batch == 1 so both v7x TensorCores have work.  The output
    # block is double-buffered: 2 * tile_rows * W * 4 B stays at a few MiB.
    max_tile = 256
    if out_rows <= max_tile:
        if batch == 1 and out_rows % 16 == 0:
            return out_rows // 2
        return out_rows
    for tr in range(max_tile, 7, -8):
        if out_rows % tr == 0:
            return tr
    return out_rows  # fall back: single full-height tile (still legal block shape)


def rasterize_alpha(edge_coef, render_size, anti_aliasing):
    """edge_coef: (B, Nf, 9) f32 -> flipped (and pooled if AA) alpha map."""
    B, nf, _ = edge_coef.shape
    coef_flat = edge_coef.reshape(B, nf * 9).astype(jnp.float32)

    if anti_aliasing:
        out_hw = render_size // 2
        offsets = ((0, 0), (0, 1), (1, 0), (1, 1))   # fused 2x2 average pool
        stride = 2
    else:
        out_hw = render_size
        offsets = ((0, 0),)
        stride = 1

    tile_rows = _pick_tile_rows(out_hw, B)
    unroll = 4 if nf % 4 == 0 else (2 if nf % 2 == 0 else 1)

    kernel = functools.partial(
        _raster_kernel, nf=nf, render_size=render_size, offsets=offsets,
        inv_count=1.0 / len(offsets), stride=stride, unroll=unroll)

    return pl.pallas_call(
        kernel,
        out_shape=jax.ShapeDtypeStruct((B, out_hw, out_hw), jnp.float32),
        grid=(B, out_hw // tile_rows),
        in_specs=[pl.BlockSpec(memory_space=pltpu.MemorySpace.SMEM)],
        out_specs=pl.BlockSpec((1, tile_rows, out_hw), lambda b, t: (b, t, 0)),
        compiler_params=pltpu.CompilerParams(
            dimension_semantics=("parallel", "parallel")),
    )(coef_flat)


# --------------------------------------------------------------------------
# Plain-JAX glue mirroring the nn.Module
# --------------------------------------------------------------------------
def _vertices_to_faces(vertices, faces):
    # vertices: (B, Nv, 2), faces: (B, Nf, 3) int -> (B, Nf, 3, 2)
    return jax.vmap(lambda v, f: v[f])(vertices, faces)


def _edge_coefficients(face_verts):
    # face_verts: (B, Nf, 3, 2) -> (B, Nf, 9): per edge [A, B, C], e = A*y + B*x + C
    x0, y0 = face_verts[..., 0, 0], face_verts[..., 0, 1]
    x1, y1 = face_verts[..., 1, 0], face_verts[..., 1, 1]
    x2, y2 = face_verts[..., 2, 0], face_verts[..., 2, 1]
    coef = jnp.stack([
        x1 - x0, y0 - y1, x0 * y1 - x1 * y0,
        x2 - x1, y1 - y2, x1 * y2 - x2 * y1,
        x0 - x2, y2 - y0, x2 * y0 - x0 * y2,
    ], axis=-1)
    return coef.astype(jnp.float32)


class RasterizePallas:
    """JAX/Pallas port of the PyTorch `Rasterize` module (forward only)."""

    def __init__(self, image_size, anti_aliasing=True, mode="triangle"):
        if anti_aliasing:
            image_size = image_size * 2
        self.anti_aliasing = anti_aliasing
        self.image_size = image_size
        self.mode = mode

    def __call__(self, vertices, faces):
        assert self.mode == "triangle"
        # NOTE: the reference concatenates faces with reversed winding; the kernel
        # tests both windings in one pass (identical coverage, half the face loop).
        face_verts = _vertices_to_faces(vertices, faces)      # (B, Nf, 3, 2)
        coef = _edge_coefficients(face_verts)                  # (B, Nf, 9)
        render_size = (self.image_size * 2) if self.anti_aliasing else self.image_size
        # Kernel output is already vertically flipped (alpha[:, ::-1, :]) and, when
        # anti_aliasing, already 2x2-average-pooled.
        return rasterize_alpha(coef, render_size, self.anti_aliasing)


# --------------------------------------------------------------------------
# Pure-JAX reference (mirrors the PyTorch module's math) for a sanity check
# --------------------------------------------------------------------------
def _avg_pool_2x2(x):
    B, H, W = x.shape
    return x.reshape(B, H // 2, 2, W // 2, 2).mean(axis=(2, 4))


def _reference_forward(vertices, faces, image_size, anti_aliasing=True):
    if anti_aliasing:
        image_size = image_size * 2
    faces2 = jnp.concatenate([faces, faces[:, :, ::-1]], axis=1)
    fv = _vertices_to_faces(vertices, faces2)  # (B, 2*Nf, 3, 2)
    IS = image_size * 2 if anti_aliasing else image_size

    coords = (2.0 * jnp.arange(IS, dtype=jnp.float32) + 1.0 - IS) / IS
    yp = coords[:, None]
    xp = coords[None, :]

    def g(i, j):
        return fv[:, :, i, j][:, :, None, None]

    x0, y0 = g(0, 0), g(0, 1)
    x1, y1 = g(1, 0), g(1, 1)
    x2, y2 = g(2, 0), g(2, 1)
    c0 = (x1 - x0) * (yp - y0) - (y1 - y0) * (xp - x0)
    c1 = (x2 - x1) * (yp - y1) - (y2 - y1) * (xp - x1)
    c2 = (x0 - x2) * (yp - y2) - (y0 - y2) * (xp - x2)
    inside = (c0 >= 0) & (c1 >= 0) & (c2 >= 0)
    alpha = jnp.any(inside, axis=1).astype(jnp.float32)  # (B, IS, IS)
    alpha = alpha[:, ::-1, :]
    if anti_aliasing:
        alpha = _avg_pool_2x2(alpha)
    return alpha


# --------------------------------------------------------------------------
if __name__ == "__main__":
    key = jax.random.PRNGKey(0)
    kv, kf = jax.random.split(key)

    B, Nv, Nf = 2, 6, 4
    image_size = 32  # module arg; with anti_aliasing=True output is (B, 64, 64)

    vertices = jax.random.uniform(kv, (B, Nv, 2), jnp.float32, -0.9, 0.9)
    faces = jax.random.randint(kf, (B, Nf, 3), 0, Nv, dtype=jnp.int32)

    # --- anti-aliased path -------------------------------------------------
    raster = RasterizePallas(image_size, anti_aliasing=True, mode="triangle")
    alpha = jax.block_until_ready(raster(vertices, faces))
    assert alpha.shape == (B, 2 * image_size, 2 * image_size), alpha.shape
    assert alpha.dtype == jnp.float32

    ref = _reference_forward(vertices, faces, image_size, anti_aliasing=True)
    diff = jnp.abs(alpha - ref)
    # Tolerate isolated boundary-pixel rounding differences between the two
    # algebraically-equivalent edge formulations (each worth 0.25 after pooling),
    # but catch any structural error.
    assert float(jnp.mean(diff)) < 1e-3, float(jnp.mean(diff))
    assert float(jnp.mean(diff > 0.3)) < 1e-3, float(jnp.mean(diff > 0.3))

    # --- non-anti-aliased path ----------------------------------------------
    raster_na = RasterizePallas(image_size, anti_aliasing=False, mode="triangle")
    alpha_na = jax.block_until_ready(raster_na(vertices, faces))
    assert alpha_na.shape == (B, image_size, image_size), alpha_na.shape
    ref_na = _reference_forward(vertices, faces, image_size, anti_aliasing=False)
    assert float(jnp.mean(jnp.abs(alpha_na - ref_na) > 0.5)) < 5e-3

    print("KERNEL_OK")
</pallas_src>

<mosaic_0001>
module attributes {stable_mosaic.version = 11 : i64} {
  func.func @_raster_kernel(%arg0: i32, %arg1: i32, %arg2: memref<2x36xf32, #tpu.memory_space<smem>>, %arg3: memref<1x64x64xf32, #tpu.memory_space<vmem>>) attributes {dimension_semantics = [#tpu.dimension_semantics<parallel>, #tpu.dimension_semantics<parallel>], iteration_bounds = array<i64: 2, 1>, scalar_prefetch = 0 : i64, scratch_operands = 0 : i64, tpu.core_type = #tpu.core_type<tc>, window_params = [{transform_indices = @transform_0, window_bounds = array<i64: 2, 36>}, {transform_indices = @transform_1, window_bounds = array<i64: 1, 64, 64>}]} {
    %c64_i32 = arith.constant 64 : i32
    %0 = arith.muli %arg1, %c64_i32 : i32
    %1 = tpu.iota {dimensions = array<i32: 0>} : vector<64x1xi32>
    %2 = vector.broadcast %0 : i32 to vector<64x1xi32>
    %3 = arith.addi %2, %1 : vector<64x1xi32>
    %4 = tpu.iota {dimensions = array<i32: 1>} : vector<1x64xi32>
    %c2_i32 = arith.constant 2 : i32
    %5 = vector.broadcast %c2_i32 : i32 to vector<64x1xi32>
    %6 = arith.muli %5, %3 : vector<64x1xi32>
    %c0_i32 = arith.constant 0 : i32
    %7 = vector.broadcast %c0_i32 : i32 to vector<64x1xi32>
    %8 = arith.addi %6, %7 : vector<64x1xi32>
    %c127_i32 = arith.constant 127 : i32
    %9 = vector.broadcast %c127_i32 : i32 to vector<64x1xi32>
    %10 = arith.subi %9, %8 : vector<64x1xi32>
    %c2_i32_0 = arith.constant 2 : i32
    %11 = vector.broadcast %c2_i32_0 : i32 to vector<1x64xi32>
    %12 = arith.muli %11, %4 : vector<1x64xi32>
    %c0_i32_1 = arith.constant 0 : i32
    %13 = vector.broadcast %c0_i32_1 : i32 to vector<1x64xi32>
    %14 = arith.addi %12, %13 : vector<1x64xi32>
    %15 = arith.sitofp %10 : vector<64x1xi32> to vector<64x1xf32>
    %cst = arith.constant 2.000000e+00 : f32
    %16 = vector.broadcast %cst : f32 to vector<64x1xf32>
    %17 = arith.mulf %16, %15 : vector<64x1xf32>
    %cst_2 = arith.constant 1.000000e+00 : f32
    %18 = vector.broadcast %cst_2 : f32 to vector<64x1xf32>
    %19 = arith.addf %17, %18 : vector<64x1xf32>
    %cst_3 = arith.constant 1.280000e+02 : f32
    %20 = vector.broadcast %cst_3 : f32 to vector<64x1xf32>
    %21 = arith.subf %19, %20 : vector<64x1xf32>
    %cst_4 = arith.constant 7.812500e-03 : f32
    %22 = vector.broadcast %cst_4 : f32 to vector<64x1xf32>
    %23 = arith.mulf %21, %22 : vector<64x1xf32>
    %24 = arith.sitofp %14 : vector<1x64xi32> to vector<1x64xf32>
    %cst_5 = arith.constant 2.000000e+00 : f32
    %25 = vector.broadcast %cst_5 : f32 to vector<1x64xf32>
    %26 = arith.mulf %25, %24 : vector<1x64xf32>
    %cst_6 = arith.constant 1.000000e+00 : f32
    %27 = vector.broadcast %cst_6 : f32 to vector<1x64xf32>
    %28 = arith.addf %26, %27 : vector<1x64xf32>
    %cst_7 = arith.constant 1.280000e+02 : f32
    %29 = vector.broadcast %cst_7 : f32 to vector<1x64xf32>
    %30 = arith.subf %28, %29 : vector<1x64xf32>
    %cst_8 = arith.constant 7.812500e-03 : f32
    %31 = vector.broadcast %cst_8 : f32 to vector<1x64xf32>
    %32 = arith.mulf %30, %31 : vector<1x64xf32>
    %false = arith.constant false
    %33 = vector.broadcast %false : i1 to vector<64x64xi1>
    %c0_i32_9 = arith.constant 0 : i32
    %c9_i32 = arith.constant 9 : i32
    %34 = arith.muli %c0_i32_9, %c9_i32 : i32
    %c0_i32_10 = arith.constant 0 : i32
    %35 = arith.addi %34, %c0_i32_10 : i32
    %36 = arith.index_cast %arg0 : i32 to index
    %37 = arith.index_cast %35 : i32 to index
    %38 = memref.load %arg2[%36, %37] : memref<2x36xf32, #tpu.memory_space<smem>>
    %c1_i32 = arith.constant 1 : i32
    %39 = arith.addi %34, %c1_i32 : i32
    %40 = arith.index_cast %arg0 : i32 to index
    %41 = arith.index_cast %39 : i32 to index
    %42 = memref.load %arg2[%40, %41] : memref<2x36xf32, #tpu.memory_space<smem>>
    %c2_i32_11 = arith.constant 2 : i32
    %43 = arith.addi %34, %c2_i32_11 : i32
    %44 = arith.index_cast %arg0 : i32 to index
    %45 = arith.index_cast %43 : i32 to index
    %46 = memref.load %arg2[%44, %45] : memref<2x36xf32, #tpu.memory_space<smem>>
    %c3_i32 = arith.constant 3 : i32
    %47 = arith.addi %34, %c3_i32 : i32
    %48 = arith.index_cast %arg0 : i32 to index
    %49 = arith.index_cast %47 : i32 to index
    %50 = memref.load %arg2[%48, %49] : memref<2x36xf32, #tpu.memory_space<smem>>
    %c4_i32 = arith.constant 4 : i32
    %51 = arith.addi %34, %c4_i32 : i32
    %52 = arith.index_cast %arg0 : i32 to index
    %53 = arith.index_cast %51 : i32 to index
    %54 = memref.load %arg2[%52, %53] : memref<2x36xf32, #tpu.memory_space<smem>>
    %c5_i32 = arith.constant 5 : i32
    %55 = arith.addi %34, %c5_i32 : i32
    %56 = arith.index_cast %arg0 : i32 to index
    %57 = arith.index_cast %55 : i32 to index
    %58 = memref.load %arg2[%56, %57] : memref<2x36xf32, #tpu.memory_space<smem>>
    %c6_i32 = arith.constant 6 : i32
    %59 = arith.addi %34, %c6_i32 : i32
    %60 = arith.index_cast %arg0 : i32 to index
    %61 = arith.index_cast %59 : i32 to index
    %62 = memref.load %arg2[%60, %61] : memref<2x36xf32, #tpu.memory_space<smem>>
    %c7_i32 = arith.constant 7 : i32
    %63 = arith.addi %34, %c7_i32 : i32
    %64 = arith.index_cast %arg0 : i32 to index
    %65 = arith.index_cast %63 : i32 to index
    %66 = memref.load %arg2[%64, %65] : memref<2x36xf32, #tpu.memory_space<smem>>
    %c8_i32 = arith.constant 8 : i32
    %67 = arith.addi %34, %c8_i32 : i32
    %68 = arith.index_cast %arg0 : i32 to index
    %69 = arith.index_cast %67 : i32 to index
    %70 = memref.load %arg2[%68, %69] : memref<2x36xf32, #tpu.memory_space<smem>>
    %71 = vector.broadcast %38 : f32 to vector<64x1xf32>
    %72 = arith.mulf %71, %23 : vector<64x1xf32>
    %73 = vector.broadcast %46 : f32 to vector<64x1xf32>
    %74 = arith.addf %72, %73 : vector<64x1xf32>
    %75 = vector.broadcast %42 : f32 to vector<1x64xf32>
    %76 = arith.mulf %75, %32 : vector<1x64xf32>
    %77 = vector.broadcast %74 : vector<64x1xf32> to vector<64x64xf32>
    %78 = vector.broadcast %76 : vector<1x64xf32> to vector<64x64xf32>
    %79 = arith.addf %77, %78 : vector<64x64xf32>
    %80 = vector.broadcast %50 : f32 to vector<64x1xf32>
    %81 = arith.mulf %80, %23 : vector<64x1xf32>
    %82 = vector.broadcast %58 : f32 to vector<64x1xf32>
    %83 = arith.addf %81, %82 : vector<64x1xf32>
    %84 = vector.broadcast %54 : f32 to vector<1x64xf32>
    %85 = arith.mulf %84, %32 : vector<1x64xf32>
    %86 = vector.broadcast %83 : vector<64x1xf32> to vector<64x64xf32>
    %87 = vector.broadcast %85 : vector<1x64xf32> to vector<64x64xf32>
    %88 = arith.addf %86, %87 : vector<64x64xf32>
    %89 = vector.broadcast %62 : f32 to vector<64x1xf32>
    %90 = arith.mulf %89, %23 : vector<64x1xf32>
    %91 = vector.broadcast %70 : f32 to vector<64x1xf32>
    %92 = arith.addf %90, %91 : vector<64x1xf32>
    %93 = vector.broadcast %66 : f32 to vector<1x64xf32>
    %94 = arith.mulf %93, %32 : vector<1x64xf32>
    %95 = vector.broadcast %92 : vector<64x1xf32> to vector<64x64xf32>
    %96 = vector.broadcast %94 : vector<1x64xf32> to vector<64x64xf32>
    %97 = arith.addf %95, %96 : vector<64x64xf32>
    %98 = arith.minimumf %79, %88 : vector<64x64xf32>
    %99 = arith.minimumf %98, %97 : vector<64x64xf32>
    %100 = arith.maximumf %79, %88 : vector<64x64xf32>
    %101 = arith.maximumf %100, %97 : vector<64x64xf32>
    %102 = arith.mulf %99, %101 : vector<64x64xf32>
    %cst_12 = arith.constant 0.000000e+00 : f32
    %103 = vector.broadcast %cst_12 : f32 to vector<64x64xf32>
    %104 = arith.cmpf oge, %102, %103 : vector<64x64xf32>
    %105 = arith.ori %33, %104 : vector<64x64xi1>
    %c1_i32_13 = arith.constant 1 : i32
    %c9_i32_14 = arith.constant 9 : i32
    %106 = arith.muli %c1_i32_13, %c9_i32_14 : i32
    %c0_i32_15 = arith.constant 0 : i32
    %107 = arith.addi %106, %c0_i32_15 : i32
    %108 = arith.index_cast %arg0 : i32 to index
    %109 = arith.index_cast %107 : i32 to index
    %110 = memref.load %arg2[%108, %109] : memref<2x36xf32, #tpu.memory_space<smem>>
    %c1_i32_16 = arith.constant 1 : i32
    %111 = arith.addi %106, %c1_i32_16 : i32
    %112 = arith.index_cast %arg0 : i32 to index
    %113 = arith.index_cast %111 : i32 to index
    %114 = memref.load %arg2[%112, %113] : memref<2x36xf32, #tpu.memory_space<smem>>
    %c2_i32_17 = arith.constant 2 : i32
    %115 = arith.addi %106, %c2_i32_17 : i32
    %116 = arith.index_cast %arg0 : i32 to index
    %117 = arith.index_cast %115 : i32 to index
    %118 = memref.load %arg2[%116, %117] : memref<2x36xf32, #tpu.memory_space<smem>>
    %c3_i32_18 = arith.constant 3 : i32
    %119 = arith.addi %106, %c3_i32_18 : i32
    %120 = arith.index_cast %arg0 : i32 to index
    %121 = arith.index_cast %119 : i32 to index
    %122 = memref.load %arg2[%120, %121] : memref<2x36xf32, #tpu.memory_space<smem>>
    %c4_i32_19 = arith.constant 4 : i32
    %123 = arith.addi %106, %c4_i32_19 : i32
    %124 = arith.index_cast %arg0 : i32 to index
    %125 = arith.index_cast %123 : i32 to index
    %126 = memref.load %arg2[%124, %125] : memref<2x36xf32, #tpu.memory_space<smem>>
    %c5_i32_20 = arith.constant 5 : i32
    %127 = arith.addi %106, %c5_i32_20 : i32
    %128 = arith.index_cast %arg0 : i32 to index
    %129 = arith.index_cast %127 : i32 to index
    %130 = memref.load %arg2[%128, %129] : memref<2x36xf32, #tpu.memory_space<smem>>
    %c6_i32_21 = arith.constant 6 : i32
    %131 = arith.addi %106, %c6_i32_21 : i32
    %132 = arith.index_cast %arg0 : i32 to index
    %133 = arith.index_cast %131 : i32 to index
    %134 = memref.load %arg2[%132, %133] : memref<2x36xf32, #tpu.memory_space<smem>>
    %c7_i32_22 = arith.constant 7 : i32
    %135 = arith.addi %106, %c7_i32_22 : i32
    %136 = arith.index_cast %arg0 : i32 to index
    %137 = arith.index_cast %135 : i32 to index
    %138 = memref.load %arg2[%136, %137] : memref<2x36xf32, #tpu.memory_space<smem>>
    %c8_i32_23 = arith.constant 8 : i32
    %139 = arith.addi %106, %c8_i32_23 : i32
    %140 = arith.index_cast %arg0 : i32 to index
    %141 = arith.index_cast %139 : i32 to index
    %142 = memref.load %arg2[%140, %141] : memref<2x36xf32, #tpu.memory_space<smem>>
    %143 = vector.broadcast %110 : f32 to vector<64x1xf32>
    %144 = arith.mulf %143, %23 : vector<64x1xf32>
    %145 = vector.broadcast %118 : f32 to vector<64x1xf32>
    %146 = arith.addf %144, %145 : vector<64x1xf32>
    %147 = vector.broadcast %114 : f32 to vector<1x64xf32>
    %148 = arith.mulf %147, %32 : vector<1x64xf32>
    %149 = vector.broadcast %146 : vector<64x1xf32> to vector<64x64xf32>
    %150 = vector.broadcast %148 : vector<1x64xf32> to vector<64x64xf32>
    %151 = arith.addf %149, %150 : vector<64x64xf32>
    %152 = vector.broadcast %122 : f32 to vector<64x1xf32>
    %153 = arith.mulf %152, %23 : vector<64x1xf32>
    %154 = vector.broadcast %130 : f32 to vector<64x1xf32>
    %155 = arith.addf %153, %154 : vector<64x1xf32>
    %156 = vector.broadcast %126 : f32 to vector<1x64xf32>
    %157 = arith.mulf %156, %32 : vector<1x64xf32>
    %158 = vector.broadcast %155 : vector<64x1xf32> to vector<64x64xf32>
    %159 = vector.broadcast %157 : vector<1x64xf32> to vector<64x64xf32>
    %160 = arith.addf %158, %159 : vector<64x64xf32>
    %161 = vector.broadcast %134 : f32 to vector<64x1xf32>
    %162 = arith.mulf %161, %23 : vector<64x1xf32>
    %163 = vector.broadcast %142 : f32 to vector<64x1xf32>
    %164 = arith.addf %162, %163 : vector<64x1xf32>
    %165 = vector.broadcast %138 : f32 to vector<1x64xf32>
    %166 = arith.mulf %165, %32 : vector<1x64xf32>
    %167 = vector.broadcast %164 : vector<64x1xf32> to vector<64x64xf32>
    %168 = vector.broadcast %166 : vector<1x64xf32> to vector<64x64xf32>
    %169 = arith.addf %167, %168 : vector<64x64xf32>
    %170 = arith.minimumf %151, %160 : vector<64x64xf32>
    %171 = arith.minimumf %170, %169 : vector<64x64xf32>
    %172 = arith.maximumf %151, %160 : vector<64x64xf32>
    %173 = arith.maximumf %172, %169 : vector<64x64xf32>
    %174 = arith.mulf %171, %173 : vector<64x64xf32>
    %cst_24 = arith.constant 0.000000e+00 : f32
    %175 = vector.broadcast %cst_24 : f32 to vector<64x64xf32>
    %176 = arith.cmpf oge, %174, %175 : vector<64x64xf32>
    %177 = arith.ori %105, %176 : vector<64x64xi1>
    %c2_i32_25 = arith.constant 2 : i32
    %c9_i32_26 = arith.constant 9 : i32
    %178 = arith.muli %c2_i32_25, %c9_i32_26 : i32
    %c0_i32_27 = arith.constant 0 : i32
    %179 = arith.addi %178, %c0_i32_27 : i32
    %180 = arith.index_cast %arg0 : i32 to index
    %181 = arith.index_cast %179 : i32 to index
    %182 = memref.load %arg2[%180, %181] : memref<2x36xf32, #tpu.memory_space<smem>>
    %c1_i32_28 = arith.constant 1 : i32
    %183 = arith.addi %178, %c1_i32_28 : i32
    %184 = arith.index_cast %arg0 : i32 to index
    %185 = arith.index_cast %183 : i32 to index
    %186 = memref.load %arg2[%184, %185] : memref<2x36xf32, #tpu.memory_space<smem>>
    %c2_i32_29 = arith.constant 2 : i32
    %187 = arith.addi %178, %c2_i32_29 : i32
    %188 = arith.index_cast %arg0 : i32 to index
    %189 = arith.index_cast %187 : i32 to index
    %190 = memref.load %arg2[%188, %189] : memref<2x36xf32, #tpu.memory_space<smem>>
    %c3_i32_30 = arith.constant 3 : i32
    %191 = arith.addi %178, %c3_i32_30 : i32
    %192 = arith.index_cast %arg0 : i32 to index
    %193 = arith.index_cast %191 : i32 to index
    %194 = memref.load %arg2[%192, %193] : memref<2x36xf32, #tpu.memory_space<smem>>
    %c4_i32_31 = arith.constant 4 : i32
    %195 = arith.addi %178, %c4_i32_31 : i32
    %196 = arith.index_cast %arg0 : i32 to index
    %197 = arith.index_cast %195 : i32 to index
    %198 = memref.load %arg2[%196, %197] : memref<2x36xf32, #tpu.memory_space<smem>>
    %c5_i32_32 = arith.constant 5 : i32
    %199 = arith.addi %178, %c5_i32_32 : i32
    %200 = arith.index_cast %arg0 : i32 to index
    %201 = arith.index_cast %199 : i32 to index
    %202 = memref.load %arg2[%200, %201] : memref<2x36xf32, #tpu.memory_space<smem>>
    %c6_i32_33 = arith.constant 6 : i32
    %203 = arith.addi %178, %c6_i32_33 : i32
    %204 = arith.index_cast %arg0 : i32 to index
    %205 = arith.index_cast %203 : i32 to index
    %206 = memref.load %arg2[%204, %205] : memref<2x36xf32, #tpu.memory_space<smem>>
    %c7_i32_34 = arith.constant 7 : i32
    %207 = arith.addi %178, %c7_i32_34 : i32
    %208 = arith.index_cast %arg0 : i32 to index
    %209 = arith.index_cast %207 : i32 to index
    %210 = memref.load %arg2[%208, %209] : memref<2x36xf32, #tpu.memory_space<smem>>
    %c8_i32_35 = arith.constant 8 : i32
    %211 = arith.addi %178, %c8_i32_35 : i32
    %212 = arith.index_cast %arg0 : i32 to index
    %213 = arith.index_cast %211 : i32 to index
    %214 = memref.load %arg2[%212, %213] : memref<2x36xf32, #tpu.memory_space<smem>>
    %215 = vector.broadcast %182 : f32 to vector<64x1xf32>
    %216 = arith.mulf %215, %23 : vector<64x1xf32>
    %217 = vector.broadcast %190 : f32 to vector<64x1xf32>
    %218 = arith.addf %216, %217 : vector<64x1xf32>
    %219 = vector.broadcast %186 : f32 to vector<1x64xf32>
    %220 = arith.mulf %219, %32 : vector<1x64xf32>
    %221 = vector.broadcast %218 : vector<64x1xf32> to vector<64x64xf32>
    %222 = vector.broadcast %220 : vector<1x64xf32> to vector<64x64xf32>
    %223 = arith.addf %221, %222 : vector<64x64xf32>
    %224 = vector.broadcast %194 : f32 to vector<64x1xf32>
    %225 = arith.mulf %224, %23 : vector<64x1xf32>
    %226 = vector.broadcast %202 : f32 to vector<64x1xf32>
    %227 = arith.addf %225, %226 : vector<64x1xf32>
    %228 = vector.broadcast %198 : f32 to vector<1x64xf32>
    %229 = arith.mulf %228, %32 : vector<1x64xf32>
    %230 = vector.broadcast %227 : vector<64x1xf32> to vector<64x64xf32>
    %231 = vector.broadcast %229 : vector<1x64xf32> to vector<64x64xf32>
    %232 = arith.addf %230, %231 : vector<64x64xf32>
    %233 = vector.broadcast %206 : f32 to vector<64x1xf32>
    %234 = arith.mulf %233, %23 : vector<64x1xf32>
    %235 = vector.broadcast %214 : f32 to vector<64x1xf32>
    %236 = arith.addf %234, %235 : vector<64x1xf32>
    %237 = vector.broadcast %210 : f32 to vector<1x64xf32>
    %238 = arith.mulf %237, %32 : vector<1x64xf32>
    %239 = vector.broadcast %236 : vector<64x1xf32> to vector<64x64xf32>
    %240 = vector.broadcast %238 : vector<1x64xf32> to vector<64x64xf32>
    %241 = arith.addf %239, %240 : vector<64x64xf32>
    %242 = arith.minimumf %223, %232 : vector<64x64xf32>
    %243 = arith.minimumf %242, %241 : vector<64x64xf32>
    %244 = arith.maximumf %223, %232 : vector<64x64xf32>
    %245 = arith.maximumf %244, %241 : vector<64x64xf32>
    %246 = arith.mulf %243, %245 : vector<64x64xf32>
    %cst_36 = arith.constant 0.000000e+00 : f32
    %247 = vector.broadcast %cst_36 : f32 to vector<64x64xf32>
    %248 = arith.cmpf oge, %246, %247 : vector<64x64xf32>
    %249 = arith.ori %177, %248 : vector<64x64xi1>
    %c3_i32_37 = arith.constant 3 : i32
    %c9_i32_38 = arith.constant 9 : i32
    %250 = arith.muli %c3_i32_37, %c9_i32_38 : i32
    %c0_i32_39 = arith.constant 0 : i32
    %251 = arith.addi %250, %c0_i32_39 : i32
    %252 = arith.index_cast %arg0 : i32 to index
    %253 = arith.index_cast %251 : i32 to index
    %254 = memref.load %arg2[%252, %253] : memref<2x36xf32, #tpu.memory_space<smem>>
    %c1_i32_40 = arith.constant 1 : i32
    %255 = arith.addi %250, %c1_i32_40 : i32
    %256 = arith.index_cast %arg0 : i32 to index
    %257 = arith.index_cast %255 : i32 to index
    %258 = memref.load %arg2[%256, %257] : memref<2x36xf32, #tpu.memory_space<smem>>
    %c2_i32_41 = arith.constant 2 : i32
    %259 = arith.addi %250, %c2_i32_41 : i32
    %260 = arith.index_cast %arg0 : i32 to index
    %261 = arith.index_cast %259 : i32 to index
    %262 = memref.load %arg2[%260, %261] : memref<2x36xf32, #tpu.memory_space<smem>>
    %c3_i32_42 = arith.constant 3 : i32
    %263 = arith.addi %250, %c3_i32_42 : i32
    %264 = arith.index_cast %arg0 : i32 to index
    %265 = arith.index_cast %263 : i32 to index
    %266 = memref.load %arg2[%264, %265] : memref<2x36xf32, #tpu.memory_space<smem>>
    %c4_i32_43 = arith.constant 4 : i32
    %267 = arith.addi %250, %c4_i32_43 : i32
    %268 = arith.index_cast %arg0 : i32 to index
    %269 = arith.index_cast %267 : i32 to index
    %270 = memref.load %arg2[%268, %269] : memref<2x36xf32, #tpu.memory_space<smem>>
    %c5_i32_44 = arith.constant 5 : i32
    %271 = arith.addi %250, %c5_i32_44 : i32
    %272 = arith.index_cast %arg0 : i32 to index
    %273 = arith.index_cast %271 : i32 to index
    %274 = memref.load %arg2[%272, %273] : memref<2x36xf32, #tpu.memory_space<smem>>
    %c6_i32_45 = arith.constant 6 : i32
    %275 = arith.addi %250, %c6_i32_45 : i32
    %276 = arith.index_cast %arg0 : i32 to index
    %277 = arith.index_cast %275 : i32 to index
    %278 = memref.load %arg2[%276, %277] : memref<2x36xf32, #tpu.memory_space<smem>>
    %c7_i32_46 = arith.constant 7 : i32
    %279 = arith.addi %250, %c7_i32_46 : i32
    %280 = arith.index_cast %arg0 : i32 to index
    %281 = arith.index_cast %279 : i32 to index
    %282 = memref.load %arg2[%280, %281] : memref<2x36xf32, #tpu.memory_space<smem>>
    %c8_i32_47 = arith.constant 8 : i32
    %283 = arith.addi %250, %c8_i32_47 : i32
    %284 = arith.index_cast %arg0 : i32 to index
    %285 = arith.index_cast %283 : i32 to index
    %286 = memref.load %arg2[%284, %285] : memref<2x36xf32, #tpu.memory_space<smem>>
    %287 = vector.broadcast %254 : f32 to vector<64x1xf32>
    %288 = arith.mulf %287, %23 : vector<64x1xf32>
    %289 = vector.broadcast %262 : f32 to vector<64x1xf32>
    %290 = arith.addf %288, %289 : vector<64x1xf32>
    %291 = vector.broadcast %258 : f32 to vector<1x64xf32>
    %292 = arith.mulf %291, %32 : vector<1x64xf32>
    %293 = vector.broadcast %290 : vector<64x1xf32> to vector<64x64xf32>
    %294 = vector.broadcast %292 : vector<1x64xf32> to vector<64x64xf32>
    %295 = arith.addf %293, %294 : vector<64x64xf32>
    %296 = vector.broadcast %266 : f32 to vector<64x1xf32>
    %297 = arith.mulf %296, %23 : vector<64x1xf32>
    %298 = vector.broadcast %274 : f32 to vector<64x1xf32>
    %299 = arith.addf %297, %298 : vector<64x1xf32>
    %300 = vector.broadcast %270 : f32 to vector<1x64xf32>
    %301 = arith.mulf %300, %32 : vector<1x64xf32>
    %302 = vector.broadcast %299 : vector<64x1xf32> to vector<64x64xf32>
    %303 = vector.broadcast %301 : vector<1x64xf32> to vector<64x64xf32>
    %304 = arith.addf %302, %303 : vector<64x64xf32>
    %305 = vector.broadcast %278 : f32 to vector<64x1xf32>
    %306 = arith.mulf %305, %23 : vector<64x1xf32>
    %307 = vector.broadcast %286 : f32 to vector<64x1xf32>
    %308 = arith.addf %306, %307 : vector<64x1xf32>
    %309 = vector.broadcast %282 : f32 to vector<1x64xf32>
    %310 = arith.mulf %309, %32 : vector<1x64xf32>
    %311 = vector.broadcast %308 : vector<64x1xf32> to vector<64x64xf32>
    %312 = vector.broadcast %310 : vector<1x64xf32> to vector<64x64xf32>
    %313 = arith.addf %311, %312 : vector<64x64xf32>
    %314 = arith.minimumf %295, %304 : vector<64x64xf32>
    %315 = arith.minimumf %314, %313 : vector<64x64xf32>
    %316 = arith.maximumf %295, %304 : vector<64x64xf32>
    %317 = arith.maximumf %316, %313 : vector<64x64xf32>
    %318 = arith.mulf %315, %317 : vector<64x64xf32>
    %cst_48 = arith.constant 0.000000e+00 : f32
    %319 = vector.broadcast %cst_48 : f32 to vector<64x64xf32>
    %320 = arith.cmpf oge, %318, %319 : vector<64x64xf32>
    %321 = arith.ori %249, %320 : vector<64x64xi1>
    %c4_i32_49 = arith.constant 4 : i32
    %322 = arith.extui %321 : vector<64x64xi1> to vector<64x64xi32>
    %323 = arith.sitofp %322 : vector<64x64xi32> to vector<64x64xf32>
    %c2_i32_50 = arith.constant 2 : i32
    %324 = vector.broadcast %c2_i32_50 : i32 to vector<64x1xi32>
    %325 = arith.muli %324, %3 : vector<64x1xi32>
    %c0_i32_51 = arith.constant 0 : i32
    %326 = vector.broadcast %c0_i32_51 : i32 to vector<64x1xi32>
    %327 = arith.addi %325, %326 : vector<64x1xi32>
    %c127_i32_52 = arith.constant 127 : i32
    %328 = vector.broadcast %c127_i32_52 : i32 to vector<64x1xi32>
    %329 = arith.subi %328, %327 : vector<64x1xi32>
    %c2_i32_53 = arith.constant 2 : i32
    %330 = vector.broadcast %c2_i32_53 : i32 to vector<1x64xi32>
    %331 = arith.muli %330, %4 : vector<1x64xi32>
    %c1_i32_54 = arith.constant 1 : i32
    %332 = vector.broadcast %c1_i32_54 : i32 to vector<1x64xi32>
    %333 = arith.addi %331, %332 : vector<1x64xi32>
    %334 = arith.sitofp %329 : vector<64x1xi32> to vector<64x1xf32>
    %cst_55 = arith.constant 2.000000e+00 : f32
    %335 = vector.broadcast %cst_55 : f32 to vector<64x1xf32>
    %336 = arith.mulf %335, %334 : vector<64x1xf32>
    %cst_56 = arith.constant 1.000000e+00 : f32
    %337 = vector.broadcast %cst_56 : f32 to vector<64x1xf32>
    %338 = arith.addf %336, %337 : vector<64x1xf32>
    %cst_57 = arith.constant 1.280000e+02 : f32
    %339 = vector.broadcast %cst_57 : f32 to vector<64x1xf32>
    %340 = arith.subf %338, %339 : vector<64x1xf32>
    %cst_58 = arith.constant 7.812500e-03 : f32
    %341 = vector.broadcast %cst_58 : f32 to vector<64x1xf32>
    %342 = arith.mulf %340, %341 : vector<64x1xf32>
    %343 = arith.sitofp %333 : vector<1x64xi32> to vector<1x64xf32>
    %cst_59 = arith.constant 2.000000e+00 : f32
    %344 = vector.broadcast %cst_59 : f32 to vector<1x64xf32>
    %345 = arith.mulf %344, %343 : vector<1x64xf32>
    %cst_60 = arith.constant 1.000000e+00 : f32
    %346 = vector.broadcast %cst_60 : f32 to vector<1x64xf32>
    %347 = arith.addf %345, %346 : vector<1x64xf32>
    %cst_61 = arith.constant 1.280000e+02 : f32
    %348 = vector.broadcast %cst_61 : f32 to vector<1x64xf32>
    %349 = arith.subf %347, %348 : vector<1x64xf32>
    %cst_62 = arith.constant 7.812500e-03 : f32
    %350 = vector.broadcast %cst_62 : f32 to vector<1x64xf32>
    %351 = arith.mulf %349, %350 : vector<1x64xf32>
    %false_63 = arith.constant false
    %352 = vector.broadcast %false_63 : i1 to vector<64x64xi1>
    %c0_i32_64 = arith.constant 0 : i32
    %c9_i32_65 = arith.constant 9 : i32
    %353 = arith.muli %c0_i32_64, %c9_i32_65 : i32
    %c0_i32_66 = arith.constant 0 : i32
    %354 = arith.addi %353, %c0_i32_66 : i32
    %355 = arith.index_cast %arg0 : i32 to index
    %356 = arith.index_cast %354 : i32 to index
    %357 = memref.load %arg2[%355, %356] : memref<2x36xf32, #tpu.memory_space<smem>>
    %c1_i32_67 = arith.constant 1 : i32
    %358 = arith.addi %353, %c1_i32_67 : i32
    %359 = arith.index_cast %arg0 : i32 to index
    %360 = arith.index_cast %358 : i32 to index
    %361 = memref.load %arg2[%359, %360] : memref<2x36xf32, #tpu.memory_space<smem>>
    %c2_i32_68 = arith.constant 2 : i32
    %362 = arith.addi %353, %c2_i32_68 : i32
    %363 = arith.index_cast %arg0 : i32 to index
    %364 = arith.index_cast %362 : i32 to index
    %365 = memref.load %arg2[%363, %364] : memref<2x36xf32, #tpu.memory_space<smem>>
    %c3_i32_69 = arith.constant 3 : i32
    %366 = arith.addi %353, %c3_i32_69 : i32
    %367 = arith.index_cast %arg0 : i32 to index
    %368 = arith.index_cast %366 : i32 to index
    %369 = memref.load %arg2[%367, %368] : memref<2x36xf32, #tpu.memory_space<smem>>
    %c4_i32_70 = arith.constant 4 : i32
    %370 = arith.addi %353, %c4_i32_70 : i32
    %371 = arith.index_cast %arg0 : i32 to index
    %372 = arith.index_cast %370 : i32 to index
    %373 = memref.load %arg2[%371, %372] : memref<2x36xf32, #tpu.memory_space<smem>>
    %c5_i32_71 = arith.constant 5 : i32
    %374 = arith.addi %353, %c5_i32_71 : i32
    %375 = arith.index_cast %arg0 : i32 to index
    %376 = arith.index_cast %374 : i32 to index
    %377 = memref.load %arg2[%375, %376] : memref<2x36xf32, #tpu.memory_space<smem>>
    %c6_i32_72 = arith.constant 6 : i32
    %378 = arith.addi %353, %c6_i32_72 : i32
    %379 = arith.index_cast %arg0 : i32 to index
    %380 = arith.index_cast %378 : i32 to index
    %381 = memref.load %arg2[%379, %380] : memref<2x36xf32, #tpu.memory_space<smem>>
    %c7_i32_73 = arith.constant 7 : i32
    %382 = arith.addi %353, %c7_i32_73 : i32
    %383 = arith.index_cast %arg0 : i32 to index
    %384 = arith.index_cast %382 : i32 to index
    %385 = memref.load %arg2[%383, %384] : memref<2x36xf32, #tpu.memory_space<smem>>
    %c8_i32_74 = arith.constant 8 : i32
    %386 = arith.addi %353, %c8_i32_74 : i32
    %387 = arith.index_cast %arg0 : i32 to index
    %388 = arith.index_cast %386 : i32 to index
    %389 = memref.load %arg2[%387, %388] : memref<2x36xf32, #tpu.memory_space<smem>>
    %390 = vector.broadcast %357 : f32 to vector<64x1xf32>
    %391 = arith.mulf %390, %342 : vector<64x1xf32>
    %392 = vector.broadcast %365 : f32 to vector<64x1xf32>
    %393 = arith.addf %391, %392 : vector<64x1xf32>
    %394 = vector.broadcast %361 : f32 to vector<1x64xf32>
    %395 = arith.mulf %394, %351 : vector<1x64xf32>
    %396 = vector.broadcast %393 : vector<64x1xf32> to vector<64x64xf32>
    %397 = vector.broadcast %395 : vector<1x64xf32> to vector<64x64xf32>
    %398 = arith.addf %396, %397 : vector<64x64xf32>
    %399 = vector.broadcast %369 : f32 to vector<64x1xf32>
    %400 = arith.mulf %399, %342 : vector<64x1xf32>
    %401 = vector.broadcast %377 : f32 to vector<64x1xf32>
    %402 = arith.addf %400, %401 : vector<64x1xf32>
    %403 = vector.broadcast %373 : f32 to vector<1x64xf32>
    %404 = arith.mulf %403, %351 : vector<1x64xf32>
    %405 = vector.broadcast %402 : vector<64x1xf32> to vector<64x64xf32>
    %406 = vector.broadcast %404 : vector<1x64xf32> to vector<64x64xf32>
    %407 = arith.addf %405, %406 : vector<64x64xf32>
    %408 = vector.broadcast %381 : f32 to vector<64x1xf32>
    %409 = arith.mulf %408, %342 : vector<64x1xf32>
    %410 = vector.broadcast %389 : f32 to vector<64x1xf32>
    %411 = arith.addf %409, %410 : vector<64x1xf32>
    %412 = vector.broadcast %385 : f32 to vector<1x64xf32>
    %413 = arith.mulf %412, %351 : vector<1x64xf32>
    %414 = vector.broadcast %411 : vector<64x1xf32> to vector<64x64xf32>
    %415 = vector.broadcast %413 : vector<1x64xf32> to vector<64x64xf32>
    %416 = arith.addf %414, %415 : vector<64x64xf32>
    %417 = arith.minimumf %398, %407 : vector<64x64xf32>
    %418 = arith.minimumf %417, %416 : vector<64x64xf32>
    %419 = arith.maximumf %398, %407 : vector<64x64xf32>
    %420 = arith.maximumf %419, %416 : vector<64x64xf32>
    %421 = arith.mulf %418, %420 : vector<64x64xf32>
    %cst_75 = arith.constant 0.000000e+00 : f32
    %422 = vector.broadcast %cst_75 : f32 to vector<64x64xf32>
    %423 = arith.cmpf oge, %421, %422 : vector<64x64xf32>
    %424 = arith.ori %352, %423 : vector<64x64xi1>
    %c1_i32_76 = arith.constant 1 : i32
    %c9_i32_77 = arith.constant 9 : i32
    %425 = arith.muli %c1_i32_76, %c9_i32_77 : i32
    %c0_i32_78 = arith.constant 0 : i32
    %426 = arith.addi %425, %c0_i32_78 : i32
    %427 = arith.index_cast %arg0 : i32 to index
    %428 = arith.index_cast %426 : i32 to index
    %429 = memref.load %arg2[%427, %428] : memref<2x36xf32, #tpu.memory_space<smem>>
    %c1_i32_79 = arith.constant 1 : i32
    %430 = arith.addi %425, %c1_i32_79 : i32
    %431 = arith.index_cast %arg0 : i32 to index
    %432 = arith.index_cast %430 : i32 to index
    %433 = memref.load %arg2[%431, %432] : memref<2x36xf32, #tpu.memory_space<smem>>
    %c2_i32_80 = arith.constant 2 : i32
    %434 = arith.addi %425, %c2_i32_80 : i32
    %435 = arith.index_cast %arg0 : i32 to index
    %436 = arith.index_cast %434 : i32 to index
    %437 = memref.load %arg2[%435, %436] : memref<2x36xf32, #tpu.memory_space<smem>>
    %c3_i32_81 = arith.constant 3 : i32
    %438 = arith.addi %425, %c3_i32_81 : i32
    %439 = arith.index_cast %arg0 : i32 to index
    %440 = arith.index_cast %438 : i32 to index
    %441 = memref.load %arg2[%439, %440] : memref<2x36xf32, #tpu.memory_space<smem>>
    %c4_i32_82 = arith.constant 4 : i32
    %442 = arith.addi %425, %c4_i32_82 : i32
    %443 = arith.index_cast %arg0 : i32 to index
    %444 = arith.index_cast %442 : i32 to index
    %445 = memref.load %arg2[%443, %444] : memref<2x36xf32, #tpu.memory_space<smem>>
    %c5_i32_83 = arith.constant 5 : i32
    %446 = arith.addi %425, %c5_i32_83 : i32
    %447 = arith.index_cast %arg0 : i32 to index
    %448 = arith.index_cast %446 : i32 to index
    %449 = memref.load %arg2[%447, %448] : memref<2x36xf32, #tpu.memory_space<smem>>
    %c6_i32_84 = arith.constant 6 : i32
    %450 = arith.addi %425, %c6_i32_84 : i32
    %451 = arith.index_cast %arg0 : i32 to index
    %452 = arith.index_cast %450 : i32 to index
    %453 = memref.load %arg2[%451, %452] : memref<2x36xf32, #tpu.memory_space<smem>>
    %c7_i32_85 = arith.constant 7 : i32
    %454 = arith.addi %425, %c7_i32_85 : i32
    %455 = arith.index_cast %arg0 : i32 to index
    %456 = arith.index_cast %454 : i32 to index
    %457 = memref.load %arg2[%455, %456] : memref<2x36xf32, #tpu.memory_space<smem>>
    %c8_i32_86 = arith.constant 8 : i32
    %458 = arith.addi %425, %c8_i32_86 : i32
    %459 = arith.index_cast %arg0 : i32 to index
    %460 = arith.index_cast %458 : i32 to index
    %461 = memref.load %arg2[%459, %460] : memref<2x36xf32, #tpu.memory_space<smem>>
    %462 = vector.broadcast %429 : f32 to vector<64x1xf32>
    %463 = arith.mulf %462, %342 : vector<64x1xf32>
    %464 = vector.broadcast %437 : f32 to vector<64x1xf32>
    %465 = arith.addf %463, %464 : vector<64x1xf32>
    %466 = vector.broadcast %433 : f32 to vector<1x64xf32>
    %467 = arith.mulf %466, %351 : vector<1x64xf32>
    %468 = vector.broadcast %465 : vector<64x1xf32> to vector<64x64xf32>
    %469 = vector.broadcast %467 : vector<1x64xf32> to vector<64x64xf32>
    %470 = arith.addf %468, %469 : vector<64x64xf32>
    %471 = vector.broadcast %441 : f32 to vector<64x1xf32>
    %472 = arith.mulf %471, %342 : vector<64x1xf32>
    %473 = vector.broadcast %449 : f32 to vector<64x1xf32>
    %474 = arith.addf %472, %473 : vector<64x1xf32>
    %475 = vector.broadcast %445 : f32 to vector<1x64xf32>
    %476 = arith.mulf %475, %351 : vector<1x64xf32>
    %477 = vector.broadcast %474 : vector<64x1xf32> to vector<64x64xf32>
    %478 = vector.broadcast %476 : vector<1x64xf32> to vector<64x64xf32>
    %479 = arith.addf %477, %478 : vector<64x64xf32>
    %480 = vector.broadcast %453 : f32 to vector<64x1xf32>
    %481 = arith.mulf %480, %342 : vector<64x1xf32>
    %482 = vector.broadcast %461 : f32 to vector<64x1xf32>
    %483 = arith.addf %481, %482 : vector<64x1xf32>
    %484 = vector.broadcast %457 : f32 to vector<1x64xf32>
    %485 = arith.mulf %484, %351 : vector<1x64xf32>
    %486 = vector.broadcast %483 : vector<64x1xf32> to vector<64x64xf32>
    %487 = vector.broadcast %485 : vector<1x64xf32> to vector<64x64xf32>
    %488 = arith.addf %486, %487 : vector<64x64xf32>
    %489 = arith.minimumf %470, %479 : vector<64x64xf32>
    %490 = arith.minimumf %489, %488 : vector<64x64xf32>
    %491 = arith.maximumf %470, %479 : vector<64x64xf32>
    %492 = arith.maximumf %491, %488 : vector<64x64xf32>
    %493 = arith.mulf %490, %492 : vector<64x64xf32>
    %cst_87 = arith.constant 0.000000e+00 : f32
    %494 = vector.broadcast %cst_87 : f32 to vector<64x64xf32>
    %495 = arith.cmpf oge, %493, %494 : vector<64x64xf32>
    %496 = arith.ori %424, %495 : vector<64x64xi1>
    %c2_i32_88 = arith.constant 2 : i32
    %c9_i32_89 = arith.constant 9 : i32
    %497 = arith.muli %c2_i32_88, %c9_i32_89 : i32
    %c0_i32_90 = arith.constant 0 : i32
    %498 = arith.addi %497, %c0_i32_90 : i32
    %499 = arith.index_cast %arg0 : i32 to index
    %500 = arith.index_cast %498 : i32 to index
    %501 = memref.load %arg2[%499, %500] : memref<2x36xf32, #tpu.memory_space<smem>>
    %c1_i32_91 = arith.constant 1 : i32
    %502 = arith.addi %497, %c1_i32_91 : i32
    %503 = arith.index_cast %arg0 : i32 to index
    %504 = arith.index_cast %502 : i32 to index
    %505 = memref.load %arg2[%503, %504] : memref<2x36xf32, #tpu.memory_space<smem>>
    %c2_i32_92 = arith.constant 2 : i32
    %506 = arith.addi %497, %c2_i32_92 : i32
    %507 = arith.index_cast %arg0 : i32 to index
    %508 = arith.index_cast %506 : i32 to index
    %509 = memref.load %arg2[%507, %508] : memref<2x36xf32, #tpu.memory_space<smem>>
    %c3_i32_93 = arith.constant 3 : i32
    %510 = arith.addi %497, %c3_i32_93 : i32
    %511 = arith.index_cast %arg0 : i32 to index
    %512 = arith.index_cast %510 : i32 to index
    %513 = memref.load %arg2[%511, %512] : memref<2x36xf32, #tpu.memory_space<smem>>
    %c4_i32_94 = arith.constant 4 : i32
    %514 = arith.addi %497, %c4_i32_94 : i32
    %515 = arith.index_cast %arg0 : i32 to index
    %516 = arith.index_cast %514 : i32 to index
    %517 = memref.load %arg2[%515, %516] : memref<2x36xf32, #tpu.memory_space<smem>>
    %c5_i32_95 = arith.constant 5 : i32
    %518 = arith.addi %497, %c5_i32_95 : i32
    %519 = arith.index_cast %arg0 : i32 to index
    %520 = arith.index_cast %518 : i32 to index
    %521 = memref.load %arg2[%519, %520] : memref<2x36xf32, #tpu.memory_space<smem>>
    %c6_i32_96 = arith.constant 6 : i32
    %522 = arith.addi %497, %c6_i32_96 : i32
    %523 = arith.index_cast %arg0 : i32 to index
    %524 = arith.index_cast %522 : i32 to index
    %525 = memref.load %arg2[%523, %524] : memref<2x36xf32, #tpu.memory_space<smem>>
    %c7_i32_97 = arith.constant 7 : i32
    %526 = arith.addi %497, %c7_i32_97 : i32
    %527 = arith.index_cast %arg0 : i32 to index
    %528 = arith.index_cast %526 : i32 to index
    %529 = memref.load %arg2[%527, %528] : memref<2x36xf32, #tpu.memory_space<smem>>
    %c8_i32_98 = arith.constant 8 : i32
    %530 = arith.addi %497, %c8_i32_98 : i32
    %531 = arith.index_cast %arg0 : i32 to index
    %532 = arith.index_cast %530 : i32 to index
    %533 = memref.load %arg2[%531, %532] : memref<2x36xf32, #tpu.memory_space<smem>>
    %534 = vector.broadcast %501 : f32 to vector<64x1xf32>
    %535 = arith.mulf %534, %342 : vector<64x1xf32>
    %536 = vector.broadcast %509 : f32 to vector<64x1xf32>
    %537 = arith.addf %535, %536 : vector<64x1xf32>
    %538 = vector.broadcast %505 : f32 to vector<1x64xf32>
    %539 = arith.mulf %538, %351 : vector<1x64xf32>
    %540 = vector.broadcast %537 : vector<64x1xf32> to vector<64x64xf32>
    %541 = vector.broadcast %539 : vector<1x64xf32> to vector<64x64xf32>
    %542 = arith.addf %540, %541 : vector<64x64xf32>
    %543 = vector.broadcast %513 : f32 to vector<64x1xf32>
    %544 = arith.mulf %543, %342 : vector<64x1xf32>
    %545 = vector.broadcast %521 : f32 to vector<64x1xf32>
    %546 = arith.addf %544, %545 : vector<64x1xf32>
    %547 = vector.broadcast %517 : f32 to vector<1x64xf32>
    %548 = arith.mulf %547, %351 : vector<1x64xf32>
    %549 = vector.broadcast %546 : vector<64x1xf32> to vector<64x64xf32>
    %550 = vector.broadcast %548 : vector<1x64xf32> to vector<64x64xf32>
    %551 = arith.addf %549, %550 : vector<64x64xf32>
    %552 = vector.broadcast %525 : f32 to vector<64x1xf32>
    %553 = arith.mulf %552, %342 : vector<64x1xf32>
    %554 = vector.broadcast %533 : f32 to vector<64x1xf32>
    %555 = arith.addf %553, %554 : vector<64x1xf32>
    %556 = vector.broadcast %529 : f32 to vector<1x64xf32>
    %557 = arith.mulf %556, %351 : vector<1x64xf32>
    %558 = vector.broadcast %555 : vector<64x1xf32> to vector<64x64xf32>
    %559 = vector.broadcast %557 : vector<1x64xf32> to vector<64x64xf32>
    %560 = arith.addf %558, %559 : vector<64x64xf32>
    %561 = arith.minimumf %542, %551 : vector<64x64xf32>
    %562 = arith.minimumf %561, %560 : vector<64x64xf32>
    %563 = arith.maximumf %542, %551 : vector<64x64xf32>
    %564 = arith.maximumf %563, %560 : vector<64x64xf32>
    %565 = arith.mulf %562, %564 : vector<64x64xf32>
    %cst_99 = arith.constant 0.000000e+00 : f32
    %566 = vector.broadcast %cst_99 : f32 to vector<64x64xf32>
    %567 = arith.cmpf oge, %565, %566 : vector<64x64xf32>
    %568 = arith.ori %496, %567 : vector<64x64xi1>
    %c3_i32_100 = arith.constant 3 : i32
    %c9_i32_101 = arith.constant 9 : i32
    %569 = arith.muli %c3_i32_100, %c9_i32_101 : i32
    %c0_i32_102 = arith.constant 0 : i32
    %570 = arith.addi %569, %c0_i32_102 : i32
    %571 = arith.index_cast %arg0 : i32 to index
    %572 = arith.index_cast %570 : i32 to index
    %573 = memref.load %arg2[%571, %572] : memref<2x36xf32, #tpu.memory_space<smem>>
    %c1_i32_103 = arith.constant 1 : i32
    %574 = arith.addi %569, %c1_i32_103 : i32
    %575 = arith.index_cast %arg0 : i32 to index
    %576 = arith.index_cast %574 : i32 to index
    %577 = memref.load %arg2[%575, %576] : memref<2x36xf32, #tpu.memory_space<smem>>
    %c2_i32_104 = arith.constant 2 : i32
    %578 = arith.addi %569, %c2_i32_104 : i32
    %579 = arith.index_cast %arg0 : i32 to index
    %580 = arith.index_cast %578 : i32 to index
    %581 = memref.load %arg2[%579, %580] : memref<2x36xf32, #tpu.memory_space<smem>>
    %c3_i32_105 = arith.constant 3 : i32
    %582 = arith.addi %569, %c3_i32_105 : i32
    %583 = arith.index_cast %arg0 : i32 to index
    %584 = arith.index_cast %582 : i32 to index
    %585 = memref.load %arg2[%583, %584] : memref<2x36xf32, #tpu.memory_space<smem>>
    %c4_i32_106 = arith.constant 4 : i32
    %586 = arith.addi %569, %c4_i32_106 : i32
    %587 = arith.index_cast %arg0 : i32 to index
    %588 = arith.index_cast %586 : i32 to index
    %589 = memref.load %arg2[%587, %588] : memref<2x36xf32, #tpu.memory_space<smem>>
    %c5_i32_107 = arith.constant 5 : i32
    %590 = arith.addi %569, %c5_i32_107 : i32
    %591 = arith.index_cast %arg0 : i32 to index
    %592 = arith.index_cast %590 : i32 to index
    %593 = memref.load %arg2[%591, %592] : memref<2x36xf32, #tpu.memory_space<smem>>
    %c6_i32_108 = arith.constant 6 : i32
    %594 = arith.addi %569, %c6_i32_108 : i32
    %595 = arith.index_cast %arg0 : i32 to index
    %596 = arith.index_cast %594 : i32 to index
    %597 = memref.load %arg2[%595, %596] : memref<2x36xf32, #tpu.memory_space<smem>>
    %c7_i32_109 = arith.constant 7 : i32
    %598 = arith.addi %569, %c7_i32_109 : i32
    %599 = arith.index_cast %arg0 : i32 to index
    %600 = arith.index_cast %598 : i32 to index
    %601 = memref.load %arg2[%599, %600] : memref<2x36xf32, #tpu.memory_space<smem>>
    %c8_i32_110 = arith.constant 8 : i32
    %602 = arith.addi %569, %c8_i32_110 : i32
    %603 = arith.index_cast %arg0 : i32 to index
    %604 = arith.index_cast %602 : i32 to index
    %605 = memref.load %arg2[%603, %604] : memref<2x36xf32, #tpu.memory_space<smem>>
    %606 = vector.broadcast %573 : f32 to vector<64x1xf32>
    %607 = arith.mulf %606, %342 : vector<64x1xf32>
    %608 = vector.broadcast %581 : f32 to vector<64x1xf32>
    %609 = arith.addf %607, %608 : vector<64x1xf32>
    %610 = vector.broadcast %577 : f32 to vector<1x64xf32>
    %611 = arith.mulf %610, %351 : vector<1x64xf32>
    %612 = vector.broadcast %609 : vector<64x1xf32> to vector<64x64xf32>
    %613 = vector.broadcast %611 : vector<1x64xf32> to vector<64x64xf32>
    %614 = arith.addf %612, %613 : vector<64x64xf32>
    %615 = vector.broadcast %585 : f32 to vector<64x1xf32>
    %616 = arith.mulf %615, %342 : vector<64x1xf32>
    %617 = vector.broadcast %593 : f32 to vector<64x1xf32>
    %618 = arith.addf %616, %617 : vector<64x1xf32>
    %619 = vector.broadcast %589 : f32 to vector<1x64xf32>
    %620 = arith.mulf %619, %351 : vector<1x64xf32>
    %621 = vector.broadcast %618 : vector<64x1xf32> to vector<64x64xf32>
    %622 = vector.broadcast %620 : vector<1x64xf32> to vector<64x64xf32>
    %623 = arith.addf %621, %622 : vector<64x64xf32>
    %624 = vector.broadcast %597 : f32 to vector<64x1xf32>
    %625 = arith.mulf %624, %342 : vector<64x1xf32>
    %626 = vector.broadcast %605 : f32 to vector<64x1xf32>
    %627 = arith.addf %625, %626 : vector<64x1xf32>
    %628 = vector.broadcast %601 : f32 to vector<1x64xf32>
    %629 = arith.mulf %628, %351 : vector<1x64xf32>
    %630 = vector.broadcast %627 : vector<64x1xf32> to vector<64x64xf32>
    %631 = vector.broadcast %629 : vector<1x64xf32> to vector<64x64xf32>
    %632 = arith.addf %630, %631 : vector<64x64xf32>
    %633 = arith.minimumf %614, %623 : vector<64x64xf32>
    %634 = arith.minimumf %633, %632 : vector<64x64xf32>
    %635 = arith.maximumf %614, %623 : vector<64x64xf32>
    %636 = arith.maximumf %635, %632 : vector<64x64xf32>
    %637 = arith.mulf %634, %636 : vector<64x64xf32>
    %cst_111 = arith.constant 0.000000e+00 : f32
    %638 = vector.broadcast %cst_111 : f32 to vector<64x64xf32>
    %639 = arith.cmpf oge, %637, %638 : vector<64x64xf32>
    %640 = arith.ori %568, %639 : vector<64x64xi1>
    %c4_i32_112 = arith.constant 4 : i32
    %641 = arith.extui %640 : vector<64x64xi1> to vector<64x64xi32>
    %642 = arith.sitofp %641 : vector<64x64xi32> to vector<64x64xf32>
    %643 = arith.addf %323, %642 : vector<64x64xf32>
    %c2_i32_113 = arith.constant 2 : i32
    %644 = vector.broadcast %c2_i32_113 : i32 to vector<64x1xi32>
    %645 = arith.muli %644, %3 : vector<64x1xi32>
    %c1_i32_114 = arith.constant 1 : i32
    %646 = vector.broadcast %c1_i32_114 : i32 to vector<64x1xi32>
    %647 = arith.addi %645, %646 : vector<64x1xi32>
    %c127_i32_115 = arith.constant 127 : i32
    %648 = vector.broadcast %c127_i32_115 : i32 to vector<64x1xi32>
    %649 = arith.subi %648, %647 : vector<64x1xi32>
    %c2_i32_116 = arith.constant 2 : i32
    %650 = vector.broadcast %c2_i32_116 : i32 to vector<1x64xi32>
    %651 = arith.muli %650, %4 : vector<1x64xi32>
    %c0_i32_117 = arith.constant 0 : i32
    %652 = vector.broadcast %c0_i32_117 : i32 to vector<1x64xi32>
    %653 = arith.addi %651, %652 : vector<1x64xi32>
    %654 = arith.sitofp %649 : vector<64x1xi32> to vector<64x1xf32>
    %cst_118 = arith.constant 2.000000e+00 : f32
    %655 = vector.broadcast %cst_118 : f32 to vector<64x1xf32>
    %656 = arith.mulf %655, %654 : vector<64x1xf32>
    %cst_119 = arith.constant 1.000000e+00 : f32
    %657 = vector.broadcast %cst_119 : f32 to vector<64x1xf32>
    %658 = arith.addf %656, %657 : vector<64x1xf32>
    %cst_120 = arith.constant 1.280000e+02 : f32
    %659 = vector.broadcast %cst_120 : f32 to vector<64x1xf32>
    %660 = arith.subf %658, %659 : vector<64x1xf32>
    %cst_121 = arith.constant 7.812500e-03 : f32
    %661 = vector.broadcast %cst_121 : f32 to vector<64x1xf32>
    %662 = arith.mulf %660, %661 : vector<64x1xf32>
    %663 = arith.sitofp %653 : vector<1x64xi32> to vector<1x64xf32>
    %cst_122 = arith.constant 2.000000e+00 : f32
    %664 = vector.broadcast %cst_122 : f32 to vector<1x64xf32>
    %665 = arith.mulf %664, %663 : vector<1x64xf32>
    %cst_123 = arith.constant 1.000000e+00 : f32
    %666 = vector.broadcast %cst_123 : f32 to vector<1x64xf32>
    %667 = arith.addf %665, %666 : vector<1x64xf32>
    %cst_124 = arith.constant 1.280000e+02 : f32
    %668 = vector.broadcast %cst_124 : f32 to vector<1x64xf32>
    %669 = arith.subf %667, %668 : vector<1x64xf32>
    %cst_125 = arith.constant 7.812500e-03 : f32
    %670 = vector.broadcast %cst_125 : f32 to vector<1x64xf32>
    %671 = arith.mulf %669, %670 : vector<1x64xf32>
    %false_126 = arith.constant false
    %672 = vector.broadcast %false_126 : i1 to vector<64x64xi1>
    %c0_i32_127 = arith.constant 0 : i32
    %c9_i32_128 = arith.constant 9 : i32
    %673 = arith.muli %c0_i32_127, %c9_i32_128 : i32
    %c0_i32_129 = arith.constant 0 : i32
    %674 = arith.addi %673, %c0_i32_129 : i32
    %675 = arith.index_cast %arg0 : i32 to index
    %676 = arith.index_cast %674 : i32 to index
    %677 = memref.load %arg2[%675, %676] : memref<2x36xf32, #tpu.memory_space<smem>>
    %c1_i32_130 = arith.constant 1 : i32
    %678 = arith.addi %673, %c1_i32_130 : i32
    %679 = arith.index_cast %arg0 : i32 to index
    %680 = arith.index_cast %678 : i32 to index
    %681 = memref.load %arg2[%679, %680] : memref<2x36xf32, #tpu.memory_space<smem>>
    %c2_i32_131 = arith.constant 2 : i32
    %682 = arith.addi %673, %c2_i32_131 : i32
    %683 = arith.index_cast %arg0 : i32 to index
    %684 = arith.index_cast %682 : i32 to index
    %685 = memref.load %arg2[%683, %684] : memref<2x36xf32, #tpu.memory_space<smem>>
    %c3_i32_132 = arith.constant 3 : i32
    %686 = arith.addi %673, %c3_i32_132 : i32
    %687 = arith.index_cast %arg0 : i32 to index
    %688 = arith.index_cast %686 : i32 to index
    %689 = memref.load %arg2[%687, %688] : memref<2x36xf32, #tpu.memory_space<smem>>
    %c4_i32_133 = arith.constant 4 : i32
    %690 = arith.addi %673, %c4_i32_133 : i32
    %691 = arith.index_cast %arg0 : i32 to index
    %692 = arith.index_cast %690 : i32 to index
    %693 = memref.load %arg2[%691, %692] : memref<2x36xf32, #tpu.memory_space<smem>>
    %c5_i32_134 = arith.constant 5 : i32
    %694 = arith.addi %673, %c5_i32_134 : i32
    %695 = arith.index_cast %arg0 : i32 to index
    %696 = arith.index_cast %694 : i32 to index
    %697 = memref.load %arg2[%695, %696] : memref<2x36xf32, #tpu.memory_space<smem>>
    %c6_i32_135 = arith.constant 6 : i32
    %698 = arith.addi %673, %c6_i32_135 : i32
    %699 = arith.index_cast %arg0 : i32 to index
    %700 = arith.index_cast %698 : i32 to index
    %701 = memref.load %arg2[%699, %700] : memref<2x36xf32, #tpu.memory_space<smem>>
    %c7_i32_136 = arith.constant 7 : i32
    %702 = arith.addi %673, %c7_i32_136 : i32
    %703 = arith.index_cast %arg0 : i32 to index
    %704 = arith.index_cast %702 : i32 to index
    %705 = memref.load %arg2[%703, %704] : memref<2x36xf32, #tpu.memory_space<smem>>
    %c8_i32_137 = arith.constant 8 : i32
    %706 = arith.addi %673, %c8_i32_137 : i32
    %707 = arith.index_cast %arg0 : i32 to index
    %708 = arith.index_cast %706 : i32 to index
    %709 = memref.load %arg2[%707, %708] : memref<2x36xf32, #tpu.memory_space<smem>>
    %710 = vector.broadcast %677 : f32 to vector<64x1xf32>
    %711 = arith.mulf %710, %662 : vector<64x1xf32>
    %712 = vector.broadcast %685 : f32 to vector<64x1xf32>
    %713 = arith.addf %711, %712 : vector<64x1xf32>
    %714 = vector.broadcast %681 : f32 to vector<1x64xf32>
    %715 = arith.mulf %714, %671 : vector<1x64xf32>
    %716 = vector.broadcast %713 : vector<64x1xf32> to vector<64x64xf32>
    %717 = vector.broadcast %715 : vector<1x64xf32> to vector<64x64xf32>
    %718 = arith.addf %716, %717 : vector<64x64xf32>
    %719 = vector.broadcast %689 : f32 to vector<64x1xf32>
    %720 = arith.mulf %719, %662 : vector<64x1xf32>
    %721 = vector.broadcast %697 : f32 to vector<64x1xf32>
    %722 = arith.addf %720, %721 : vector<64x1xf32>
    %723 = vector.broadcast %693 : f32 to vector<1x64xf32>
    %724 = arith.mulf %723, %671 : vector<1x64xf32>
    %725 = vector.broadcast %722 : vector<64x1xf32> to vector<64x64xf32>
    %726 = vector.broadcast %724 : vector<1x64xf32> to vector<64x64xf32>
    %727 = arith.addf %725, %726 : vector<64x64xf32>
    %728 = vector.broadcast %701 : f32 to vector<64x1xf32>
    %729 = arith.mulf %728, %662 : vector<64x1xf32>
    %730 = vector.broadcast %709 : f32 to vector<64x1xf32>
    %731 = arith.addf %729, %730 : vector<64x1xf32>
    %732 = vector.broadcast %705 : f32 to vector<1x64xf32>
    %733 = arith.mulf %732, %671 : vector<1x64xf32>
    %734 = vector.broadcast %731 : vector<64x1xf32> to vector<64x64xf32>
    %735 = vector.broadcast %733 : vector<1x64xf32> to vector<64x64xf32>
    %736 = arith.addf %734, %735 : vector<64x64xf32>
    %737 = arith.minimumf %718, %727 : vector<64x64xf32>
    %738 = arith.minimumf %737, %736 : vector<64x64xf32>
    %739 = arith.maximumf %718, %727 : vector<64x64xf32>
    %740 = arith.maximumf %739, %736 : vector<64x64xf32>
    %741 = arith.mulf %738, %740 : vector<64x64xf32>
    %cst_138 = arith.constant 0.000000e+00 : f32
    %742 = vector.broadcast %cst_138 : f32 to vector<64x64xf32>
    %743 = arith.cmpf oge, %741, %742 : vector<64x64xf32>
    %744 = arith.ori %672, %743 : vector<64x64xi1>
    %c1_i32_139 = arith.constant 1 : i32
    %c9_i32_140 = arith.constant 9 : i32
    %745 = arith.muli %c1_i32_139, %c9_i32_140 : i32
    %c0_i32_141 = arith.constant 0 : i32
    %746 = arith.addi %745, %c0_i32_141 : i32
    %747 = arith.index_cast %arg0 : i32 to index
    %748 = arith.index_cast %746 : i32 to index
    %749 = memref.load %arg2[%747, %748] : memref<2x36xf32, #tpu.memory_space<smem>>
    %c1_i32_142 = arith.constant 1 : i32
    %750 = arith.addi %745, %c1_i32_142 : i32
    %751 = arith.index_cast %arg0 : i32 to index
    %752 = arith.index_cast %750 : i32 to index
    %753 = memref.load %arg2[%751, %752] : memref<2x36xf32, #tpu.memory_space<smem>>
    %c2_i32_143 = arith.constant 2 : i32
    %754 = arith.addi %745, %c2_i32_143 : i32
    %755 = arith.index_cast %arg0 : i32 to index
    %756 = arith.index_cast %754 : i32 to index
    %757 = memref.load %arg2[%755, %756] : memref<2x36xf32, #tpu.memory_space<smem>>
    %c3_i32_144 = arith.constant 3 : i32
    %758 = arith.addi %745, %c3_i32_144 : i32
    %759 = arith.index_cast %arg0 : i32 to index
    %760 = arith.index_cast %758 : i32 to index
    %761 = memref.load %arg2[%759, %760] : memref<2x36xf32, #tpu.memory_space<smem>>
    %c4_i32_145 = arith.constant 4 : i32
    %762 = arith.addi %745, %c4_i32_145 : i32
    %763 = arith.index_cast %arg0 : i32 to index
    %764 = arith.index_cast %762 : i32 to index
    %765 = memref.load %arg2[%763, %764] : memref<2x36xf32, #tpu.memory_space<smem>>
    %c5_i32_146 = arith.constant 5 : i32
    %766 = arith.addi %745, %c5_i32_146 : i32
    %767 = arith.index_cast %arg0 : i32 to index
    %768 = arith.index_cast %766 : i32 to index
    %769 = memref.load %arg2[%767, %768] : memref<2x36xf32, #tpu.memory_space<smem>>
    %c6_i32_147 = arith.constant 6 : i32
    %770 = arith.addi %745, %c6_i32_147 : i32
    %771 = arith.index_cast %arg0 : i32 to index
    %772 = arith.index_cast %770 : i32 to index
    %773 = memref.load %arg2[%771, %772] : memref<2x36xf32, #tpu.memory_space<smem>>
    %c7_i32_148 = arith.constant 7 : i32
    %774 = arith.addi %745, %c7_i32_148 : i32
    %775 = arith.index_cast %arg0 : i32 to index
    %776 = arith.index_cast %774 : i32 to index
    %777 = memref.load %arg2[%775, %776] : memref<2x36xf32, #tpu.memory_space<smem>>
    %c8_i32_149 = arith.constant 8 : i32
    %778 = arith.addi %745, %c8_i32_149 : i32
    %779 = arith.index_cast %arg0 : i32 to index
    %780 = arith.index_cast %778 : i32 to index
    %781 = memref.load %arg2[%779, %780] : memref<2x36xf32, #tpu.memory_space<smem>>
    %782 = vector.broadcast %749 : f32 to vector<64x1xf32>
    %783 = arith.mulf %782, %662 : vector<64x1xf32>
    %784 = vector.broadcast %757 : f32 to vector<64x1xf32>
    %785 = arith.addf %783, %784 : vector<64x1xf32>
    %786 = vector.broadcast %753 : f32 to vector<1x64xf32>
    %787 = arith.mulf %786, %671 : vector<1x64xf32>
    %788 = vector.broadcast %785 : vector<64x1xf32> to vector<64x64xf32>
    %789 = vector.broadcast %787 : vector<1x64xf32> to vector<64x64xf32>
    %790 = arith.addf %788, %789 : vector<64x64xf32>
    %791 = vector.broadcast %761 : f32 to vector<64x1xf32>
    %792 = arith.mulf %791, %662 : vector<64x1xf32>
    %793 = vector.broadcast %769 : f32 to vector<64x1xf32>
    %794 = arith.addf %792, %793 : vector<64x1xf32>
    %795 = vector.broadcast %765 : f32 to vector<1x64xf32>
    %796 = arith.mulf %795, %671 : vector<1x64xf32>
    %797 = vector.broadcast %794 : vector<64x1xf32> to vector<64x64xf32>
    %798 = vector.broadcast %796 : vector<1x64xf32> to vector<64x64xf32>
    %799 = arith.addf %797, %798 : vector<64x64xf32>
    %800 = vector.broadcast %773 : f32 to vector<64x1xf32>
    %801 = arith.mulf %800, %662 : vector<64x1xf32>
    %802 = vector.broadcast %781 : f32 to vector<64x1xf32>
    %803 = arith.addf %801, %802 : vector<64x1xf32>
    %804 = vector.broadcast %777 : f32 to vector<1x64xf32>
    %805 = arith.mulf %804, %671 : vector<1x64xf32>
    %806 = vector.broadcast %803 : vector<64x1xf32> to vector<64x64xf32>
    %807 = vector.broadcast %805 : vector<1x64xf32> to vector<64x64xf32>
    %808 = arith.addf %806, %807 : vector<64x64xf32>
    %809 = arith.minimumf %790, %799 : vector<64x64xf32>
    %810 = arith.minimumf %809, %808 : vector<64x64xf32>
    %811 = arith.maximumf %790, %799 : vector<64x64xf32>
    %812 = arith.maximumf %811, %808 : vector<64x64xf32>
    %813 = arith.mulf %810, %812 : vector<64x64xf32>
    %cst_150 = arith.constant 0.000000e+00 : f32
    %814 = vector.broadcast %cst_150 : f32 to vector<64x64xf32>
    %815 = arith.cmpf oge, %813, %814 : vector<64x64xf32>
    %816 = arith.ori %744, %815 : vector<64x64xi1>
    %c2_i32_151 = arith.constant 2 : i32
    %c9_i32_152 = arith.constant 9 : i32
    %817 = arith.muli %c2_i32_151, %c9_i32_152 : i32
    %c0_i32_153 = arith.constant 0 : i32
    %818 = arith.addi %817, %c0_i32_153 : i32
    %819 = arith.index_cast %arg0 : i32 to index
    %820 = arith.index_cast %818 : i32 to index
    %821 = memref.load %arg2[%819, %820] : memref<2x36xf32, #tpu.memory_space<smem>>
    %c1_i32_154 = arith.constant 1 : i32
    %822 = arith.addi %817, %c1_i32_154 : i32
    %823 = arith.index_cast %arg0 : i32 to index
    %824 = arith.index_cast %822 : i32 to index
    %825 = memref.load %arg2[%823, %824] : memref<2x36xf32, #tpu.memory_space<smem>>
    %c2_i32_155 = arith.constant 2 : i32
    %826 = arith.addi %817, %c2_i32_155 : i32
    %827 = arith.index_cast %arg0 : i32 to index
    %828 = arith.index_cast %826 : i32 to index
    %829 = memref.load %arg2[%827, %828] : memref<2x36xf32, #tpu.memory_space<smem>>
    %c3_i32_156 = arith.constant 3 : i32
    %830 = arith.addi %817, %c3_i32_156 : i32
    %831 = arith.index_cast %arg0 : i32 to index
    %832 = arith.index_cast %830 : i32 to index
    %833 = memref.load %arg2[%831, %832] : memref<2x36xf32, #tpu.memory_space<smem>>
    %c4_i32_157 = arith.constant 4 : i32
    %834 = arith.addi %817, %c4_i32_157 : i32
    %835 = arith.index_cast %arg0 : i32 to index
    %836 = arith.index_cast %834 : i32 to index
    %837 = memref.load %arg2[%835, %836] : memref<2x36xf32, #tpu.memory_space<smem>>
    %c5_i32_158 = arith.constant 5 : i32
    %838 = arith.addi %817, %c5_i32_158 : i32
    %839 = arith.index_cast %arg0 : i32 to index
    %840 = arith.index_cast %838 : i32 to index
    %841 = memref.load %arg2[%839, %840] : memref<2x36xf32, #tpu.memory_space<smem>>
    %c6_i32_159 = arith.constant 6 : i32
    %842 = arith.addi %817, %c6_i32_159 : i32
    %843 = arith.index_cast %arg0 : i32 to index
    %844 = arith.index_cast %842 : i32 to index
    %845 = memref.load %arg2[%843, %844] : memref<2x36xf32, #tpu.memory_space<smem>>
    %c7_i32_160 = arith.constant 7 : i32
    %846 = arith.addi %817, %c7_i32_160 : i32
    %847 = arith.index_cast %arg0 : i32 to index
    %848 = arith.index_cast %846 : i32 to index
    %849 = memref.load %arg2[%847, %848] : memref<2x36xf32, #tpu.memory_space<smem>>
    %c8_i32_161 = arith.constant 8 : i32
    %850 = arith.addi %817, %c8_i32_161 : i32
    %851 = arith.index_cast %arg0 : i32 to index
    %852 = arith.index_cast %850 : i32 to index
    %853 = memref.load %arg2[%851, %852] : memref<2x36xf32, #tpu.memory_space<smem>>
    %854 = vector.broadcast %821 : f32 to vector<64x1xf32>
    %855 = arith.mulf %854, %662 : vector<64x1xf32>
    %856 = vector.broadcast %829 : f32 to vector<64x1xf32>
    %857 = arith.addf %855, %856 : vector<64x1xf32>
    %858 = vector.broadcast %825 : f32 to vector<1x64xf32>
    %859 = arith.mulf %858, %671 : vector<1x64xf32>
    %860 = vector.broadcast %857 : vector<64x1xf32> to vector<64x64xf32>
    %861 = vector.broadcast %859 : vector<1x64xf32> to vector<64x64xf32>
    %862 = arith.addf %860, %861 : vector<64x64xf32>
    %863 = vector.broadcast %833 : f32 to vector<64x1xf32>
    %864 = arith.mulf %863, %662 : vector<64x1xf32>
    %865 = vector.broadcast %841 : f32 to vector<64x1xf32>
    %866 = arith.addf %864, %865 : vector<64x1xf32>
    %867 = vector.broadcast %837 : f32 to vector<1x64xf32>
    %868 = arith.mulf %867, %671 : vector<1x64xf32>
    %869 = vector.broadcast %866 : vector<64x1xf32> to vector<64x64xf32>
    %870 = vector.broadcast %868 : vector<1x64xf32> to vector<64x64xf32>
    %871 = arith.addf %869, %870 : vector<64x64xf32>
    %872 = vector.broadcast %845 : f32 to vector<64x1xf32>
    %873 = arith.mulf %872, %662 : vector<64x1xf32>
    %874 = vector.broadcast %853 : f32 to vector<64x1xf32>
    %875 = arith.addf %873, %874 : vector<64x1xf32>
    %876 = vector.broadcast %849 : f32 to vector<1x64xf32>
    %877 = arith.mulf %876, %671 : vector<1x64xf32>
    %878 = vector.broadcast %875 : vector<64x1xf32> to vector<64x64xf32>
    %879 = vector.broadcast %877 : vector<1x64xf32> to vector<64x64xf32>
    %880 = arith.addf %878, %879 : vector<64x64xf32>
    %881 = arith.minimumf %862, %871 : vector<64x64xf32>
    %882 = arith.minimumf %881, %880 : vector<64x64xf32>
    %883 = arith.maximumf %862, %871 : vector<64x64xf32>
    %884 = arith.maximumf %883, %880 : vector<64x64xf32>
    %885 = arith.mulf %882, %884 : vector<64x64xf32>
    %cst_162 = arith.constant 0.000000e+00 : f32
    %886 = vector.broadcast %cst_162 : f32 to vector<64x64xf32>
    %887 = arith.cmpf oge, %885, %886 : vector<64x64xf32>
    %888 = arith.ori %816, %887 : vector<64x64xi1>
    %c3_i32_163 = arith.constant 3 : i32
    %c9_i32_164 = arith.constant 9 : i32
    %889 = arith.muli %c3_i32_163, %c9_i32_164 : i32
    %c0_i32_165 = arith.constant 0 : i32
    %890 = arith.addi %889, %c0_i32_165 : i32
    %891 = arith.index_cast %arg0 : i32 to index
    %892 = arith.index_cast %890 : i32 to index
    %893 = memref.load %arg2[%891, %892] : memref<2x36xf32, #tpu.memory_space<smem>>
    %c1_i32_166 = arith.constant 1 : i32
    %894 = arith.addi %889, %c1_i32_166 : i32
    %895 = arith.index_cast %arg0 : i32 to index
    %896 = arith.index_cast %894 : i32 to index
    %897 = memref.load %arg2[%895, %896] : memref<2x36xf32, #tpu.memory_space<smem>>
    %c2_i32_167 = arith.constant 2 : i32
    %898 = arith.addi %889, %c2_i32_167 : i32
    %899 = arith.index_cast %arg0 : i32 to index
    %900 = arith.index_cast %898 : i32 to index
    %901 = memref.load %arg2[%899, %900] : memref<2x36xf32, #tpu.memory_space<smem>>
    %c3_i32_168 = arith.constant 3 : i32
    %902 = arith.addi %889, %c3_i32_168 : i32
    %903 = arith.index_cast %arg0 : i32 to index
    %904 = arith.index_cast %902 : i32 to index
    %905 = memref.load %arg2[%903, %904] : memref<2x36xf32, #tpu.memory_space<smem>>
    %c4_i32_169 = arith.constant 4 : i32
    %906 = arith.addi %889, %c4_i32_169 : i32
    %907 = arith.index_cast %arg0 : i32 to index
    %908 = arith.index_cast %906 : i32 to index
    %909 = memref.load %arg2[%907, %908] : memref<2x36xf32, #tpu.memory_space<smem>>
    %c5_i32_170 = arith.constant 5 : i32
    %910 = arith.addi %889, %c5_i32_170 : i32
    %911 = arith.index_cast %arg0 : i32 to index
    %912 = arith.index_cast %910 : i32 to index
    %913 = memref.load %arg2[%911, %912] : memref<2x36xf32, #tpu.memory_space<smem>>
    %c6_i32_171 = arith.constant 6 : i32
    %914 = arith.addi %889, %c6_i32_171 : i32
    %915 = arith.index_cast %arg0 : i32 to index
    %916 = arith.index_cast %914 : i32 to index
    %917 = memref.load %arg2[%915, %916] : memref<2x36xf32, #tpu.memory_space<smem>>
    %c7_i32_172 = arith.constant 7 : i32
    %918 = arith.addi %889, %c7_i32_172 : i32
    %919 = arith.index_cast %arg0 : i32 to index
    %920 = arith.index_cast %918 : i32 to index
    %921 = memref.load %arg2[%919, %920] : memref<2x36xf32, #tpu.memory_space<smem>>
    %c8_i32_173 = arith.constant 8 : i32
    %922 = arith.addi %889, %c8_i32_173 : i32
    %923 = arith.index_cast %arg0 : i32 to index
    %924 = arith.index_cast %922 : i32 to index
    %925 = memref.load %arg2[%923, %924] : memref<2x36xf32, #tpu.memory_space<smem>>
    %926 = vector.broadcast %893 : f32 to vector<64x1xf32>
    %927 = arith.mulf %926, %662 : vector<64x1xf32>
    %928 = vector.broadcast %901 : f32 to vector<64x1xf32>
    %929 = arith.addf %927, %928 : vector<64x1xf32>
    %930 = vector.broadcast %897 : f32 to vector<1x64xf32>
    %931 = arith.mulf %930, %671 : vector<1x64xf32>
    %932 = vector.broadcast %929 : vector<64x1xf32> to vector<64x64xf32>
    %933 = vector.broadcast %931 : vector<1x64xf32> to vector<64x64xf32>
    %934 = arith.addf %932, %933 : vector<64x64xf32>
    %935 = vector.broadcast %905 : f32 to vector<64x1xf32>
    %936 = arith.mulf %935, %662 : vector<64x1xf32>
    %937 = vector.broadcast %913 : f32 to vector<64x1xf32>
    %938 = arith.addf %936, %937 : vector<64x1xf32>
    %939 = vector.broadcast %909 : f32 to vector<1x64xf32>
    %940 = arith.mulf %939, %671 : vector<1x64xf32>
    %941 = vector.broadcast %938 : vector<64x1xf32> to vector<64x64xf32>
    %942 = vector.broadcast %940 : vector<1x64xf32> to vector<64x64xf32>
    %943 = arith.addf %941, %942 : vector<64x64xf32>
    %944 = vector.broadcast %917 : f32 to vector<64x1xf32>
    %945 = arith.mulf %944, %662 : vector<64x1xf32>
    %946 = vector.broadcast %925 : f32 to vector<64x1xf32>
    %947 = arith.addf %945, %946 : vector<64x1xf32>
    %948 = vector.broadcast %921 : f32 to vector<1x64xf32>
    %949 = arith.mulf %948, %671 : vector<1x64xf32>
    %950 = vector.broadcast %947 : vector<64x1xf32> to vector<64x64xf32>
    %951 = vector.broadcast %949 : vector<1x64xf32> to vector<64x64xf32>
    %952 = arith.addf %950, %951 : vector<64x64xf32>
    %953 = arith.minimumf %934, %943 : vector<64x64xf32>
    %954 = arith.minimumf %953, %952 : vector<64x64xf32>
    %955 = arith.maximumf %934, %943 : vector<64x64xf32>
    %956 = arith.maximumf %955, %952 : vector<64x64xf32>
    %957 = arith.mulf %954, %956 : vector<64x64xf32>
    %cst_174 = arith.constant 0.000000e+00 : f32
    %958 = vector.broadcast %cst_174 : f32 to vector<64x64xf32>
    %959 = arith.cmpf oge, %957, %958 : vector<64x64xf32>
    %960 = arith.ori %888, %959 : vector<64x64xi1>
    %c4_i32_175 = arith.constant 4 : i32
    %961 = arith.extui %960 : vector<64x64xi1> to vector<64x64xi32>
    %962 = arith.sitofp %961 : vector<64x64xi32> to vector<64x64xf32>
    %963 = arith.addf %643, %962 : vector<64x64xf32>
    %c2_i32_176 = arith.constant 2 : i32
    %964 = vector.broadcast %c2_i32_176 : i32 to vector<64x1xi32>
    %965 = arith.muli %964, %3 : vector<64x1xi32>
    %c1_i32_177 = arith.constant 1 : i32
    %966 = vector.broadcast %c1_i32_177 : i32 to vector<64x1xi32>
    %967 = arith.addi %965, %966 : vector<64x1xi32>
    %c127_i32_178 = arith.constant 127 : i32
    %968 = vector.broadcast %c127_i32_178 : i32 to vector<64x1xi32>
    %969 = arith.subi %968, %967 : vector<64x1xi32>
    %c2_i32_179 = arith.constant 2 : i32
    %970 = vector.broadcast %c2_i32_179 : i32 to vector<1x64xi32>
    %971 = arith.muli %970, %4 : vector<1x64xi32>
    %c1_i32_180 = arith.constant 1 : i32
    %972 = vector.broadcast %c1_i32_180 : i32 to vector<1x64xi32>
    %973 = arith.addi %971, %972 : vector<1x64xi32>
    %974 = arith.sitofp %969 : vector<64x1xi32> to vector<64x1xf32>
    %cst_181 = arith.constant 2.000000e+00 : f32
    %975 = vector.broadcast %cst_181 : f32 to vector<64x1xf32>
    %976 = arith.mulf %975, %974 : vector<64x1xf32>
    %cst_182 = arith.constant 1.000000e+00 : f32
    %977 = vector.broadcast %cst_182 : f32 to vector<64x1xf32>
    %978 = arith.addf %976, %977 : vector<64x1xf32>
    %cst_183 = arith.constant 1.280000e+02 : f32
    %979 = vector.broadcast %cst_183 : f32 to vector<64x1xf32>
    %980 = arith.subf %978, %979 : vector<64x1xf32>
    %cst_184 = arith.constant 7.812500e-03 : f32
    %981 = vector.broadcast %cst_184 : f32 to vector<64x1xf32>
    %982 = arith.mulf %980, %981 : vector<64x1xf32>
    %983 = arith.sitofp %973 : vector<1x64xi32> to vector<1x64xf32>
    %cst_185 = arith.constant 2.000000e+00 : f32
    %984 = vector.broadcast %cst_185 : f32 to vector<1x64xf32>
    %985 = arith.mulf %984, %983 : vector<1x64xf32>
    %cst_186 = arith.constant 1.000000e+00 : f32
    %986 = vector.broadcast %cst_186 : f32 to vector<1x64xf32>
    %987 = arith.addf %985, %986 : vector<1x64xf32>
    %cst_187 = arith.constant 1.280000e+02 : f32
    %988 = vector.broadcast %cst_187 : f32 to vector<1x64xf32>
    %989 = arith.subf %987, %988 : vector<1x64xf32>
    %cst_188 = arith.constant 7.812500e-03 : f32
    %990 = vector.broadcast %cst_188 : f32 to vector<1x64xf32>
    %991 = arith.mulf %989, %990 : vector<1x64xf32>
    %false_189 = arith.constant false
    %992 = vector.broadcast %false_189 : i1 to vector<64x64xi1>
    %c0_i32_190 = arith.constant 0 : i32
    %c9_i32_191 = arith.constant 9 : i32
    %993 = arith.muli %c0_i32_190, %c9_i32_191 : i32
    %c0_i32_192 = arith.constant 0 : i32
    %994 = arith.addi %993, %c0_i32_192 : i32
    %995 = arith.index_cast %arg0 : i32 to index
    %996 = arith.index_cast %994 : i32 to index
    %997 = memref.load %arg2[%995, %996] : memref<2x36xf32, #tpu.memory_space<smem>>
    %c1_i32_193 = arith.constant 1 : i32
    %998 = arith.addi %993, %c1_i32_193 : i32
    %999 = arith.index_cast %arg0 : i32 to index
    %1000 = arith.index_cast %998 : i32 to index
    %1001 = memref.load %arg2[%999, %1000] : memref<2x36xf32, #tpu.memory_space<smem>>
    %c2_i32_194 = arith.constant 2 : i32
    %1002 = arith.addi %993, %c2_i32_194 : i32
    %1003 = arith.index_cast %arg0 : i32 to index
    %1004 = arith.index_cast %1002 : i32 to index
    %1005 = memref.load %arg2[%1003, %1004] : memref<2x36xf32, #tpu.memory_space<smem>>
    %c3_i32_195 = arith.constant 3 : i32
    %1006 = arith.addi %993, %c3_i32_195 : i32
    %1007 = arith.index_cast %arg0 : i32 to index
    %1008 = arith.index_cast %1006 : i32 to index
    %1009 = memref.load %arg2[%1007, %1008] : memref<2x36xf32, #tpu.memory_space<smem>>
    %c4_i32_196 = arith.constant 4 : i32
    %1010 = arith.addi %993, %c4_i32_196 : i32
    %1011 = arith.index_cast %arg0 : i32 to index
    %1012 = arith.index_cast %1010 : i32 to index
    %1013 = memref.load %arg2[%1011, %1012] : memref<2x36xf32, #tpu.memory_space<smem>>
    %c5_i32_197 = arith.constant 5 : i32
    %1014 = arith.addi %993, %c5_i32_197 : i32
    %1015 = arith.index_cast %arg0 : i32 to index
    %1016 = arith.index_cast %1014 : i32 to index
    %1017 = memref.load %arg2[%1015, %1016] : memref<2x36xf32, #tpu.memory_space<smem>>
    %c6_i32_198 = arith.constant 6 : i32
    %1018 = arith.addi %993, %c6_i32_198 : i32
    %1019 = arith.index_cast %arg0 : i32 to index
    %1020 = arith.index_cast %1018 : i32 to index
    %1021 = memref.load %arg2[%1019, %1020] : memref<2x36xf32, #tpu.memory_space<smem>>
    %c7_i32_199 = arith.constant 7 : i32
    %1022 = arith.addi %993, %c7_i32_199 : i32
    %1023 = arith.index_cast %arg0 : i32 to index
    %1024 = arith.index_cast %1022 : i32 to index
    %1025 = memref.load %arg2[%1023, %1024] : memref<2x36xf32, #tpu.memory_space<smem>>
    %c8_i32_200 = arith.constant 8 : i32
    %1026 = arith.addi %993, %c8_i32_200 : i32
    %1027 = arith.index_cast %arg0 : i32 to index
    %1028 = arith.index_cast %1026 : i32 to index
    %1029 = memref.load %arg2[%1027, %1028] : memref<2x36xf32, #tpu.memory_space<smem>>
    %1030 = vector.broadcast %997 : f32 to vector<64x1xf32>
    %1031 = arith.mulf %1030, %982 : vector<64x1xf32>
    %1032 = vector.broadcast %1005 : f32 to vector<64x1xf32>
    %1033 = arith.addf %1031, %1032 : vector<64x1xf32>
    %1034 = vector.broadcast %1001 : f32 to vector<1x64xf32>
    %1035 = arith.mulf %1034, %991 : vector<1x64xf32>
    %1036 = vector.broadcast %1033 : vector<64x1xf32> to vector<64x64xf32>
    %1037 = vector.broadcast %1035 : vector<1x64xf32> to vector<64x64xf32>
    %1038 = arith.addf %1036, %1037 : vector<64x64xf32>
    %1039 = vector.broadcast %1009 : f32 to vector<64x1xf32>
    %1040 = arith.mulf %1039, %982 : vector<64x1xf32>
    %1041 = vector.broadcast %1017 : f32 to vector<64x1xf32>
    %1042 = arith.addf %1040, %1041 : vector<64x1xf32>
    %1043 = vector.broadcast %1013 : f32 to vector<1x64xf32>
    %1044 = arith.mulf %1043, %991 : vector<1x64xf32>
    %1045 = vector.broadcast %1042 : vector<64x1xf32> to vector<64x64xf32>
    %1046 = vector.broadcast %1044 : vector<1x64xf32> to vector<64x64xf32>
    %1047 = arith.addf %1045, %1046 : vector<64x64xf32>
    %1048 = vector.broadcast %1021 : f32 to vector<64x1xf32>
    %1049 = arith.mulf %1048, %982 : vector<64x1xf32>
    %1050 = vector.broadcast %1029 : f32 to vector<64x1xf32>
    %1051 = arith.addf %1049, %1050 : vector<64x1xf32>
    %1052 = vector.broadcast %1025 : f32 to vector<1x64xf32>
    %1053 = arith.mulf %1052, %991 : vector<1x64xf32>
    %1054 = vector.broadcast %1051 : vector<64x1xf32> to vector<64x64xf32>
    %1055 = vector.broadcast %1053 : vector<1x64xf32> to vector<64x64xf32>
    %1056 = arith.addf %1054, %1055 : vector<64x64xf32>
    %1057 = arith.minimumf %1038, %1047 : vector<64x64xf32>
    %1058 = arith.minimumf %1057, %1056 : vector<64x64xf32>
    %1059 = arith.maximumf %1038, %1047 : vector<64x64xf32>
    %1060 = arith.maximumf %1059, %1056 : vector<64x64xf32>
    %1061 = arith.mulf %1058, %1060 : vector<64x64xf32>
    %cst_201 = arith.constant 0.000000e+00 : f32
    %1062 = vector.broadcast %cst_201 : f32 to vector<64x64xf32>
    %1063 = arith.cmpf oge, %1061, %1062 : vector<64x64xf32>
    %1064 = arith.ori %992, %1063 : vector<64x64xi1>
    %c1_i32_202 = arith.constant 1 : i32
    %c9_i32_203 = arith.constant 9 : i32
    %1065 = arith.muli %c1_i32_202, %c9_i32_203 : i32
    %c0_i32_204 = arith.constant 0 : i32
    %1066 = arith.addi %1065, %c0_i32_204 : i32
    %1067 = arith.index_cast %arg0 : i32 to index
    %1068 = arith.index_cast %1066 : i32 to index
    %1069 = memref.load %arg2[%1067, %1068] : memref<2x36xf32, #tpu.memory_space<smem>>
    %c1_i32_205 = arith.constant 1 : i32
    %1070 = arith.addi %1065, %c1_i32_205 : i32
    %1071 = arith.index_cast %arg0 : i32 to index
    %1072 = arith.index_cast %1070 : i32 to index
    %1073 = memref.load %arg2[%1071, %1072] : memref<2x36xf32, #tpu.memory_space<smem>>
    %c2_i32_206 = arith.constant 2 : i32
    %1074 = arith.addi %1065, %c2_i32_206 : i32
    %1075 = arith.index_cast %arg0 : i32 to index
    %1076 = arith.index_cast %1074 : i32 to index
    %1077 = memref.load %arg2[%1075, %1076] : memref<2x36xf32, #tpu.memory_space<smem>>
    %c3_i32_207 = arith.constant 3 : i32
    %1078 = arith.addi %1065, %c3_i32_207 : i32
    %1079 = arith.index_cast %arg0 : i32 to index
    %1080 = arith.index_cast %1078 : i32 to index
    %1081 = memref.load %arg2[%1079, %1080] : memref<2x36xf32, #tpu.memory_space<smem>>
    %c4_i32_208 = arith.constant 4 : i32
    %1082 = arith.addi %1065, %c4_i32_208 : i32
    %1083 = arith.index_cast %arg0 : i32 to index
    %1084 = arith.index_cast %1082 : i32 to index
    %1085 = memref.load %arg2[%1083, %1084] : memref<2x36xf32, #tpu.memory_space<smem>>
    %c5_i32_209 = arith.constant 5 : i32
    %1086 = arith.addi %1065, %c5_i32_209 : i32
    %1087 = arith.index_cast %arg0 : i32 to index
    %1088 = arith.index_cast %1086 : i32 to index
    %1089 = memref.load %arg2[%1087, %1088] : memref<2x36xf32, #tpu.memory_space<smem>>
    %c6_i32_210 = arith.constant 6 : i32
    %1090 = arith.addi %1065, %c6_i32_210 : i32
    %1091 = arith.index_cast %arg0 : i32 to index
    %1092 = arith.index_cast %1090 : i32 to index
    %1093 = memref.load %arg2[%1091, %1092] : memref<2x36xf32, #tpu.memory_space<smem>>
    %c7_i32_211 = arith.constant 7 : i32
    %1094 = arith.addi %1065, %c7_i32_211 : i32
    %1095 = arith.index_cast %arg0 : i32 to index
    %1096 = arith.index_cast %1094 : i32 to index
    %1097 = memref.load %arg2[%1095, %1096] : memref<2x36xf32, #tpu.memory_space<smem>>
    %c8_i32_212 = arith.constant 8 : i32
    %1098 = arith.addi %1065, %c8_i32_212 : i32
    %1099 = arith.index_cast %arg0 : i32 to index
    %1100 = arith.index_cast %1098 : i32 to index
    %1101 = memref.load %arg2[%1099, %1100] : memref<2x36xf32, #tpu.memory_space<smem>>
    %1102 = vector.broadcast %1069 : f32 to vector<64x1xf32>
    %1103 = arith.mulf %1102, %982 : vector<64x1xf32>
    %1104 = vector.broadcast %1077 : f32 to vector<64x1xf32>
    %1105 = arith.addf %1103, %1104 : vector<64x1xf32>
    %1106 = vector.broadcast %1073 : f32 to vector<1x64xf32>
    %1107 = arith.mulf %1106, %991 : vector<1x64xf32>
    %1108 = vector.broadcast %1105 : vector<64x1xf32> to vector<64x64xf32>
    %1109 = vector.broadcast %1107 : vector<1x64xf32> to vector<64x64xf32>
    %1110 = arith.addf %1108, %1109 : vector<64x64xf32>
    %1111 = vector.broadcast %1081 : f32 to vector<64x1xf32>
    %1112 = arith.mulf %1111, %982 : vector<64x1xf32>
    %1113 = vector.broadcast %1089 : f32 to vector<64x1xf32>
    %1114 = arith.addf %1112, %1113 : vector<64x1xf32>
    %1115 = vector.broadcast %1085 : f32 to vector<1x64xf32>
    %1116 = arith.mulf %1115, %991 : vector<1x64xf32>
    %1117 = vector.broadcast %1114 : vector<64x1xf32> to vector<64x64xf32>
    %1118 = vector.broadcast %1116 : vector<1x64xf32> to vector<64x64xf32>
    %1119 = arith.addf %1117, %1118 : vector<64x64xf32>
    %1120 = vector.broadcast %1093 : f32 to vector<64x1xf32>
    %1121 = arith.mulf %1120, %982 : vector<64x1xf32>
    %1122 = vector.broadcast %1101 : f32 to vector<64x1xf32>
    %1123 = arith.addf %1121, %1122 : vector<64x1xf32>
    %1124 = vector.broadcast %1097 : f32 to vector<1x64xf32>
    %1125 = arith.mulf %1124, %991 : vector<1x64xf32>
    %1126 = vector.broadcast %1123 : vector<64x1xf32> to vector<64x64xf32>
    %1127 = vector.broadcast %1125 : vector<1x64xf32> to vector<64x64xf32>
    %1128 = arith.addf %1126, %1127 : vector<64x64xf32>
    %1129 = arith.minimumf %1110, %1119 : vector<64x64xf32>
    %1130 = arith.minimumf %1129, %1128 : vector<64x64xf32>
    %1131 = arith.maximumf %1110, %1119 : vector<64x64xf32>
    %1132 = arith.maximumf %1131, %1128 : vector<64x64xf32>
    %1133 = arith.mulf %1130, %1132 : vector<64x64xf32>
    %cst_213 = arith.constant 0.000000e+00 : f32
    %1134 = vector.broadcast %cst_213 : f32 to vector<64x64xf32>
    %1135 = arith.cmpf oge, %1133, %1134 : vector<64x64xf32>
    %1136 = arith.ori %1064, %1135 : vector<64x64xi1>
    %c2_i32_214 = arith.constant 2 : i32
    %c9_i32_215 = arith.constant 9 : i32
    %1137 = arith.muli %c2_i32_214, %c9_i32_215 : i32
    %c0_i32_216 = arith.constant 0 : i32
    %1138 = arith.addi %1137, %c0_i32_216 : i32
    %1139 = arith.index_cast %arg0 : i32 to index
    %1140 = arith.index_cast %1138 : i32 to index
    %1141 = memref.load %arg2[%1139, %1140] : memref<2x36xf32, #tpu.memory_space<smem>>
    %c1_i32_217 = arith.constant 1 : i32
    %1142 = arith.addi %1137, %c1_i32_217 : i32
    %1143 = arith.index_cast %arg0 : i32 to index
    %1144 = arith.index_cast %1142 : i32 to index
    %1145 = memref.load %arg2[%1143, %1144] : memref<2x36xf32, #tpu.memory_space<smem>>
    %c2_i32_218 = arith.constant 2 : i32
    %1146 = arith.addi %1137, %c2_i32_218 : i32
    %1147 = arith.index_cast %arg0 : i32 to index
    %1148 = arith.index_cast %1146 : i32 to index
    %1149 = memref.load %arg2[%1147, %1148] : memref<2x36xf32, #tpu.memory_space<smem>>
    %c3_i32_219 = arith.constant 3 : i32
    %1150 = arith.addi %1137, %c3_i32_219 : i32
    %1151 = arith.index_cast %arg0 : i32 to index
    %1152 = arith.index_cast %1150 : i32 to index
    %1153 = memref.load %arg2[%1151, %1152] : memref<2x36xf32, #tpu.memory_space<smem>>
    %c4_i32_220 = arith.constant 4 : i32
    %1154 = arith.addi %1137, %c4_i32_220 : i32
    %1155 = arith.index_cast %arg0 : i32 to index
    %1156 = arith.index_cast %1154 : i32 to index
    %1157 = memref.load %arg2[%1155, %1156] : memref<2x36xf32, #tpu.memory_space<smem>>
    %c5_i32_221 = arith.constant 5 : i32
    %1158 = arith.addi %1137, %c5_i32_221 : i32
    %1159 = arith.index_cast %arg0 : i32 to index
    %1160 = arith.index_cast %1158 : i32 to index
    %1161 = memref.load %arg2[%1159, %1160] : memref<2x36xf32, #tpu.memory_space<smem>>
    %c6_i32_222 = arith.constant 6 : i32
    %1162 = arith.addi %1137, %c6_i32_222 : i32
    %1163 = arith.index_cast %arg0 : i32 to index
    %1164 = arith.index_cast %1162 : i32 to index
    %1165 = memref.load %arg2[%1163, %1164] : memref<2x36xf32, #tpu.memory_space<smem>>
    %c7_i32_223 = arith.constant 7 : i32
    %1166 = arith.addi %1137, %c7_i32_223 : i32
    %1167 = arith.index_cast %arg0 : i32 to index
    %1168 = arith.index_cast %1166 : i32 to index
    %1169 = memref.load %arg2[%1167, %1168] : memref<2x36xf32, #tpu.memory_space<smem>>
    %c8_i32_224 = arith.constant 8 : i32
    %1170 = arith.addi %1137, %c8_i32_224 : i32
    %1171 = arith.index_cast %arg0 : i32 to index
    %1172 = arith.index_cast %1170 : i32 to index
    %1173 = memref.load %arg2[%1171, %1172] : memref<2x36xf32, #tpu.memory_space<smem>>
    %1174 = vector.broadcast %1141 : f32 to vector<64x1xf32>
    %1175 = arith.mulf %1174, %982 : vector<64x1xf32>
    %1176 = vector.broadcast %1149 : f32 to vector<64x1xf32>
    %1177 = arith.addf %1175, %1176 : vector<64x1xf32>
    %1178 = vector.broadcast %1145 : f32 to vector<1x64xf32>
    %1179 = arith.mulf %1178, %991 : vector<1x64xf32>
    %1180 = vector.broadcast %1177 : vector<64x1xf32> to vector<64x64xf32>
    %1181 = vector.broadcast %1179 : vector<1x64xf32> to vector<64x64xf32>
    %1182 = arith.addf %1180, %1181 : vector<64x64xf32>
    %1183 = vector.broadcast %1153 : f32 to vector<64x1xf32>
    %1184 = arith.mulf %1183, %982 : vector<64x1xf32>
    %1185 = vector.broadcast %1161 : f32 to vector<64x1xf32>
    %1186 = arith.addf %1184, %1185 : vector<64x1xf32>
    %1187 = vector.broadcast %1157 : f32 to vector<1x64xf32>
    %1188 = arith.mulf %1187, %991 : vector<1x64xf32>
    %1189 = vector.broadcast %1186 : vector<64x1xf32> to vector<64x64xf32>
    %1190 = vector.broadcast %1188 : vector<1x64xf32> to vector<64x64xf32>
    %1191 = arith.addf %1189, %1190 : vector<64x64xf32>
    %1192 = vector.broadcast %1165 : f32 to vector<64x1xf32>
    %1193 = arith.mulf %1192, %982 : vector<64x1xf32>
    %1194 = vector.broadcast %1173 : f32 to vector<64x1xf32>
    %1195 = arith.addf %1193, %1194 : vector<64x1xf32>
    %1196 = vector.broadcast %1169 : f32 to vector<1x64xf32>
    %1197 = arith.mulf %1196, %991 : vector<1x64xf32>
    %1198 = vector.broadcast %1195 : vector<64x1xf32> to vector<64x64xf32>
    %1199 = vector.broadcast %1197 : vector<1x64xf32> to vector<64x64xf32>
    %1200 = arith.addf %1198, %1199 : vector<64x64xf32>
    %1201 = arith.minimumf %1182, %1191 : vector<64x64xf32>
    %1202 = arith.minimumf %1201, %1200 : vector<64x64xf32>
    %1203 = arith.maximumf %1182, %1191 : vector<64x64xf32>
    %1204 = arith.maximumf %1203, %1200 : vector<64x64xf32>
    %1205 = arith.mulf %1202, %1204 : vector<64x64xf32>
    %cst_225 = arith.constant 0.000000e+00 : f32
    %1206 = vector.broadcast %cst_225 : f32 to vector<64x64xf32>
    %1207 = arith.cmpf oge, %1205, %1206 : vector<64x64xf32>
    %1208 = arith.ori %1136, %1207 : vector<64x64xi1>
    %c3_i32_226 = arith.constant 3 : i32
    %c9_i32_227 = arith.constant 9 : i32
    %1209 = arith.muli %c3_i32_226, %c9_i32_227 : i32
    %c0_i32_228 = arith.constant 0 : i32
    %1210 = arith.addi %1209, %c0_i32_228 : i32
    %1211 = arith.index_cast %arg0 : i32 to index
    %1212 = arith.index_cast %1210 : i32 to index
    %1213 = memref.load %arg2[%1211, %1212] : memref<2x36xf32, #tpu.memory_space<smem>>
    %c1_i32_229 = arith.constant 1 : i32
    %1214 = arith.addi %1209, %c1_i32_229 : i32
    %1215 = arith.index_cast %arg0 : i32 to index
    %1216 = arith.index_cast %1214 : i32 to index
    %1217 = memref.load %arg2[%1215, %1216] : memref<2x36xf32, #tpu.memory_space<smem>>
    %c2_i32_230 = arith.constant 2 : i32
    %1218 = arith.addi %1209, %c2_i32_230 : i32
    %1219 = arith.index_cast %arg0 : i32 to index
    %1220 = arith.index_cast %1218 : i32 to index
    %1221 = memref.load %arg2[%1219, %1220] : memref<2x36xf32, #tpu.memory_space<smem>>
    %c3_i32_231 = arith.constant 3 : i32
    %1222 = arith.addi %1209, %c3_i32_231 : i32
    %1223 = arith.index_cast %arg0 : i32 to index
    %1224 = arith.index_cast %1222 : i32 to index
    %1225 = memref.load %arg2[%1223, %1224] : memref<2x36xf32, #tpu.memory_space<smem>>
    %c4_i32_232 = arith.constant 4 : i32
    %1226 = arith.addi %1209, %c4_i32_232 : i32
    %1227 = arith.index_cast %arg0 : i32 to index
    %1228 = arith.index_cast %1226 : i32 to index
    %1229 = memref.load %arg2[%1227, %1228] : memref<2x36xf32, #tpu.memory_space<smem>>
    %c5_i32_233 = arith.constant 5 : i32
    %1230 = arith.addi %1209, %c5_i32_233 : i32
    %1231 = arith.index_cast %arg0 : i32 to index
    %1232 = arith.index_cast %1230 : i32 to index
    %1233 = memref.load %arg2[%1231, %1232] : memref<2x36xf32, #tpu.memory_space<smem>>
    %c6_i32_234 = arith.constant 6 : i32
    %1234 = arith.addi %1209, %c6_i32_234 : i32
    %1235 = arith.index_cast %arg0 : i32 to index
    %1236 = arith.index_cast %1234 : i32 to index
    %1237 = memref.load %arg2[%1235, %1236] : memref<2x36xf32, #tpu.memory_space<smem>>
    %c7_i32_235 = arith.constant 7 : i32
    %1238 = arith.addi %1209, %c7_i32_235 : i32
    %1239 = arith.index_cast %arg0 : i32 to index
    %1240 = arith.index_cast %1238 : i32 to index
    %1241 = memref.load %arg2[%1239, %1240] : memref<2x36xf32, #tpu.memory_space<smem>>
    %c8_i32_236 = arith.constant 8 : i32
    %1242 = arith.addi %1209, %c8_i32_236 : i32
    %1243 = arith.index_cast %arg0 : i32 to index
    %1244 = arith.index_cast %1242 : i32 to index
    %1245 = memref.load %arg2[%1243, %1244] : memref<2x36xf32, #tpu.memory_space<smem>>
    %1246 = vector.broadcast %1213 : f32 to vector<64x1xf32>
    %1247 = arith.mulf %1246, %982 : vector<64x1xf32>
    %1248 = vector.broadcast %1221 : f32 to vector<64x1xf32>
    %1249 = arith.addf %1247, %1248 : vector<64x1xf32>
    %1250 = vector.broadcast %1217 : f32 to vector<1x64xf32>
    %1251 = arith.mulf %1250, %991 : vector<1x64xf32>
    %1252 = vector.broadcast %1249 : vector<64x1xf32> to vector<64x64xf32>
    %1253 = vector.broadcast %1251 : vector<1x64xf32> to vector<64x64xf32>
    %1254 = arith.addf %1252, %1253 : vector<64x64xf32>
    %1255 = vector.broadcast %1225 : f32 to vector<64x1xf32>
    %1256 = arith.mulf %1255, %982 : vector<64x1xf32>
    %1257 = vector.broadcast %1233 : f32 to vector<64x1xf32>
    %1258 = arith.addf %1256, %1257 : vector<64x1xf32>
    %1259 = vector.broadcast %1229 : f32 to vector<1x64xf32>
    %1260 = arith.mulf %1259, %991 : vector<1x64xf32>
    %1261 = vector.broadcast %1258 : vector<64x1xf32> to vector<64x64xf32>
    %1262 = vector.broadcast %1260 : vector<1x64xf32> to vector<64x64xf32>
    %1263 = arith.addf %1261, %1262 : vector<64x64xf32>
    %1264 = vector.broadcast %1237 : f32 to vector<64x1xf32>
    %1265 = arith.mulf %1264, %982 : vector<64x1xf32>
    %1266 = vector.broadcast %1245 : f32 to vector<64x1xf32>
    %1267 = arith.addf %1265, %1266 : vector<64x1xf32>
    %1268 = vector.broadcast %1241 : f32 to vector<1x64xf32>
    %1269 = arith.mulf %1268, %991 : vector<1x64xf32>
    %1270 = vector.broadcast %1267 : vector<64x1xf32> to vector<64x64xf32>
    %1271 = vector.broadcast %1269 : vector<1x64xf32> to vector<64x64xf32>
    %1272 = arith.addf %1270, %1271 : vector<64x64xf32>
    %1273 = arith.minimumf %1254, %1263 : vector<64x64xf32>
    %1274 = arith.minimumf %1273, %1272 : vector<64x64xf32>
    %1275 = arith.maximumf %1254, %1263 : vector<64x64xf32>
    %1276 = arith.maximumf %1275, %1272 : vector<64x64xf32>
    %1277 = arith.mulf %1274, %1276 : vector<64x64xf32>
    %cst_237 = arith.constant 0.000000e+00 : f32
    %1278 = vector.broadcast %cst_237 : f32 to vector<64x64xf32>
    %1279 = arith.cmpf oge, %1277, %1278 : vector<64x64xf32>
    %1280 = arith.ori %1208, %1279 : vector<64x64xi1>
    %c4_i32_238 = arith.constant 4 : i32
    %1281 = arith.extui %1280 : vector<64x64xi1> to vector<64x64xi32>
    %1282 = arith.sitofp %1281 : vector<64x64xi32> to vector<64x64xf32>
    %1283 = arith.addf %963, %1282 : vector<64x64xf32>
    %cst_239 = arith.constant 2.500000e-01 : f32
    %1284 = vector.broadcast %cst_239 : f32 to vector<64x64xf32>
    %1285 = arith.mulf %1283, %1284 : vector<64x64xf32>
    %c0 = arith.constant 0 : index
    %c0_240 = arith.constant 0 : index
    %c0_241 = arith.constant 0 : index
    %1286 = vector.load %arg3[%c0, %c0_240, %c0_241] : memref<1x64x64xf32, #tpu.memory_space<vmem>>, vector<1x64x64xf32>
    %1287 = vector.shape_cast %1286 : vector<1x64x64xf32> to vector<64x64xf32>
    %1288 = vector.shape_cast %1285 : vector<64x64xf32> to vector<1x64x64xf32>
    tpu.vector_store %arg3[%c0, %c0_240, %c0_241], %1288 {strides = array<i32>} : memref<1x64x64xf32, #tpu.memory_space<vmem>>, vector<1x64x64xf32>,
    return
  }
  func.func @transform_0(%arg0: i32, %arg1: i32) -> (i32, i32) {
    %c0_i32 = arith.constant 0 : i32
    %c0_i32_0 = arith.constant 0 : i32
    %c0_i32_1 = arith.constant 0 : i32
    return %c0_i32, %c0_i32_0 : i32, i32
  }
  func.func @transform_1(%arg0: i32, %arg1: i32) -> (i32, i32, i32) {
    %c0_i32 = arith.constant 0 : i32
    %c0_i32_0 = arith.constant 0 : i32
    return %arg0, %arg1, %c0_i32 : i32, i32, i32
  }
}

</mosaic_0001>

<llo_original>
// kernel: tpu_custom_call.1
$region0: #{tpu_custom_call.1}
  #allocation0 [shape = 'u32[]', space=smem, size = 0x4, offset = 0x4, fixed_abs, tag = 'smem constant byte address 0x4 - core index']
  #allocation1 [shape = 'u32[72,128]{1,0:T(1,128)}', space=vmem, size = 0x9000, scoped, tag = 'internal scratch']
  %s0 = inlined_call_operand.hbm [shape: f32[2,36], index: 0, kind: input, shape index: {}]
  %s1 = inlined_call_operand.hbm [shape: f32[2,64,64], index: 1, kind: output, shape index: {}]
  %s2 = sld [smem:[#allocation0]]
  $region41: #{tpu_custom_call.1} parent=0
    _
  %s4 = ssub.s32 1, %s2
  %s5 = scalar_select 0, %s4, %s2
  $region1: #{tpu_custom_call.1} parent=0
    #allocation2 [shape = 'u8[1024]{0}', space=smem, size = 0x400, scoped, tag = 'input window, operand 0, single buffered']
    #allocation3 [shape = 's32[2]{0}', space=sflag, size = 0x8, scoped, tag = 'scoped memory for tpu_custom_call.1']
    #allocation4 [shape = 's32[2]{0}', space=sflag, size = 0x8, scoped, tag = 'scoped memory for tpu_custom_call.1']
    #allocation5 [shape = 'u8[65536]{0}', space=vmem, size = 0x10000, scoped, tag = 'output window, operand 0']
    %6 = vsyncpa [#allocation4], 0
    %7 = vsyncpa [#allocation3], 0
    %s8 = scalar_lea.sflag [#allocation3], 1
    %9 = vsyncpa %s8, 0
    loop: start=0, step=1, limit=4
    $region2: #{tpu_custom_call.1} parent=1 // loop_pre_header
      _
    $region3: #{tpu_custom_call.1} parent=1 // loop_header
      %s11 = sphi 0, %s15
      %p12 = scmp.ge.s32.totalorder %s11, 4
      %s18 = sphi 0, %s30
      %s19 = sphi 0, %s26
      %s20 = sphi 0, %s18
      %s21 = sphi 0, %s19
      %s22 = sphi 0, %s20
      %s23 = sphi 0, %s21
      %s31 = sphi 0, %s31
      %s33 = sphi 0, %s31
      %s34 = sphi 0, %s33
      %s48 = sphi 0, %s34
      %s56 = sphi 0, %s58
      %s59 = sphi 0, %s56
      %s60 = sphi 0, %s59
      %s76 = sphi 0, %s60
    $region4: #{tpu_custom_call.1} parent=1 // loop_header_branch
      %14 = sbr.rel (%p12) target = $region8
    $region5: #{tpu_custom_call.1} parent=1 // loop_body
      %s16 = ssub.s32 %s11, 1
      %s17 = ssub.s32 %s11, 2
      %s24 = sadd.s32 1, %s19
      %p25 = scmp.ge.s32.totalorder %s24, 1
      %s26 = scalar_select %p25, 0, %s24
      %s27 = sadd.s32 1, %s18
      %s28 = scalar_select %p25, %s27, %s18
      %p29 = scmp.ge.s32.totalorder %s28, 2
      %s30 = scalar_select %p29, 0, %s28
      %s32 = sadd.s32 %s31, 1
      %p35 = scmp.eq.s32.totalorder %s11, 1
      %p36 = scmp.ne.s32.totalorder %s31, %s33
      %p37 = scmp.eq.s32.totalorder %s11, 0
      %p38 = por %p36, %p37
      %p39 = scmp.ne.s32.totalorder %s31, %s33
      %p40 = scmp.eq.s32.totalorder %s16, 1
      %p41 = por %p39, %p40
      %p42 = scmp.ne.s32.totalorder %s33, %s34
      %p43 = scmp.eq.s32.totalorder %s16, 0
      %p44 = por %p42, %p43
      %p45 = scmp.ne.s32.totalorder %s33, %s34
      %p46 = scmp.eq.s32.totalorder %s17, 1
      %p47 = por %p45, %p46
      %p49 = scmp.ne.s32.totalorder %s34, %s48
      %p50 = scmp.eq.s32.totalorder %s17, 0
      %p51 = por %p49, %p50
      %s52 = ssub.s32 %s18, %s30
      %s53 = ssub.s32 %s19, %s26
      %s54 = sor.u32 %s52, %s53
      %p55 = scmp.eq.s32.totalorder %s54, 0
      %s57 = sadd.s32 %s56, 1
      %s58 = scalar_select %p55, %s56, %s57
      %p61 = pneg %p55
      %p62 = scmp.eq.s32.totalorder %s11, 1
      %p63 = por %p61, %p62
      %p64 = scmp.ne.s32.totalorder %s56, %s59
      %p65 = scmp.eq.s32.totalorder %s11, 0
      %p66 = por %p64, %p65
      %p67 = scmp.ne.s32.totalorder %s56, %s59
      %p68 = scmp.eq.s32.totalorder %s16, 1
      %p69 = por %p67, %p68
      %p70 = scmp.ne.s32.totalorder %s59, %s60
      %p71 = scmp.eq.s32.totalorder %s16, 0
      %p72 = por %p70, %p71
      %p73 = scmp.ne.s32.totalorder %s59, %s60
      %p74 = scmp.eq.s32.totalorder %s17, 1
      %p75 = por %p73, %p74
      %p77 = scmp.ne.s32.totalorder %s60, %s76
      %p78 = scmp.eq.s32.totalorder %s17, 0
      %p79 = por %p77, %p78
      %p80 = scmp.le.s32.totalorder 1, %s11
      %p81 = scmp.lt.s32.totalorder %s11, 3
      %p82 = pnand %p80, %p81
      %p83 = pneg %p82
      // Predicated region
      $region9: #{tpu_custom_call.1} parent=5 // pred_check
        _
      $region10: #{tpu_custom_call.1} parent=5 // pred_check_branch
        %85 = sbr.rel (%p82) target = $region12
      $region11: #{tpu_custom_call.1} parent=5 // pred_region
        %s86 = ssub.s32 %s11, 1
        // Predicated region
        $region13: #{tpu_custom_call.1} parent=11 // pred_check
          %p87 = pneg %p44
        $region14: #{tpu_custom_call.1} parent=11 // pred_check_branch
          %89 = sbr.rel (%p87) target = $region16
        $region15: #{tpu_custom_call.1} parent=11 // pred_region
          %91 = vsyncadd [#allocation4], 0
          %s93 = sshll.u32 %s0, 4
          %s94 = int_to_ptr.hbm [resolvable:$true] %s93
          %96 = dma.hbm_to_smem %s94, 32, [#allocation2], [#allocation4]
        $region16: #{tpu_custom_call.1} parent=11 // pred_fallthru
          _
      $region12: #{tpu_custom_call.1} parent=5 // pred_fallthru
        _
      %p97 = scmp.lt.s32.totalorder %s11, 2
      // Predicated region
      $region17: #{tpu_custom_call.1} parent=5 // pred_check
        %p98 = pneg %p97
      $region18: #{tpu_custom_call.1} parent=5 // pred_check_branch
        %100 = sbr.rel (%p98) target = $region20
      $region19: #{tpu_custom_call.1} parent=5 // pred_region
        _
      $region20: #{tpu_custom_call.1} parent=5 // pred_fallthru
        _
      %p101 = scmp.le.s32.totalorder 1, %s11
      %p102 = scmp.lt.s32.totalorder %s11, 3
      %p103 = pnand %p101, %p102
      %p104 = pneg %p103
      // Predicated region
      $region21: #{tpu_custom_call.1} parent=5 // pred_check
        _
      $region22: #{tpu_custom_call.1} parent=5 // pred_check_branch
        %106 = sbr.rel (%p103) target = $region24
      $region23: #{tpu_custom_call.1} parent=5 // pred_region
        %s107 = ssub.s32 %s11, 1
        // Predicated region
        $region25: #{tpu_custom_call.1} parent=23 // pred_check
          %p108 = pneg %p44
        $region26: #{tpu_custom_call.1} parent=23 // pred_check_branch
          %110 = sbr.rel (%p108) target = $region28
        $region27: #{tpu_custom_call.1} parent=23 // pred_region
          %112 = dma.done [#allocation4], 32
        $region28: #{tpu_custom_call.1} parent=23 // pred_fallthru
          _
        %113 = sfence
        %p114 = pneg %p44
        %p115 = pneg %p41
        %p116 = pneg %p72
        %p117 = pneg %p69
        %s118 = sand.u32 %s59, 1
        %s119 = scalar_lea.sflag [#allocation3], %s118
        %s120 = sand.u32 %s59, 1
        %s121 = smul.addr %s120, 64
        %s122 = scalar_lea.vmem [#allocation5], %s121
        %s123 = smul.u32 8, %s21
        %s124 = smul.u32 %s21, 64
        %v125 = vlaneseq
        %v126 = vshrl.u32 %v125, 7
        %v127 = vadd.s32 %v126, 8
        %v128 = vadd.s32 %v126, 16
        %v129 = vadd.s32 %v126, 24
        %v130 = vadd.s32 %v126, 32
        %v131 = vadd.s32 %v126, 40
        %v132 = vadd.s32 %v126, 48
        %v133 = vadd.s32 %v126, 56
        %v134 = vstv %s124
        %v135 = vadd.s32 %v134, %v126
        %v136 = vadd.s32 %v134, %v127
        %v137 = vadd.s32 %v134, %v128
        %v138 = vadd.s32 %v134, %v129
        %v139 = vadd.s32 %v134, %v130
        %v140 = vadd.s32 %v134, %v131
        %v141 = vadd.s32 %v134, %v132
        %v142 = vadd.s32 %v134, %v133
        %v143 = vlaneseq
        %v144 = vand.u32 %v143, 127
        %v145 = vmul.u32 %v135, 2
        %v146 = vmul.u32 %v136, 2
        %v147 = vmul.u32 %v137, 2
        %v148 = vmul.u32 %v138, 2
        %v149 = vmul.u32 %v139, 2
        %v150 = vmul.u32 %v140, 2
        %v151 = vmul.u32 %v141, 2
        %v152 = vmul.u32 %v142, 2
        %v153 = vsub.s32 127, %v145
        %v154 = vsub.s32 127, %v146
        %v155 = vsub.s32 127, %v147
        %v156 = vsub.s32 127, %v148
        %v157 = vsub.s32 127, %v149
        %v158 = vsub.s32 127, %v150
        %v159 = vsub.s32 127, %v151
        %v160 = vsub.s32 127, %v152
        %v161 = vmul.u32 %v144, 2
        %v162 = vcvt.s32.f32 %v153
        %v163 = vcvt.s32.f32 %v154
        %v164 = vcvt.s32.f32 %v155
        %v165 = vcvt.s32.f32 %v156
        %v166 = vcvt.s32.f32 %v157
        %v167 = vcvt.s32.f32 %v158
        %v168 = vcvt.s32.f32 %v159
        %v169 = vcvt.s32.f32 %v160
        %v170 = vmul.f32 %v162, 2.0
        %v171 = vmul.f32 %v163, 2.0
        %v172 = vmul.f32 %v164, 2.0
        %v173 = vmul.f32 %v165, 2.0
        %v174 = vmul.f32 %v166, 2.0
        %v175 = vmul.f32 %v167, 2.0
        %v176 = vmul.f32 %v168, 2.0
        %v177 = vmul.f32 %v169, 2.0
        %v178 = vadd.f32 %v170, 1.0
        %v179 = vadd.f32 %v171, 1.0
        %v180 = vadd.f32 %v172, 1.0
        %v181 = vadd.f32 %v173, 1.0
        %v182 = vadd.f32 %v174, 1.0
        %v183 = vadd.f32 %v175, 1.0
        %v184 = vadd.f32 %v176, 1.0
        %v185 = vadd.f32 %v177, 1.0
        %v186 = vsub.f32 %v178, 128.0
        %v187 = vsub.f32 %v179, 128.0
        %v188 = vsub.f32 %v180, 128.0
        %v189 = vsub.f32 %v181, 128.0
        %v190 = vsub.f32 %v182, 128.0
        %v191 = vsub.f32 %v183, 128.0
        %v192 = vsub.f32 %v184, 128.0
        %v193 = vsub.f32 %v185, 128.0
        %v194 = vmul.f32 %v186, 0.0078125
        %v195 = vmul.f32 %v187, 0.0078125
        %v196 = vmul.f32 %v188, 0.0078125
        %v197 = vmul.f32 %v189, 0.0078125
        %v198 = vmul.f32 %v190, 0.0078125
        %v199 = vmul.f32 %v191, 0.0078125
        %v200 = vmul.f32 %v192, 0.0078125
        %v201 = vmul.f32 %v193, 0.0078125
        %v202 = vcvt.s32.f32 %v161
        %v203 = vmul.f32 %v202, 2.0
        %v204 = vadd.f32 %v203, 1.0
        %v205 = vsub.f32 %v204, 128.0
        %v206 = vmul.f32 %v205, 0.0078125
        %s207 = smul.u32 %s20, 128
        %s208 = sld [smem:[#allocation2 + %s207]]
        %s209 = sadd.s32 %s207, 1
        %s210 = sld [smem:[#allocation2 + %s209]]
        %s211 = sadd.s32 %s207, 2
        %s212 = sld [smem:[#allocation2 + %s211]]
        %s213 = sadd.s32 %s207, 3
        %s214 = sld [smem:[#allocation2 + %s213]]
        %s215 = sadd.s32 %s207, 4
        %s216 = sld [smem:[#allocation2 + %s215]]
        %s217 = sadd.s32 %s207, 5
        %s218 = sld [smem:[#allocation2 + %s217]]
        %s219 = sadd.s32 %s207, 6
        %s220 = sld [smem:[#allocation2 + %s219]]
        %s221 = sadd.s32 %s207, 7
        %s222 = sld [smem:[#allocation2 + %s221]]
        %s223 = sadd.s32 %s207, 8
        %s224 = sld [smem:[#allocation2 + %s223]]
        %v225 = vstv %s208
        %v226 = vmul.f32 %v225, %v194
        %v227 = vmul.f32 %v225, %v195
        %v228 = vmul.f32 %v225, %v196
        %v229 = vmul.f32 %v225, %v197
        %v230 = vmul.f32 %v225, %v198
        %v231 = vmul.f32 %v225, %v199
        %v232 = vmul.f32 %v225, %v200
        %v233 = vmul.f32 %v225, %v201
        %v234 = vstv %s212
        %v235 = vadd.f32 %v226, %v234
        %v236 = vadd.f32 %v227, %v234
        %v237 = vadd.f32 %v228, %v234
        %v238 = vadd.f32 %v229, %v234
        %v239 = vadd.f32 %v230, %v234
        %v240 = vadd.f32 %v231, %v234
        %v241 = vadd.f32 %v232, %v234
        %v242 = vadd.f32 %v233, %v234
        %v243 = vstv %s210
        %v244 = vmul.f32 %v243, %v206
        %v245 = vadd.f32 %v235, %v244
        %v246 = vadd.f32 %v236, %v244
        %v247 = vadd.f32 %v237, %v244
        %v248 = vadd.f32 %v238, %v244
        %v249 = vadd.f32 %v239, %v244
        %v250 = vadd.f32 %v240, %v244
        %v251 = vadd.f32 %v241, %v244
        %v252 = vadd.f32 %v242, %v244
        %v253 = vstv %s214
        %v254 = vmul.f32 %v253, %v194
        %v255 = vmul.f32 %v253, %v195
        %v256 = vmul.f32 %v253, %v196
        %v257 = vmul.f32 %v253, %v197
        %v258 = vmul.f32 %v253, %v198
        %v259 = vmul.f32 %v253, %v199
        %v260 = vmul.f32 %v253, %v200
        %v261 = vmul.f32 %v253, %v201
        %v262 = vstv %s218
        %v263 = vadd.f32 %v254, %v262
        %v264 = vadd.f32 %v255, %v262
        %v265 = vadd.f32 %v256, %v262
        %v266 = vadd.f32 %v257, %v262
        %v267 = vadd.f32 %v258, %v262
        %v268 = vadd.f32 %v259, %v262
        %v269 = vadd.f32 %v260, %v262
        %v270 = vadd.f32 %v261, %v262
        %v271 = vstv %s216
        %v272 = vmul.f32 %v271, %v206
        %v273 = vadd.f32 %v263, %v272
        %v274 = vadd.f32 %v264, %v272
        %v275 = vadd.f32 %v265, %v272
        %v276 = vadd.f32 %v266, %v272
        %v277 = vadd.f32 %v267, %v272
        %v278 = vadd.f32 %v268, %v272
        %v279 = vadd.f32 %v269, %v272
        %v280 = vadd.f32 %v270, %v272
        %v281 = vstv %s220
        %v282 = vmul.f32 %v281, %v194
        %v283 = vmul.f32 %v281, %v195
        %v284 = vmul.f32 %v281, %v196
        %v285 = vmul.f32 %v281, %v197
        %v286 = vmul.f32 %v281, %v198
        %v287 = vmul.f32 %v281, %v199
        %v288 = vmul.f32 %v281, %v200
        %v289 = vmul.f32 %v281, %v201
        %v290 = vstv %s224
        %v291 = vadd.f32 %v282, %v290
        %v292 = vadd.f32 %v283, %v290
        %v293 = vadd.f32 %v284, %v290
        %v294 = vadd.f32 %v285, %v290
        %v295 = vadd.f32 %v286, %v290
        %v296 = vadd.f32 %v287, %v290
        %v297 = vadd.f32 %v288, %v290
        %v298 = vadd.f32 %v289, %v290
        %v299 = vstv %s222
        %v300 = vmul.f32 %v299, %v206
        %v301 = vadd.f32 %v291, %v300
        %v302 = vadd.f32 %v292, %v300
        %v303 = vadd.f32 %v293, %v300
        %v304 = vadd.f32 %v294, %v300
        %v305 = vadd.f32 %v295, %v300
        %v306 = vadd.f32 %v296, %v300
        %v307 = vadd.f32 %v297, %v300
        %v308 = vadd.f32 %v298, %v300
        %v309 = vmin.f32 %v245, %v273
        %v310 = vmin.f32 %v246, %v274
        %v311 = vmin.f32 %v247, %v275
        %v312 = vmin.f32 %v248, %v276
        %v313 = vmin.f32 %v249, %v277
        %v314 = vmin.f32 %v250, %v278
        %v315 = vmin.f32 %v251, %v279
        %v316 = vmin.f32 %v252, %v280
        %v317 = vmin.f32 %v309, %v301
        %v318 = vmin.f32 %v310, %v302
        %v319 = vmin.f32 %v311, %v303
        %v320 = vmin.f32 %v312, %v304
        %v321 = vmin.f32 %v313, %v305
        %v322 = vmin.f32 %v314, %v306
        %v323 = vmin.f32 %v315, %v307
        %v324 = vmin.f32 %v316, %v308
        %v325 = vmax.f32 %v245, %v273
        %v326 = vmax.f32 %v246, %v274
        %v327 = vmax.f32 %v247, %v275
        %v328 = vmax.f32 %v248, %v276
        %v329 = vmax.f32 %v249, %v277
        %v330 = vmax.f32 %v250, %v278
        %v331 = vmax.f32 %v251, %v279
        %v332 = vmax.f32 %v252, %v280
        %v333 = vmax.f32 %v325, %v301
        %v334 = vmax.f32 %v326, %v302
        %v335 = vmax.f32 %v327, %v303
        %v336 = vmax.f32 %v328, %v304
        %v337 = vmax.f32 %v329, %v305
        %v338 = vmax.f32 %v330, %v306
        %v339 = vmax.f32 %v331, %v307
        %v340 = vmax.f32 %v332, %v308
        %v341 = vmul.f32 %v317, %v333
        %v342 = vmul.f32 %v318, %v334
        %v343 = vmul.f32 %v319, %v335
        %v344 = vmul.f32 %v320, %v336
        %v345 = vmul.f32 %v321, %v337
        %v346 = vmul.f32 %v322, %v338
        %v347 = vmul.f32 %v323, %v339
        %v348 = vmul.f32 %v324, %v340
        %vm349 = vcmp.ge.f32.partialorder %v341, 0.0
        %vm350 = vcmp.ge.f32.partialorder %v342, 0.0
        %vm351 = vcmp.ge.f32.partialorder %v343, 0.0
        %vm352 = vcmp.ge.f32.partialorder %v344, 0.0
        %vm353 = vcmp.ge.f32.partialorder %v345, 0.0
        %vm354 = vcmp.ge.f32.partialorder %v346, 0.0
        %vm355 = vcmp.ge.f32.partialorder %v347, 0.0
        %vm356 = vcmp.ge.f32.partialorder %v348, 0.0
        %s357 = sadd.s32 %s207, 9
        %s358 = sld [smem:[#allocation2 + %s357]]
        %s359 = sadd.s32 %s207, 10
        %s360 = sld [smem:[#allocation2 + %s359]]
        %s361 = sadd.s32 %s207, 11
        %s362 = sld [smem:[#allocation2 + %s361]]
        %s363 = sadd.s32 %s207, 12
        %s364 = sld [smem:[#allocation2 + %s363]]
        %s365 = sadd.s32 %s207, 13
        %s366 = sld [smem:[#allocation2 + %s365]]
        %s367 = sadd.s32 %s207, 14
        %s368 = sld [smem:[#allocation2 + %s367]]
        %s369 = sadd.s32 %s207, 15
        %s370 = sld [smem:[#allocation2 + %s369]]
        %s371 = sadd.s32 %s207, 16
        %s372 = sld [smem:[#allocation2 + %s371]]
        %s373 = sadd.s32 %s207, 17
        %s374 = sld [smem:[#allocation2 + %s373]]
        %v375 = vstv %s358
        %v376 = vmul.f32 %v375, %v194
        %v377 = vmul.f32 %v375, %v195
        %v378 = vmul.f32 %v375, %v196
        %v379 = vmul.f32 %v375, %v197
        %v380 = vmul.f32 %v375, %v198
        %v381 = vmul.f32 %v375, %v199
        %v382 = vmul.f32 %v375, %v200
        %v383 = vmul.f32 %v375, %v201
        %v384 = vstv %s362
        %v385 = vadd.f32 %v376, %v384
        %v386 = vadd.f32 %v377, %v384
        %v387 = vadd.f32 %v378, %v384
        %v388 = vadd.f32 %v379, %v384
        %v389 = vadd.f32 %v380, %v384
        %v390 = vadd.f32 %v381, %v384
        %v391 = vadd.f32 %v382, %v384
        %v392 = vadd.f32 %v383, %v384
        %v393 = vstv %s360
        %v394 = vmul.f32 %v393, %v206
        %v395 = vadd.f32 %v385, %v394
        %v396 = vadd.f32 %v386, %v394
        %v397 = vadd.f32 %v387, %v394
        %v398 = vadd.f32 %v388, %v394
        %v399 = vadd.f32 %v389, %v394
        %v400 = vadd.f32 %v390, %v394
        %v401 = vadd.f32 %v391, %v394
        %v402 = vadd.f32 %v392, %v394
        %v403 = vstv %s364
        %v404 = vmul.f32 %v403, %v194
        %v405 = vmul.f32 %v403, %v195
        %v406 = vmul.f32 %v403, %v196
        %v407 = vmul.f32 %v403, %v197
        %v408 = vmul.f32 %v403, %v198
        %v409 = vmul.f32 %v403, %v199
        %v410 = vmul.f32 %v403, %v200
        %v411 = vmul.f32 %v403, %v201
        %v412 = vstv %s368
        %v413 = vadd.f32 %v404, %v412
        %v414 = vadd.f32 %v405, %v412
        %v415 = vadd.f32 %v406, %v412
        %v416 = vadd.f32 %v407, %v412
        %v417 = vadd.f32 %v408, %v412
        %v418 = vadd.f32 %v409, %v412
        %v419 = vadd.f32 %v410, %v412
        %v420 = vadd.f32 %v411, %v412
        %v421 = vstv %s366
        %v422 = vmul.f32 %v421, %v206
        %v423 = vadd.f32 %v413, %v422
        %v424 = vadd.f32 %v414, %v422
        %v425 = vadd.f32 %v415, %v422
        %v426 = vadd.f32 %v416, %v422
        %v427 = vadd.f32 %v417, %v422
        %v428 = vadd.f32 %v418, %v422
        %v429 = vadd.f32 %v419, %v422
        %v430 = vadd.f32 %v420, %v422
        %v431 = vstv %s370
        %v432 = vmul.f32 %v431, %v194
        %v433 = vmul.f32 %v431, %v195
        %v434 = vmul.f32 %v431, %v196
        %v435 = vmul.f32 %v431, %v197
        %v436 = vmul.f32 %v431, %v198
        %v437 = vmul.f32 %v431, %v199
        %v438 = vmul.f32 %v431, %v200
        %v439 = vmul.f32 %v431, %v201
        %v440 = vstv %s374
        %v441 = vadd.f32 %v432, %v440
        %v442 = vadd.f32 %v433, %v440
        %v443 = vadd.f32 %v434, %v440
        %v444 = vadd.f32 %v435, %v440
        %v445 = vadd.f32 %v436, %v440
        %v446 = vadd.f32 %v437, %v440
        %v447 = vadd.f32 %v438, %v440
        %v448 = vadd.f32 %v439, %v440
        %v449 = vstv %s372
        %v450 = vmul.f32 %v449, %v206
        %v451 = vadd.f32 %v441, %v450
        %v452 = vadd.f32 %v442, %v450
        %v453 = vadd.f32 %v443, %v450
        %v454 = vadd.f32 %v444, %v450
        %v455 = vadd.f32 %v445, %v450
        %v456 = vadd.f32 %v446, %v450
        %v457 = vadd.f32 %v447, %v450
        %v458 = vadd.f32 %v448, %v450
        %v459 = vmin.f32 %v395, %v423
        %v460 = vmin.f32 %v396, %v424
        %v461 = vmin.f32 %v397, %v425
        %v462 = vmin.f32 %v398, %v426
        %v463 = vmin.f32 %v399, %v427
        %v464 = vmin.f32 %v400, %v428
        %v465 = vmin.f32 %v401, %v429
        %v466 = vmin.f32 %v402, %v430
        %v467 = vmin.f32 %v459, %v451
        %v468 = vmin.f32 %v460, %v452
        %v469 = vmin.f32 %v461, %v453
        %v470 = vmin.f32 %v462, %v454
        %v471 = vmin.f32 %v463, %v455
        %v472 = vmin.f32 %v464, %v456
        %v473 = vmin.f32 %v465, %v457
        %v474 = vmin.f32 %v466, %v458
        %v475 = vmax.f32 %v395, %v423
        %v476 = vmax.f32 %v396, %v424
        %v477 = vmax.f32 %v397, %v425
        %v478 = vmax.f32 %v398, %v426
        %v479 = vmax.f32 %v399, %v427
        %v480 = vmax.f32 %v400, %v428
        %v481 = vmax.f32 %v401, %v429
        %v482 = vmax.f32 %v402, %v430
        %v483 = vmax.f32 %v475, %v451
        %v484 = vmax.f32 %v476, %v452
        %v485 = vmax.f32 %v477, %v453
        %v486 = vmax.f32 %v478, %v454
        %v487 = vmax.f32 %v479, %v455
        %v488 = vmax.f32 %v480, %v456
        %v489 = vmax.f32 %v481, %v457
        %v490 = vmax.f32 %v482, %v458
        %v491 = vmul.f32 %v467, %v483
        %v492 = vmul.f32 %v468, %v484
        %v493 = vmul.f32 %v469, %v485
        %v494 = vmul.f32 %v470, %v486
        %v495 = vmul.f32 %v471, %v487
        %v496 = vmul.f32 %v472, %v488
        %v497 = vmul.f32 %v473, %v489
        %v498 = vmul.f32 %v474, %v490
        %vm499 = vcmp.ge.f32.partialorder %v491, 0.0
        %vm500 = vcmp.ge.f32.partialorder %v492, 0.0
        %vm501 = vcmp.ge.f32.partialorder %v493, 0.0
        %vm502 = vcmp.ge.f32.partialorder %v494, 0.0
        %vm503 = vcmp.ge.f32.partialorder %v495, 0.0
        %vm504 = vcmp.ge.f32.partialorder %v496, 0.0
        %vm505 = vcmp.ge.f32.partialorder %v497, 0.0
        %vm506 = vcmp.ge.f32.partialorder %v498, 0.0
        %vm507 = vmor %vm349, %vm499
        %vm508 = vmor %vm350, %vm500
        %vm509 = vmor %vm351, %vm501
        %vm510 = vmor %vm352, %vm502
        %vm511 = vmor %vm353, %vm503
        %vm512 = vmor %vm354, %vm504
        %vm513 = vmor %vm355, %vm505
        %vm514 = vmor %vm356, %vm506
        %s515 = sadd.s32 %s207, 18
        %s516 = sld [smem:[#allocation2 + %s515]]
        %s517 = sadd.s32 %s207, 19
        %s518 = sld [smem:[#allocation2 + %s517]]
        %s519 = sadd.s32 %s207, 20
        %s520 = sld [smem:[#allocation2 + %s519]]
        %s521 = sadd.s32 %s207, 21
        %s522 = sld [smem:[#allocation2 + %s521]]
        %s523 = sadd.s32 %s207, 22
        %s524 = sld [smem:[#allocation2 + %s523]]
        %s525 = sadd.s32 %s207, 23
        %s526 = sld [smem:[#allocation2 + %s525]]
        %s527 = sadd.s32 %s207, 24
        %s528 = sld [smem:[#allocation2 + %s527]]
        %s529 = sadd.s32 %s207, 25
        %s530 = sld [smem:[#allocation2 + %s529]]
        %s531 = sadd.s32 %s207, 26
        %s532 = sld [smem:[#allocation2 + %s531]]
        %v533 = vstv %s516
        %v534 = vmul.f32 %v533, %v194
        %v535 = vmul.f32 %v533, %v195
        %v536 = vmul.f32 %v533, %v196
        %v537 = vmul.f32 %v533, %v197
        %v538 = vmul.f32 %v533, %v198
        %v539 = vmul.f32 %v533, %v199
        %v540 = vmul.f32 %v533, %v200
        %v541 = vmul.f32 %v533, %v201
        %v542 = vstv %s520
        %v543 = vadd.f32 %v534, %v542
        %v544 = vadd.f32 %v535, %v542
        %v545 = vadd.f32 %v536, %v542
        %v546 = vadd.f32 %v537, %v542
        %v547 = vadd.f32 %v538, %v542
        %v548 = vadd.f32 %v539, %v542
        %v549 = vadd.f32 %v540, %v542
        %v550 = vadd.f32 %v541, %v542
        %v551 = vstv %s518
        %v552 = vmul.f32 %v551, %v206
        %v553 = vadd.f32 %v543, %v552
        %v554 = vadd.f32 %v544, %v552
        %v555 = vadd.f32 %v545, %v552
        %v556 = vadd.f32 %v546, %v552
        %v557 = vadd.f32 %v547, %v552
        %v558 = vadd.f32 %v548, %v552
        %v559 = vadd.f32 %v549, %v552
        %v560 = vadd.f32 %v550, %v552
        %v561 = vstv %s522
        %v562 = vmul.f32 %v561, %v194
        %v563 = vmul.f32 %v561, %v195
        %v564 = vmul.f32 %v561, %v196
        %v565 = vmul.f32 %v561, %v197
        %v566 = vmul.f32 %v561, %v198
        %v567 = vmul.f32 %v561, %v199
        %v568 = vmul.f32 %v561, %v200
        %v569 = vmul.f32 %v561, %v201
        %v570 = vstv %s526
        %v571 = vadd.f32 %v562, %v570
        %v572 = vadd.f32 %v563, %v570
        %v573 = vadd.f32 %v564, %v570
        %v574 = vadd.f32 %v565, %v570
        %v575 = vadd.f32 %v566, %v570
        %v576 = vadd.f32 %v567, %v570
        %v577 = vadd.f32 %v568, %v570
        %v578 = vadd.f32 %v569, %v570
        %v579 = vstv %s524
        %v580 = vmul.f32 %v579, %v206
        %v581 = vadd.f32 %v571, %v580
        %v582 = vadd.f32 %v572, %v580
        %v583 = vadd.f32 %v573, %v580
        %v584 = vadd.f32 %v574, %v580
        %v585 = vadd.f32 %v575, %v580
        %v586 = vadd.f32 %v576, %v580
        %v587 = vadd.f32 %v577, %v580
        %v588 = vadd.f32 %v578, %v580
        %v589 = vstv %s528
        %v590 = vmul.f32 %v589, %v194
        %v591 = vmul.f32 %v589, %v195
        %v592 = vmul.f32 %v589, %v196
        %v593 = vmul.f32 %v589, %v197
        %v594 = vmul.f32 %v589, %v198
        %v595 = vmul.f32 %v589, %v199
        %v596 = vmul.f32 %v589, %v200
        %v597 = vmul.f32 %v589, %v201
        %v598 = vstv %s532
        %v599 = vadd.f32 %v590, %v598
        %v600 = vadd.f32 %v591, %v598
        %v601 = vadd.f32 %v592, %v598
        %v602 = vadd.f32 %v593, %v598
        %v603 = vadd.f32 %v594, %v598
        %v604 = vadd.f32 %v595, %v598
        %v605 = vadd.f32 %v596, %v598
        %v606 = vadd.f32 %v597, %v598
        %v607 = vstv %s530
        %v608 = vmul.f32 %v607, %v206
        %v609 = vadd.f32 %v599, %v608
        %v610 = vadd.f32 %v600, %v608
        %v611 = vadd.f32 %v601, %v608
        %v612 = vadd.f32 %v602, %v608
        %v613 = vadd.f32 %v603, %v608
        %v614 = vadd.f32 %v604, %v608
        %v615 = vadd.f32 %v605, %v608
        %v616 = vadd.f32 %v606, %v608
        %v617 = vmin.f32 %v553, %v581
        %v618 = vmin.f32 %v554, %v582
        %v619 = vmin.f32 %v555, %v583
        %v620 = vmin.f32 %v556, %v584
        %v621 = vmin.f32 %v557, %v585
        %v622 = vmin.f32 %v558, %v586
        %v623 = vmin.f32 %v559, %v587
        %v624 = vmin.f32 %v560, %v588
        %v625 = vmin.f32 %v617, %v609
        %v626 = vmin.f32 %v618, %v610
        %v627 = vmin.f32 %v619, %v611
        %v628 = vmin.f32 %v620, %v612
        %v629 = vmin.f32 %v621, %v613
        %v630 = vmin.f32 %v622, %v614
        %v631 = vmin.f32 %v623, %v615
        %v632 = vmin.f32 %v624, %v616
        %v633 = vmax.f32 %v553, %v581
        %v634 = vmax.f32 %v554, %v582
        %v635 = vmax.f32 %v555, %v583
        %v636 = vmax.f32 %v556, %v584
        %v637 = vmax.f32 %v557, %v585
        %v638 = vmax.f32 %v558, %v586
        %v639 = vmax.f32 %v559, %v587
        %v640 = vmax.f32 %v560, %v588
        %v641 = vmax.f32 %v633, %v609
        %v642 = vmax.f32 %v634, %v610
        %v643 = vmax.f32 %v635, %v611
        %v644 = vmax.f32 %v636, %v612
        %v645 = vmax.f32 %v637, %v613
        %v646 = vmax.f32 %v638, %v614
        %v647 = vmax.f32 %v639, %v615
        %v648 = vmax.f32 %v640, %v616
        %v649 = vmul.f32 %v625, %v641
        %v650 = vmul.f32 %v626, %v642
        %v651 = vmul.f32 %v627, %v643
        %v652 = vmul.f32 %v628, %v644
        %v653 = vmul.f32 %v629, %v645
        %v654 = vmul.f32 %v630, %v646
        %v655 = vmul.f32 %v631, %v647
        %v656 = vmul.f32 %v632, %v648
        %vm657 = vcmp.ge.f32.partialorder %v649, 0.0
        %vm658 = vcmp.ge.f32.partialorder %v650, 0.0
        %vm659 = vcmp.ge.f32.partialorder %v651, 0.0
        %vm660 = vcmp.ge.f32.partialorder %v652, 0.0
        %vm661 = vcmp.ge.f32.partialorder %v653, 0.0
        %vm662 = vcmp.ge.f32.partialorder %v654, 0.0
        %vm663 = vcmp.ge.f32.partialorder %v655, 0.0
        %vm664 = vcmp.ge.f32.partialorder %v656, 0.0
        %vm665 = vmor %vm507, %vm657
        %vm666 = vmor %vm508, %vm658
        %vm667 = vmor %vm509, %vm659
        %vm668 = vmor %vm510, %vm660
        %vm669 = vmor %vm511, %vm661
        %vm670 = vmor %vm512, %vm662
        %vm671 = vmor %vm513, %vm663
        %vm672 = vmor %vm514, %vm664
        %s673 = sadd.s32 %s207, 27
        %s674 = sld [smem:[#allocation2 + %s673]]
        %s675 = sadd.s32 %s207, 28
        %s676 = sld [smem:[#allocation2 + %s675]]
        %s677 = sadd.s32 %s207, 29
        %s678 = sld [smem:[#allocation2 + %s677]]
        %s679 = sadd.s32 %s207, 30
        %s680 = sld [smem:[#allocation2 + %s679]]
        %s681 = sadd.s32 %s207, 31
        %s682 = sld [smem:[#allocation2 + %s681]]
        %s683 = sadd.s32 %s207, 32
        %s684 = sld [smem:[#allocation2 + %s683]]
        %s685 = sadd.s32 %s207, 33
        %s686 = sld [smem:[#allocation2 + %s685]]
        %s687 = sadd.s32 %s207, 34
        %s688 = sld [smem:[#allocation2 + %s687]]
        %s689 = sadd.s32 %s207, 35
        %s690 = sld [smem:[#allocation2 + %s689]]
        %v691 = vstv %s674
        %v692 = vmul.f32 %v691, %v194
        %v693 = vmul.f32 %v691, %v195
        %v694 = vmul.f32 %v691, %v196
        %v695 = vmul.f32 %v691, %v197
        %v696 = vmul.f32 %v691, %v198
        %v697 = vmul.f32 %v691, %v199
        %v698 = vmul.f32 %v691, %v200
        %v699 = vmul.f32 %v691, %v201
        %v700 = vstv %s678
        %v701 = vadd.f32 %v692, %v700
        %v702 = vadd.f32 %v693, %v700
        %v703 = vadd.f32 %v694, %v700
        %v704 = vadd.f32 %v695, %v700
        %v705 = vadd.f32 %v696, %v700
        %v706 = vadd.f32 %v697, %v700
        %v707 = vadd.f32 %v698, %v700
        %v708 = vadd.f32 %v699, %v700
        %v709 = vstv %s676
        %v710 = vmul.f32 %v709, %v206
        %v711 = vadd.f32 %v701, %v710
        %v712 = vadd.f32 %v702, %v710
        %v713 = vadd.f32 %v703, %v710
        %v714 = vadd.f32 %v704, %v710
        %v715 = vadd.f32 %v705, %v710
        %v716 = vadd.f32 %v706, %v710
        %v717 = vadd.f32 %v707, %v710
        %v718 = vadd.f32 %v708, %v710
        %v719 = vstv %s680
        %v720 = vmul.f32 %v719, %v194
        %v721 = vmul.f32 %v719, %v195
        %v722 = vmul.f32 %v719, %v196
        %v723 = vmul.f32 %v719, %v197
        %v724 = vmul.f32 %v719, %v198
        %v725 = vmul.f32 %v719, %v199
        %v726 = vmul.f32 %v719, %v200
        %v727 = vmul.f32 %v719, %v201
        %v728 = vstv %s684
        %v729 = vadd.f32 %v720, %v728
        %v730 = vadd.f32 %v721, %v728
        %v731 = vadd.f32 %v722, %v728
        %v732 = vadd.f32 %v723, %v728
        %v733 = vadd.f32 %v724, %v728
        %v734 = vadd.f32 %v725, %v728
        %v735 = vadd.f32 %v726, %v728
        %v736 = vadd.f32 %v727, %v728
        %v737 = vstv %s682
        %v738 = vmul.f32 %v737, %v206
        %v739 = vadd.f32 %v729, %v738
        %v740 = vadd.f32 %v730, %v738
        %v741 = vadd.f32 %v731, %v738
        %v742 = vadd.f32 %v732, %v738
        %v743 = vadd.f32 %v733, %v738
        %v744 = vadd.f32 %v734, %v738
        %v745 = vadd.f32 %v735, %v738
        %v746 = vadd.f32 %v736, %v738
        %v747 = vstv %s686
        %v748 = vmul.f32 %v747, %v194
        %v749 = vmul.f32 %v747, %v195
        %v750 = vmul.f32 %v747, %v196
        %v751 = vmul.f32 %v747, %v197
        %v752 = vmul.f32 %v747, %v198
        %v753 = vmul.f32 %v747, %v199
        %v754 = vmul.f32 %v747, %v200
        %v755 = vmul.f32 %v747, %v201
        %v756 = vstv %s690
        %v757 = vadd.f32 %v748, %v756
        %v758 = vadd.f32 %v749, %v756
        %v759 = vadd.f32 %v750, %v756
        %v760 = vadd.f32 %v751, %v756
        %v761 = vadd.f32 %v752, %v756
        %v762 = vadd.f32 %v753, %v756
        %v763 = vadd.f32 %v754, %v756
        %v764 = vadd.f32 %v755, %v756
        %v765 = vstv %s688
        %v766 = vmul.f32 %v765, %v206
        %v767 = vadd.f32 %v757, %v766
        %v768 = vadd.f32 %v758, %v766
        %v769 = vadd.f32 %v759, %v766
        %v770 = vadd.f32 %v760, %v766
        %v771 = vadd.f32 %v761, %v766
        %v772 = vadd.f32 %v762, %v766
        %v773 = vadd.f32 %v763, %v766
        %v774 = vadd.f32 %v764, %v766
        %v775 = vmin.f32 %v711, %v739
        %v776 = vmin.f32 %v712, %v740
        %v777 = vmin.f32 %v713, %v741
        %v778 = vmin.f32 %v714, %v742
        %v779 = vmin.f32 %v715, %v743
        %v780 = vmin.f32 %v716, %v744
        %v781 = vmin.f32 %v717, %v745
        %v782 = vmin.f32 %v718, %v746
        %v783 = vmin.f32 %v775, %v767
        %v784 = vmin.f32 %v776, %v768
        %v785 = vmin.f32 %v777, %v769
        %v786 = vmin.f32 %v778, %v770
        %v787 = vmin.f32 %v779, %v771
        %v788 = vmin.f32 %v780, %v772
        %v789 = vmin.f32 %v781, %v773
        %v790 = vmin.f32 %v782, %v774
        %v791 = vmax.f32 %v711, %v739
        %v792 = vmax.f32 %v712, %v740
        %v793 = vmax.f32 %v713, %v741
        %v794 = vmax.f32 %v714, %v742
        %v795 = vmax.f32 %v715, %v743
        %v796 = vmax.f32 %v716, %v744
        %v797 = vmax.f32 %v717, %v745
        %v798 = vmax.f32 %v718, %v746
        %v799 = vmax.f32 %v791, %v767
        %v800 = vmax.f32 %v792, %v768
        %v801 = vmax.f32 %v793, %v769
        %v802 = vmax.f32 %v794, %v770
        %v803 = vmax.f32 %v795, %v771
        %v804 = vmax.f32 %v796, %v772
        %v805 = vmax.f32 %v797, %v773
        %v806 = vmax.f32 %v798, %v774
        %v807 = vmul.f32 %v783, %v799
        %v808 = vmul.f32 %v784, %v800
        %v809 = vmul.f32 %v785, %v801
        %v810 = vmul.f32 %v786, %v802
        %v811 = vmul.f32 %v787, %v803
        %v812 = vmul.f32 %v788, %v804
        %v813 = vmul.f32 %v789, %v805
        %v814 = vmul.f32 %v790, %v806
        %vm815 = vcmp.ge.f32.partialorder %v807, 0.0
        %vm816 = vcmp.ge.f32.partialorder %v808, 0.0
        %vm817 = vcmp.ge.f32.partialorder %v809, 0.0
        %vm818 = vcmp.ge.f32.partialorder %v810, 0.0
        %vm819 = vcmp.ge.f32.partialorder %v811, 0.0
        %vm820 = vcmp.ge.f32.partialorder %v812, 0.0
        %vm821 = vcmp.ge.f32.partialorder %v813, 0.0
        %vm822 = vcmp.ge.f32.partialorder %v814, 0.0
        %vm823 = vmor %vm665, %vm815
        %vm824 = vmor %vm666, %vm816
        %vm825 = vmor %vm667, %vm817
        %vm826 = vmor %vm668, %vm818
        %vm827 = vmor %vm669, %vm819
        %vm828 = vmor %vm670, %vm820
        %vm829 = vmor %vm671, %vm821
        %vm830 = vmor %vm672, %vm822
        %v831 = vsel %vm823, 1, 0
        %v832 = vsel %vm824, 1, 0
        %v833 = vsel %vm825, 1, 0
        %v834 = vsel %vm826, 1, 0
        %v835 = vsel %vm827, 1, 0
        %v836 = vsel %vm828, 1, 0
        %v837 = vsel %vm829, 1, 0
        %v838 = vsel %vm830, 1, 0
        %v839 = vcvt.s32.f32 %v831
        %v840 = vcvt.s32.f32 %v832
        %v841 = vcvt.s32.f32 %v833
        %v842 = vcvt.s32.f32 %v834
        %v843 = vcvt.s32.f32 %v835
        %v844 = vcvt.s32.f32 %v836
        %v845 = vcvt.s32.f32 %v837
        %v846 = vcvt.s32.f32 %v838
        %v847 = vadd.s32 %v161, 1
        %v848 = vcvt.s32.f32 %v847
        %v849 = vmul.f32 %v848, 2.0
        %v850 = vadd.f32 %v849, 1.0
        %v851 = vsub.f32 %v850, 128.0
        %v852 = vmul.f32 %v851, 0.0078125
        %v853 = vmul.f32 %v243, %v852
        %v854 = vadd.f32 %v235, %v853
        %v855 = vadd.f32 %v236, %v853
        %v856 = vadd.f32 %v237, %v853
        %v857 = vadd.f32 %v238, %v853
        %v858 = vadd.f32 %v239, %v853
        %v859 = vadd.f32 %v240, %v853
        %v860 = vadd.f32 %v241, %v853
        %v861 = vadd.f32 %v242, %v853
        %v862 = vmul.f32 %v271, %v852
        %v863 = vadd.f32 %v263, %v862
        %v864 = vadd.f32 %v264, %v862
        %v865 = vadd.f32 %v265, %v862
        %v866 = vadd.f32 %v266, %v862
        %v867 = vadd.f32 %v267, %v862
        %v868 = vadd.f32 %v268, %v862
        %v869 = vadd.f32 %v269, %v862
        %v870 = vadd.f32 %v270, %v862
        %v871 = vmul.f32 %v299, %v852
        %v872 = vadd.f32 %v291, %v871
        %v873 = vadd.f32 %v292, %v871
        %v874 = vadd.f32 %v293, %v871
        %v875 = vadd.f32 %v294, %v871
        %v876 = vadd.f32 %v295, %v871
        %v877 = vadd.f32 %v296, %v871
        %v878 = vadd.f32 %v297, %v871
        %v879 = vadd.f32 %v298, %v871
        %v880 = vmin.f32 %v854, %v863
        %v881 = vmin.f32 %v855, %v864
        %v882 = vmin.f32 %v856, %v865
        %v883 = vmin.f32 %v857, %v866
        %v884 = vmin.f32 %v858, %v867
        %v885 = vmin.f32 %v859, %v868
        %v886 = vmin.f32 %v860, %v869
        %v887 = vmin.f32 %v861, %v870
        %v888 = vmin.f32 %v880, %v872
        %v889 = vmin.f32 %v881, %v873
        %v890 = vmin.f32 %v882, %v874
        %v891 = vmin.f32 %v883, %v875
        %v892 = vmin.f32 %v884, %v876
        %v893 = vmin.f32 %v885, %v877
        %v894 = vmin.f32 %v886, %v878
        %v895 = vmin.f32 %v887, %v879
        %v896 = vmax.f32 %v854, %v863
        %v897 = vmax.f32 %v855, %v864
        %v898 = vmax.f32 %v856, %v865
        %v899 = vmax.f32 %v857, %v866
        %v900 = vmax.f32 %v858, %v867
        %v901 = vmax.f32 %v859, %v868
        %v902 = vmax.f32 %v860, %v869
        %v903 = vmax.f32 %v861, %v870
        %v904 = vmax.f32 %v896, %v872
        %v905 = vmax.f32 %v897, %v873
        %v906 = vmax.f32 %v898, %v874
        %v907 = vmax.f32 %v899, %v875
        %v908 = vmax.f32 %v900, %v876
        %v909 = vmax.f32 %v901, %v877
        %v910 = vmax.f32 %v902, %v878
        %v911 = vmax.f32 %v903, %v879
        %v912 = vmul.f32 %v888, %v904
        %v913 = vmul.f32 %v889, %v905
        %v914 = vmul.f32 %v890, %v906
        %v915 = vmul.f32 %v891, %v907
        %v916 = vmul.f32 %v892, %v908
        %v917 = vmul.f32 %v893, %v909
        %v918 = vmul.f32 %v894, %v910
        %v919 = vmul.f32 %v895, %v911
        %vm920 = vcmp.ge.f32.partialorder %v912, 0.0
        %vm921 = vcmp.ge.f32.partialorder %v913, 0.0
        %vm922 = vcmp.ge.f32.partialorder %v914, 0.0
        %vm923 = vcmp.ge.f32.partialorder %v915, 0.0
        %vm924 = vcmp.ge.f32.partialorder %v916, 0.0
        %vm925 = vcmp.ge.f32.partialorder %v917, 0.0
        %vm926 = vcmp.ge.f32.partialorder %v918, 0.0
        %vm927 = vcmp.ge.f32.partialorder %v919, 0.0
        %v928 = vmul.f32 %v393, %v852
        %v929 = vadd.f32 %v385, %v928
        %v930 = vadd.f32 %v386, %v928
        %v931 = vadd.f32 %v387, %v928
        %v932 = vadd.f32 %v388, %v928
        %v933 = vadd.f32 %v389, %v928
        %v934 = vadd.f32 %v390, %v928
        %v935 = vadd.f32 %v391, %v928
        %v936 = vadd.f32 %v392, %v928
        %v937 = vmul.f32 %v421, %v852
        %v938 = vadd.f32 %v413, %v937
        %v939 = vadd.f32 %v414, %v937
        %v940 = vadd.f32 %v415, %v937
        %v941 = vadd.f32 %v416, %v937
        %v942 = vadd.f32 %v417, %v937
        %v943 = vadd.f32 %v418, %v937
        %v944 = vadd.f32 %v419, %v937
        %v945 = vadd.f32 %v420, %v937
        %v946 = vmul.f32 %v449, %v852
        %v947 = vadd.f32 %v441, %v946
        %v948 = vadd.f32 %v442, %v946
        %v949 = vadd.f32 %v443, %v946
        %v950 = vadd.f32 %v444, %v946
        %v951 = vadd.f32 %v445, %v946
        %v952 = vadd.f32 %v446, %v946
        %v953 = vadd.f32 %v447, %v946
        %v954 = vadd.f32 %v448, %v946
        %v955 = vmin.f32 %v929, %v938
        %v956 = vmin.f32 %v930, %v939
        %v957 = vmin.f32 %v931, %v940
        %v958 = vmin.f32 %v932, %v941
        %v959 = vmin.f32 %v933, %v942
        %v960 = vmin.f32 %v934, %v943
        %v961 = vmin.f32 %v935, %v944
        %v962 = vmin.f32 %v936, %v945
        %v963 = vmin.f32 %v955, %v947
        %v964 = vmin.f32 %v956, %v948
        %v965 = vmin.f32 %v957, %v949
        %v966 = vmin.f32 %v958, %v950
        %v967 = vmin.f32 %v959, %v951
        %v968 = vmin.f32 %v960, %v952
        %v969 = vmin.f32 %v961, %v953
        %v970 = vmin.f32 %v962, %v954
        %v971 = vmax.f32 %v929, %v938
        %v972 = vmax.f32 %v930, %v939
        %v973 = vmax.f32 %v931, %v940
        %v974 = vmax.f32 %v932, %v941
        %v975 = vmax.f32 %v933, %v942
        %v976 = vmax.f32 %v934, %v943
        %v977 = vmax.f32 %v935, %v944
        %v978 = vmax.f32 %v936, %v945
        %v979 = vmax.f32 %v971, %v947
        %v980 = vmax.f32 %v972, %v948
        %v981 = vmax.f32 %v973, %v949
        %v982 = vmax.f32 %v974, %v950
        %v983 = vmax.f32 %v975, %v951
        %v984 = vmax.f32 %v976, %v952
        %v985 = vmax.f32 %v977, %v953
        %v986 = vmax.f32 %v978, %v954
        %v987 = vmul.f32 %v963, %v979
        %v988 = vmul.f32 %v964, %v980
        %v989 = vmul.f32 %v965, %v981
        %v990 = vmul.f32 %v966, %v982
        %v991 = vmul.f32 %v967, %v983
        %v992 = vmul.f32 %v968, %v984
        %v993 = vmul.f32 %v969, %v985
        %v994 = vmul.f32 %v970, %v986
        %vm995 = vcmp.ge.f32.partialorder %v987, 0.0
        %vm996 = vcmp.ge.f32.partialorder %v988, 0.0
        %vm997 = vcmp.ge.f32.partialorder %v989, 0.0
        %vm998 = vcmp.ge.f32.partialorder %v990, 0.0
        %vm999 = vcmp.ge.f32.partialorder %v991, 0.0
        %vm1000 = vcmp.ge.f32.partialorder %v992, 0.0
        %vm1001 = vcmp.ge.f32.partialorder %v993, 0.0
        %vm1002 = vcmp.ge.f32.partialorder %v994, 0.0
        %vm1003 = vmor %vm920, %vm995
        %vm1004 = vmor %vm921, %vm996
        %vm1005 = vmor %vm922, %vm997
        %vm1006 = vmor %vm923, %vm998
        %vm1007 = vmor %vm924, %vm999
        %vm1008 = vmor %vm925, %vm1000
        %vm1009 = vmor %vm926, %vm1001
        %vm1010 = vmor %vm927, %vm1002
        %v1011 = vmul.f32 %v551, %v852
        %v1012 = vadd.f32 %v543, %v1011
        %v1013 = vadd.f32 %v544, %v1011
        %v1014 = vadd.f32 %v545, %v1011
        %v1015 = vadd.f32 %v546, %v1011
        %v1016 = vadd.f32 %v547, %v1011
        %v1017 = vadd.f32 %v548, %v1011
        %v1018 = vadd.f32 %v549, %v1011
        %v1019 = vadd.f32 %v550, %v1011
        %v1020 = vmul.f32 %v579, %v852
        %v1021 = vadd.f32 %v571, %v1020
        %v1022 = vadd.f32 %v572, %v1020
        %v1023 = vadd.f32 %v573, %v1020
        %v1024 = vadd.f32 %v574, %v1020
        %v1025 = vadd.f32 %v575, %v1020
        %v1026 = vadd.f32 %v576, %v1020
        %v1027 = vadd.f32 %v577, %v1020
        %v1028 = vadd.f32 %v578, %v1020
        %v1029 = vmul.f32 %v607, %v852
        %v1030 = vadd.f32 %v599, %v1029
        %v1031 = vadd.f32 %v600, %v1029
        %v1032 = vadd.f32 %v601, %v1029
        %v1033 = vadd.f32 %v602, %v1029
        %v1034 = vadd.f32 %v603, %v1029
        %v1035 = vadd.f32 %v604, %v1029
        %v1036 = vadd.f32 %v605, %v1029
        %v1037 = vadd.f32 %v606, %v1029
        %v1038 = vmin.f32 %v1012, %v1021
        %v1039 = vmin.f32 %v1013, %v1022
        %v1040 = vmin.f32 %v1014, %v1023
        %v1041 = vmin.f32 %v1015, %v1024
        %v1042 = vmin.f32 %v1016, %v1025
        %v1043 = vmin.f32 %v1017, %v1026
        %v1044 = vmin.f32 %v1018, %v1027
        %v1045 = vmin.f32 %v1019, %v1028
        %v1046 = vmin.f32 %v1038, %v1030
        %v1047 = vmin.f32 %v1039, %v1031
        %v1048 = vmin.f32 %v1040, %v1032
        %v1049 = vmin.f32 %v1041, %v1033
        %v1050 = vmin.f32 %v1042, %v1034
        %v1051 = vmin.f32 %v1043, %v1035
        %v1052 = vmin.f32 %v1044, %v1036
        %v1053 = vmin.f32 %v1045, %v1037
        %v1054 = vmax.f32 %v1012, %v1021
        %v1055 = vmax.f32 %v1013, %v1022
        %v1056 = vmax.f32 %v1014, %v1023
        %v1057 = vmax.f32 %v1015, %v1024
        %v1058 = vmax.f32 %v1016, %v1025
        %v1059 = vmax.f32 %v1017, %v1026
        %v1060 = vmax.f32 %v1018, %v1027
        %v1061 = vmax.f32 %v1019, %v1028
        %v1062 = vmax.f32 %v1054, %v1030
        %v1063 = vmax.f32 %v1055, %v1031
        %v1064 = vmax.f32 %v1056, %v1032
        %v1065 = vmax.f32 %v1057, %v1033
        %v1066 = vmax.f32 %v1058, %v1034
        %v1067 = vmax.f32 %v1059, %v1035
        %v1068 = vmax.f32 %v1060, %v1036
        %v1069 = vmax.f32 %v1061, %v1037
        %v1070 = vmul.f32 %v1046, %v1062
        %v1071 = vmul.f32 %v1047, %v1063
        %v1072 = vmul.f32 %v1048, %v1064
        %v1073 = vmul.f32 %v1049, %v1065
        %v1074 = vmul.f32 %v1050, %v1066
        %v1075 = vmul.f32 %v1051, %v1067
        %v1076 = vmul.f32 %v1052, %v1068
        %v1077 = vmul.f32 %v1053, %v1069
        %vm1078 = vcmp.ge.f32.partialorder %v1070, 0.0
        %vm1079 = vcmp.ge.f32.partialorder %v1071, 0.0
        %vm1080 = vcmp.ge.f32.partialorder %v1072, 0.0
        %vm1081 = vcmp.ge.f32.partialorder %v1073, 0.0
        %vm1082 = vcmp.ge.f32.partialorder %v1074, 0.0
        %vm1083 = vcmp.ge.f32.partialorder %v1075, 0.0
        %vm1084 = vcmp.ge.f32.partialorder %v1076, 0.0
        %vm1085 = vcmp.ge.f32.partialorder %v1077, 0.0
        %vm1086 = vmor %vm1003, %vm1078
        %vm1087 = vmor %vm1004, %vm1079
        %vm1088 = vmor %vm1005, %vm1080
        %vm1089 = vmor %vm1006, %vm1081
        %vm1090 = vmor %vm1007, %vm1082
        %vm1091 = vmor %vm1008, %vm1083
        %vm1092 = vmor %vm1009, %vm1084
        %vm1093 = vmor %vm1010, %vm1085
        %v1094 = vmul.f32 %v709, %v852
        %v1095 = vadd.f32 %v701, %v1094
        %v1096 = vadd.f32 %v702, %v1094
        %v1097 = vadd.f32 %v703, %v1094
        %v1098 = vadd.f32 %v704, %v1094
        %v1099 = vadd.f32 %v705, %v1094
        %v1100 = vadd.f32 %v706, %v1094
        %v1101 = vadd.f32 %v707, %v1094
        %v1102 = vadd.f32 %v708, %v1094
        %v1103 = vmul.f32 %v737, %v852
        %v1104 = vadd.f32 %v729, %v1103
        %v1105 = vadd.f32 %v730, %v1103
        %v1106 = vadd.f32 %v731, %v1103
        %v1107 = vadd.f32 %v732, %v1103
        %v1108 = vadd.f32 %v733, %v1103
        %v1109 = vadd.f32 %v734, %v1103
        %v1110 = vadd.f32 %v735, %v1103
        %v1111 = vadd.f32 %v736, %v1103
        %v1112 = vmul.f32 %v765, %v852
        %v1113 = vadd.f32 %v757, %v1112
        %v1114 = vadd.f32 %v758, %v1112
        %v1115 = vadd.f32 %v759, %v1112
        %v1116 = vadd.f32 %v760, %v1112
        %v1117 = vadd.f32 %v761, %v1112
        %v1118 = vadd.f32 %v762, %v1112
        %v1119 = vadd.f32 %v763, %v1112
        %v1120 = vadd.f32 %v764, %v1112
        %v1121 = vmin.f32 %v1095, %v1104
        %v1122 = vmin.f32 %v1096, %v1105
        %v1123 = vmin.f32 %v1097, %v1106
        %v1124 = vmin.f32 %v1098, %v1107
        %v1125 = vmin.f32 %v1099, %v1108
        %v1126 = vmin.f32 %v1100, %v1109
        %v1127 = vmin.f32 %v1101, %v1110
        %v1128 = vmin.f32 %v1102, %v1111
        %v1129 = vmin.f32 %v1121, %v1113
        %v1130 = vmin.f32 %v1122, %v1114
        %v1131 = vmin.f32 %v1123, %v1115
        %v1132 = vmin.f32 %v1124, %v1116
        %v1133 = vmin.f32 %v1125, %v1117
        %v1134 = vmin.f32 %v1126, %v1118
        %v1135 = vmin.f32 %v1127, %v1119
        %v1136 = vmin.f32 %v1128, %v1120
        %v1137 = vmax.f32 %v1095, %v1104
        %v1138 = vmax.f32 %v1096, %v1105
        %v1139 = vmax.f32 %v1097, %v1106
        %v1140 = vmax.f32 %v1098, %v1107
        %v1141 = vmax.f32 %v1099, %v1108
        %v1142 = vmax.f32 %v1100, %v1109
        %v1143 = vmax.f32 %v1101, %v1110
        %v1144 = vmax.f32 %v1102, %v1111
        %v1145 = vmax.f32 %v1137, %v1113
        %v1146 = vmax.f32 %v1138, %v1114
        %v1147 = vmax.f32 %v1139, %v1115
        %v1148 = vmax.f32 %v1140, %v1116
        %v1149 = vmax.f32 %v1141, %v1117
        %v1150 = vmax.f32 %v1142, %v1118
        %v1151 = vmax.f32 %v1143, %v1119
        %v1152 = vmax.f32 %v1144, %v1120
        %v1153 = vmul.f32 %v1129, %v1145
        %v1154 = vmul.f32 %v1130, %v1146
        %v1155 = vmul.f32 %v1131, %v1147
        %v1156 = vmul.f32 %v1132, %v1148
        %v1157 = vmul.f32 %v1133, %v1149
        %v1158 = vmul.f32 %v1134, %v1150
        %v1159 = vmul.f32 %v1135, %v1151
        %v1160 = vmul.f32 %v1136, %v1152
        %vm1161 = vcmp.ge.f32.partialorder %v1153, 0.0
        %vm1162 = vcmp.ge.f32.partialorder %v1154, 0.0
        %vm1163 = vcmp.ge.f32.partialorder %v1155, 0.0
        %vm1164 = vcmp.ge.f32.partialorder %v1156, 0.0
        %vm1165 = vcmp.ge.f32.partialorder %v1157, 0.0
        %vm1166 = vcmp.ge.f32.partialorder %v1158, 0.0
        %vm1167 = vcmp.ge.f32.partialorder %v1159, 0.0
        %vm1168 = vcmp.ge.f32.partialorder %v1160, 0.0
        %vm1169 = vmor %vm1086, %vm1161
        %vm1170 = vmor %vm1087, %vm1162
        %vm1171 = vmor %vm1088, %vm1163
        %vm1172 = vmor %vm1089, %vm1164
        %vm1173 = vmor %vm1090, %vm1165
        %vm1174 = vmor %vm1091, %vm1166
        %vm1175 = vmor %vm1092, %vm1167
        %vm1176 = vmor %vm1093, %vm1168
        %v1177 = vsel %vm1169, 1, 0
        %v1178 = vsel %vm1170, 1, 0
        %v1179 = vsel %vm1171, 1, 0
        %v1180 = vsel %vm1172, 1, 0
        %v1181 = vsel %vm1173, 1, 0
        %v1182 = vsel %vm1174, 1, 0
        %v1183 = vsel %vm1175, 1, 0
        %v1184 = vsel %vm1176, 1, 0
        %v1185 = vcvt.s32.f32 %v1177
        %v1186 = vcvt.s32.f32 %v1178
        %v1187 = vcvt.s32.f32 %v1179
        %v1188 = vcvt.s32.f32 %v1180
        %v1189 = vcvt.s32.f32 %v1181
        %v1190 = vcvt.s32.f32 %v1182
        %v1191 = vcvt.s32.f32 %v1183
        %v1192 = vcvt.s32.f32 %v1184
        %v1193 = vadd.f32 %v839, %v1185
        %v1194 = vadd.f32 %v840, %v1186
        %v1195 = vadd.f32 %v841, %v1187
        %v1196 = vadd.f32 %v842, %v1188
        %v1197 = vadd.f32 %v843, %v1189
        %v1198 = vadd.f32 %v844, %v1190
        %v1199 = vadd.f32 %v845, %v1191
        %v1200 = vadd.f32 %v846, %v1192
        %v1201 = vadd.s32 %v145, 1
        %v1202 = vadd.s32 %v146, 1
        %v1203 = vadd.s32 %v147, 1
        %v1204 = vadd.s32 %v148, 1
        %v1205 = vadd.s32 %v149, 1
        %v1206 = vadd.s32 %v150, 1
        %v1207 = vadd.s32 %v151, 1
        %v1208 = vadd.s32 %v152, 1
        %v1209 = vsub.s32 127, %v1201
        %v1210 = vsub.s32 127, %v1202
        %v1211 = vsub.s32 127, %v1203
        %v1212 = vsub.s32 127, %v1204
        %v1213 = vsub.s32 127, %v1205
        %v1214 = vsub.s32 127, %v1206
        %v1215 = vsub.s32 127, %v1207
        %v1216 = vsub.s32 127, %v1208
        %v1217 = vcvt.s32.f32 %v1209
        %v1218 = vcvt.s32.f32 %v1210
        %v1219 = vcvt.s32.f32 %v1211
        %v1220 = vcvt.s32.f32 %v1212
        %v1221 = vcvt.s32.f32 %v1213
        %v1222 = vcvt.s32.f32 %v1214
        %v1223 = vcvt.s32.f32 %v1215
        %v1224 = vcvt.s32.f32 %v1216
        %v1225 = vmul.f32 %v1217, 2.0
        %v1226 = vmul.f32 %v1218, 2.0
        %v1227 = vmul.f32 %v1219, 2.0
        %v1228 = vmul.f32 %v1220, 2.0
        %v1229 = vmul.f32 %v1221, 2.0
        %v1230 = vmul.f32 %v1222, 2.0
        %v1231 = vmul.f32 %v1223, 2.0
        %v1232 = vmul.f32 %v1224, 2.0
        %v1233 = vadd.f32 %v1225, 1.0
        %v1234 = vadd.f32 %v1226, 1.0
        %v1235 = vadd.f32 %v1227, 1.0
        %v1236 = vadd.f32 %v1228, 1.0
        %v1237 = vadd.f32 %v1229, 1.0
        %v1238 = vadd.f32 %v1230, 1.0
        %v1239 = vadd.f32 %v1231, 1.0
        %v1240 = vadd.f32 %v1232, 1.0
        %v1241 = vsub.f32 %v1233, 128.0
        %v1242 = vsub.f32 %v1234, 128.0
        %v1243 = vsub.f32 %v1235, 128.0
        %v1244 = vsub.f32 %v1236, 128.0
        %v1245 = vsub.f32 %v1237, 128.0
        %v1246 = vsub.f32 %v1238, 128.0
        %v1247 = vsub.f32 %v1239, 128.0
        %v1248 = vsub.f32 %v1240, 128.0
        %v1249 = vmul.f32 %v1241, 0.0078125
        %v1250 = vmul.f32 %v1242, 0.0078125
        %v1251 = vmul.f32 %v1243, 0.0078125
        %v1252 = vmul.f32 %v1244, 0.0078125
        %v1253 = vmul.f32 %v1245, 0.0078125
        %v1254 = vmul.f32 %v1246, 0.0078125
        %v1255 = vmul.f32 %v1247, 0.0078125
        %v1256 = vmul.f32 %v1248, 0.0078125
        %v1257 = vmul.f32 %v225, %v1249
        %v1258 = vmul.f32 %v225, %v1250
        %v1259 = vmul.f32 %v225, %v1251
        %v1260 = vmul.f32 %v225, %v1252
        %v1261 = vmul.f32 %v225, %v1253
        %v1262 = vmul.f32 %v225, %v1254
        %v1263 = vmul.f32 %v225, %v1255
        %v1264 = vmul.f32 %v225, %v1256
        %v1265 = vadd.f32 %v1257, %v234
        %v1266 = vadd.f32 %v1258, %v234
        %v1267 = vadd.f32 %v1259, %v234
        %v1268 = vadd.f32 %v1260, %v234
        %v1269 = vadd.f32 %v1261, %v234
        %v1270 = vadd.f32 %v1262, %v234
        %v1271 = vadd.f32 %v1263, %v234
        %v1272 = vadd.f32 %v1264, %v234
        %v1273 = vadd.f32 %v1265, %v244
        %v1274 = vadd.f32 %v1266, %v244
        %v1275 = vadd.f32 %v1267, %v244
        %v1276 = vadd.f32 %v1268, %v244
        %v1277 = vadd.f32 %v1269, %v244
        %v1278 = vadd.f32 %v1270, %v244
        %v1279 = vadd.f32 %v1271, %v244
        %v1280 = vadd.f32 %v1272, %v244
        %v1281 = vmul.f32 %v253, %v1249
        %v1282 = vmul.f32 %v253, %v1250
        %v1283 = vmul.f32 %v253, %v1251
        %v1284 = vmul.f32 %v253, %v1252
        %v1285 = vmul.f32 %v253, %v1253
        %v1286 = vmul.f32 %v253, %v1254
        %v1287 = vmul.f32 %v253, %v1255
        %v1288 = vmul.f32 %v253, %v1256
        %v1289 = vadd.f32 %v1281, %v262
        %v1290 = vadd.f32 %v1282, %v262
        %v1291 = vadd.f32 %v1283, %v262
        %v1292 = vadd.f32 %v1284, %v262
        %v1293 = vadd.f32 %v1285, %v262
        %v1294 = vadd.f32 %v1286, %v262
        %v1295 = vadd.f32 %v1287, %v262
        %v1296 = vadd.f32 %v1288, %v262
        %v1297 = vadd.f32 %v1289, %v272
        %v1298 = vadd.f32 %v1290, %v272
        %v1299 = vadd.f32 %v1291, %v272
        %v1300 = vadd.f32 %v1292, %v272
        %v1301 = vadd.f32 %v1293, %v272
        %v1302 = vadd.f32 %v1294, %v272
        %v1303 = vadd.f32 %v1295, %v272
        %v1304 = vadd.f32 %v1296, %v272
        %v1305 = vmul.f32 %v281, %v1249
        %v1306 = vmul.f32 %v281, %v1250
        %v1307 = vmul.f32 %v281, %v1251
        %v1308 = vmul.f32 %v281, %v1252
        %v1309 = vmul.f32 %v281, %v1253
        %v1310 = vmul.f32 %v281, %v1254
        %v1311 = vmul.f32 %v281, %v1255
        %v1312 = vmul.f32 %v281, %v1256
        %v1313 = vadd.f32 %v1305, %v290
        %v1314 = vadd.f32 %v1306, %v290
        %v1315 = vadd.f32 %v1307, %v290
        %v1316 = vadd.f32 %v1308, %v290
        %v1317 = vadd.f32 %v1309, %v290
        %v1318 = vadd.f32 %v1310, %v290
        %v1319 = vadd.f32 %v1311, %v290
        %v1320 = vadd.f32 %v1312, %v290
        %v1321 = vadd.f32 %v1313, %v300
        %v1322 = vadd.f32 %v1314, %v300
        %v1323 = vadd.f32 %v1315, %v300
        %v1324 = vadd.f32 %v1316, %v300
        %v1325 = vadd.f32 %v1317, %v300
        %v1326 = vadd.f32 %v1318, %v300
        %v1327 = vadd.f32 %v1319, %v300
        %v1328 = vadd.f32 %v1320, %v300
        %v1329 = vmin.f32 %v1273, %v1297
        %v1330 = vmin.f32 %v1274, %v1298
        %v1331 = vmin.f32 %v1275, %v1299
        %v1332 = vmin.f32 %v1276, %v1300
        %v1333 = vmin.f32 %v1277, %v1301
        %v1334 = vmin.f32 %v1278, %v1302
        %v1335 = vmin.f32 %v1279, %v1303
        %v1336 = vmin.f32 %v1280, %v1304
        %v1337 = vmin.f32 %v1329, %v1321
        %v1338 = vmin.f32 %v1330, %v1322
        %v1339 = vmin.f32 %v1331, %v1323
        %v1340 = vmin.f32 %v1332, %v1324
        %v1341 = vmin.f32 %v1333, %v1325
        %v1342 = vmin.f32 %v1334, %v1326
        %v1343 = vmin.f32 %v1335, %v1327
        %v1344 = vmin.f32 %v1336, %v1328
        %v1345 = vmax.f32 %v1273, %v1297
        %v1346 = vmax.f32 %v1274, %v1298
        %v1347 = vmax.f32 %v1275, %v1299
        %v1348 = vmax.f32 %v1276, %v1300
        %v1349 = vmax.f32 %v1277, %v1301
        %v1350 = vmax.f32 %v1278, %v1302
        %v1351 = vmax.f32 %v1279, %v1303
        %v1352 = vmax.f32 %v1280, %v1304
        %v1353 = vmax.f32 %v1345, %v1321
        %v1354 = vmax.f32 %v1346, %v1322
        %v1355 = vmax.f32 %v1347, %v1323
        %v1356 = vmax.f32 %v1348, %v1324
        %v1357 = vmax.f32 %v1349, %v1325
        %v1358 = vmax.f32 %v1350, %v1326
        %v1359 = vmax.f32 %v1351, %v1327
        %v1360 = vmax.f32 %v1352, %v1328
        %v1361 = vmul.f32 %v1337, %v1353
        %v1362 = vmul.f32 %v1338, %v1354
        %v1363 = vmul.f32 %v1339, %v1355
        %v1364 = vmul.f32 %v1340, %v1356
        %v1365 = vmul.f32 %v1341, %v1357
        %v1366 = vmul.f32 %v1342, %v1358
        %v1367 = vmul.f32 %v1343, %v1359
        %v1368 = vmul.f32 %v1344, %v1360
        %vm1369 = vcmp.ge.f32.partialorder %v1361, 0.0
        %vm1370 = vcmp.ge.f32.partialorder %v1362, 0.0
        %vm1371 = vcmp.ge.f32.partialorder %v1363, 0.0
        %vm1372 = vcmp.ge.f32.partialorder %v1364, 0.0
        %vm1373 = vcmp.ge.f32.partialorder %v1365, 0.0
        %vm1374 = vcmp.ge.f32.partialorder %v1366, 0.0
        %vm1375 = vcmp.ge.f32.partialorder %v1367, 0.0
        %vm1376 = vcmp.ge.f32.partialorder %v1368, 0.0
        %v1377 = vmul.f32 %v375, %v1249
        %v1378 = vmul.f32 %v375, %v1250
        %v1379 = vmul.f32 %v375, %v1251
        %v1380 = vmul.f32 %v375, %v1252
        %v1381 = vmul.f32 %v375, %v1253
        %v1382 = vmul.f32 %v375, %v1254
        %v1383 = vmul.f32 %v375, %v1255
        %v1384 = vmul.f32 %v375, %v1256
        %v1385 = vadd.f32 %v1377, %v384
        %v1386 = vadd.f32 %v1378, %v384
        %v1387 = vadd.f32 %v1379, %v384
        %v1388 = vadd.f32 %v1380, %v384
        %v1389 = vadd.f32 %v1381, %v384
        %v1390 = vadd.f32 %v1382, %v384
        %v1391 = vadd.f32 %v1383, %v384
        %v1392 = vadd.f32 %v1384, %v384
        %v1393 = vadd.f32 %v1385, %v394
        %v1394 = vadd.f32 %v1386, %v394
        %v1395 = vadd.f32 %v1387, %v394
        %v1396 = vadd.f32 %v1388, %v394
        %v1397 = vadd.f32 %v1389, %v394
        %v1398 = vadd.f32 %v1390, %v394
        %v1399 = vadd.f32 %v1391, %v394
        %v1400 = vadd.f32 %v1392, %v394
        %v1401 = vmul.f32 %v403, %v1249
        %v1402 = vmul.f32 %v403, %v1250
        %v1403 = vmul.f32 %v403, %v1251
        %v1404 = vmul.f32 %v403, %v1252
        %v1405 = vmul.f32 %v403, %v1253
        %v1406 = vmul.f32 %v403, %v1254
        %v1407 = vmul.f32 %v403, %v1255
        %v1408 = vmul.f32 %v403, %v1256
        %v1409 = vadd.f32 %v1401, %v412
        %v1410 = vadd.f32 %v1402, %v412
        %v1411 = vadd.f32 %v1403, %v412
        %v1412 = vadd.f32 %v1404, %v412
        %v1413 = vadd.f32 %v1405, %v412
        %v1414 = vadd.f32 %v1406, %v412
        %v1415 = vadd.f32 %v1407, %v412
        %v1416 = vadd.f32 %v1408, %v412
        %v1417 = vadd.f32 %v1409, %v422
        %v1418 = vadd.f32 %v1410, %v422
        %v1419 = vadd.f32 %v1411, %v422
        %v1420 = vadd.f32 %v1412, %v422
        %v1421 = vadd.f32 %v1413, %v422
        %v1422 = vadd.f32 %v1414, %v422
        %v1423 = vadd.f32 %v1415, %v422
        %v1424 = vadd.f32 %v1416, %v422
        %v1425 = vmul.f32 %v431, %v1249
        %v1426 = vmul.f32 %v431, %v1250
        %v1427 = vmul.f32 %v431, %v1251
        %v1428 = vmul.f32 %v431, %v1252
        %v1429 = vmul.f32 %v431, %v1253
        %v1430 = vmul.f32 %v431, %v1254
        %v1431 = vmul.f32 %v431, %v1255
        %v1432 = vmul.f32 %v431, %v1256
        %v1433 = vadd.f32 %v1425, %v440
        %v1434 = vadd.f32 %v1426, %v440
        %v1435 = vadd.f32 %v1427, %v440
        %v1436 = vadd.f32 %v1428, %v440
        %v1437 = vadd.f32 %v1429, %v440
        %v1438 = vadd.f32 %v1430, %v440
        %v1439 = vadd.f32 %v1431, %v440
        %v1440 = vadd.f32 %v1432, %v440
        %v1441 = vadd.f32 %v1433, %v450
        %v1442 = vadd.f32 %v1434, %v450
        %v1443 = vadd.f32 %v1435, %v450
        %v1444 = vadd.f32 %v1436, %v450
        %v1445 = vadd.f32 %v1437, %v450
        %v1446 = vadd.f32 %v1438, %v450
        %v1447 = vadd.f32 %v1439, %v450
        %v1448 = vadd.f32 %v1440, %v450
        %v1449 = vmin.f32 %v1393, %v1417
        %v1450 = vmin.f32 %v1394, %v1418
        %v1451 = vmin.f32 %v1395, %v1419
        %v1452 = vmin.f32 %v1396, %v1420
        %v1453 = vmin.f32 %v1397, %v1421
        %v1454 = vmin.f32 %v1398, %v1422
        %v1455 = vmin.f32 %v1399, %v1423
        %v1456 = vmin.f32 %v1400, %v1424
        %v1457 = vmin.f32 %v1449, %v1441
        %v1458 = vmin.f32 %v1450, %v1442
        %v1459 = vmin.f32 %v1451, %v1443
        %v1460 = vmin.f32 %v1452, %v1444
        %v1461 = vmin.f32 %v1453, %v1445
        %v1462 = vmin.f32 %v1454, %v1446
        %v1463 = vmin.f32 %v1455, %v1447
        %v1464 = vmin.f32 %v1456, %v1448
        %v1465 = vmax.f32 %v1393, %v1417
        %v1466 = vmax.f32 %v1394, %v1418
        %v1467 = vmax.f32 %v1395, %v1419
        %v1468 = vmax.f32 %v1396, %v1420
        %v1469 = vmax.f32 %v1397, %v1421
        %v1470 = vmax.f32 %v1398, %v1422
        %v1471 = vmax.f32 %v1399, %v1423
        %v1472 = vmax.f32 %v1400, %v1424
        %v1473 = vmax.f32 %v1465, %v1441
        %v1474 = vmax.f32 %v1466, %v1442
        %v1475 = vmax.f32 %v1467, %v1443
        %v1476 = vmax.f32 %v1468, %v1444
        %v1477 = vmax.f32 %v1469, %v1445
        %v1478 = vmax.f32 %v1470, %v1446
        %v1479 = vmax.f32 %v1471, %v1447
        %v1480 = vmax.f32 %v1472, %v1448
        %v1481 = vmul.f32 %v1457, %v1473
        %v1482 = vmul.f32 %v1458, %v1474
        %v1483 = vmul.f32 %v1459, %v1475
        %v1484 = vmul.f32 %v1460, %v1476
        %v1485 = vmul.f32 %v1461, %v1477
        %v1486 = vmul.f32 %v1462, %v1478
        %v1487 = vmul.f32 %v1463, %v1479
        %v1488 = vmul.f32 %v1464, %v1480
        %vm1489 = vcmp.ge.f32.partialorder %v1481, 0.0
        %vm1490 = vcmp.ge.f32.partialorder %v1482, 0.0
        %vm1491 = vcmp.ge.f32.partialorder %v1483, 0.0
        %vm1492 = vcmp.ge.f32.partialorder %v1484, 0.0
        %vm1493 = vcmp.ge.f32.partialorder %v1485, 0.0
        %vm1494 = vcmp.ge.f32.partialorder %v1486, 0.0
        %vm1495 = vcmp.ge.f32.partialorder %v1487, 0.0
        %vm1496 = vcmp.ge.f32.partialorder %v1488, 0.0
        %vm1497 = vmor %vm1369, %vm1489
        %vm1498 = vmor %vm1370, %vm1490
        %vm1499 = vmor %vm1371, %vm1491
        %vm1500 = vmor %vm1372, %vm1492
        %vm1501 = vmor %vm1373, %vm1493
        %vm1502 = vmor %vm1374, %vm1494
        %vm1503 = vmor %vm1375, %vm1495
        %vm1504 = vmor %vm1376, %vm1496
        %v1505 = vmul.f32 %v533, %v1249
        %v1506 = vmul.f32 %v533, %v1250
        %v1507 = vmul.f32 %v533, %v1251
        %v1508 = vmul.f32 %v533, %v1252
        %v1509 = vmul.f32 %v533, %v1253
        %v1510 = vmul.f32 %v533, %v1254
        %v1511 = vmul.f32 %v533, %v1255
        %v1512 = vmul.f32 %v533, %v1256
        %v1513 = vadd.f32 %v1505, %v542
        %v1514 = vadd.f32 %v1506, %v542
        %v1515 = vadd.f32 %v1507, %v542
        %v1516 = vadd.f32 %v1508, %v542
        %v1517 = vadd.f32 %v1509, %v542
        %v1518 = vadd.f32 %v1510, %v542
        %v1519 = vadd.f32 %v1511, %v542
        %v1520 = vadd.f32 %v1512, %v542
        %v1521 = vadd.f32 %v1513, %v552
        %v1522 = vadd.f32 %v1514, %v552
        %v1523 = vadd.f32 %v1515, %v552
        %v1524 = vadd.f32 %v1516, %v552
        %v1525 = vadd.f32 %v1517, %v552
        %v1526 = vadd.f32 %v1518, %v552
        %v1527 = vadd.f32 %v1519, %v552
        %v1528 = vadd.f32 %v1520, %v552
        %v1529 = vmul.f32 %v561, %v1249
        %v1530 = vmul.f32 %v561, %v1250
        %v1531 = vmul.f32 %v561, %v1251
        %v1532 = vmul.f32 %v561, %v1252
        %v1533 = vmul.f32 %v561, %v1253
        %v1534 = vmul.f32 %v561, %v1254
        %v1535 = vmul.f32 %v561, %v1255
        %v1536 = vmul.f32 %v561, %v1256
        %v1537 = vadd.f32 %v1529, %v570
        %v1538 = vadd.f32 %v1530, %v570
        %v1539 = vadd.f32 %v1531, %v570
        %v1540 = vadd.f32 %v1532, %v570
        %v1541 = vadd.f32 %v1533, %v570
        %v1542 = vadd.f32 %v1534, %v570
        %v1543 = vadd.f32 %v1535, %v570
        %v1544 = vadd.f32 %v1536, %v570
        %v1545 = vadd.f32 %v1537, %v580
        %v1546 = vadd.f32 %v1538, %v580
        %v1547 = vadd.f32 %v1539, %v580
        %v1548 = vadd.f32 %v1540, %v580
        %v1549 = vadd.f32 %v1541, %v580
        %v1550 = vadd.f32 %v1542, %v580
        %v1551 = vadd.f32 %v1543, %v580
        %v1552 = vadd.f32 %v1544, %v580
        %v1553 = vmul.f32 %v589, %v1249
        %v1554 = vmul.f32 %v589, %v1250
        %v1555 = vmul.f32 %v589, %v1251
        %v1556 = vmul.f32 %v589, %v1252
        %v1557 = vmul.f32 %v589, %v1253
        %v1558 = vmul.f32 %v589, %v1254
        %v1559 = vmul.f32 %v589, %v1255
        %v1560 = vmul.f32 %v589, %v1256
        %v1561 = vadd.f32 %v1553, %v598
        %v1562 = vadd.f32 %v1554, %v598
        %v1563 = vadd.f32 %v1555, %v598
        %v1564 = vadd.f32 %v1556, %v598
        %v1565 = vadd.f32 %v1557, %v598
        %v1566 = vadd.f32 %v1558, %v598
        %v1567 = vadd.f32 %v1559, %v598
        %v1568 = vadd.f32 %v1560, %v598
        %v1569 = vadd.f32 %v1561, %v608
        %v1570 = vadd.f32 %v1562, %v608
        %v1571 = vadd.f32 %v1563, %v608
        %v1572 = vadd.f32 %v1564, %v608
        %v1573 = vadd.f32 %v1565, %v608
        %v1574 = vadd.f32 %v1566, %v608
        %v1575 = vadd.f32 %v1567, %v608
        %v1576 = vadd.f32 %v1568, %v608
        %v1577 = vmin.f32 %v1521, %v1545
        %v1578 = vmin.f32 %v1522, %v1546
        %v1579 = vmin.f32 %v1523, %v1547
        %v1580 = vmin.f32 %v1524, %v1548
        %v1581 = vmin.f32 %v1525, %v1549
        %v1582 = vmin.f32 %v1526, %v1550
        %v1583 = vmin.f32 %v1527, %v1551
        %v1584 = vmin.f32 %v1528, %v1552
        %v1585 = vmin.f32 %v1577, %v1569
        %v1586 = vmin.f32 %v1578, %v1570
        %v1587 = vmin.f32 %v1579, %v1571
        %v1588 = vmin.f32 %v1580, %v1572
        %v1589 = vmin.f32 %v1581, %v1573
        %v1590 = vmin.f32 %v1582, %v1574
        %v1591 = vmin.f32 %v1583, %v1575
        %v1592 = vmin.f32 %v1584, %v1576
        %v1593 = vmax.f32 %v1521, %v1545
        %v1594 = vmax.f32 %v1522, %v1546
        %v1595 = vmax.f32 %v1523, %v1547
        %v1596 = vmax.f32 %v1524, %v1548
        %v1597 = vmax.f32 %v1525, %v1549
        %v1598 = vmax.f32 %v1526, %v1550
        %v1599 = vmax.f32 %v1527, %v1551
        %v1600 = vmax.f32 %v1528, %v1552
        %v1601 = vmax.f32 %v1593, %v1569
        %v1602 = vmax.f32 %v1594, %v1570
        %v1603 = vmax.f32 %v1595, %v1571
        %v1604 = vmax.f32 %v1596, %v1572
        %v1605 = vmax.f32 %v1597, %v1573
        %v1606 = vmax.f32 %v1598, %v1574
        %v1607 = vmax.f32 %v1599, %v1575
        %v1608 = vmax.f32 %v1600, %v1576
        %v1609 = vmul.f32 %v1585, %v1601
        %v1610 = vmul.f32 %v1586, %v1602
        %v1611 = vmul.f32 %v1587, %v1603
        %v1612 = vmul.f32 %v1588, %v1604
        %v1613 = vmul.f32 %v1589, %v1605
        %v1614 = vmul.f32 %v1590, %v1606
        %v1615 = vmul.f32 %v1591, %v1607
        %v1616 = vmul.f32 %v1592, %v1608
        %vm1617 = vcmp.ge.f32.partialorder %v1609, 0.0
        %vm1618 = vcmp.ge.f32.partialorder %v1610, 0.0
        %vm1619 = vcmp.ge.f32.partialorder %v1611, 0.0
        %vm1620 = vcmp.ge.f32.partialorder %v1612, 0.0
        %vm1621 = vcmp.ge.f32.partialorder %v1613, 0.0
        %vm1622 = vcmp.ge.f32.partialorder %v1614, 0.0
        %vm1623 = vcmp.ge.f32.partialorder %v1615, 0.0
        %vm1624 = vcmp.ge.f32.partialorder %v1616, 0.0
        %vm1625 = vmor %vm1497, %vm1617
        %vm1626 = vmor %vm1498, %vm1618
        %vm1627 = vmor %vm1499, %vm1619
        %vm1628 = vmor %vm1500, %vm1620
        %vm1629 = vmor %vm1501, %vm1621
        %vm1630 = vmor %vm1502, %vm1622
        %vm1631 = vmor %vm1503, %vm1623
        %vm1632 = vmor %vm1504, %vm1624
        %v1633 = vmul.f32 %v691, %v1249
        %v1634 = vmul.f32 %v691, %v1250
        %v1635 = vmul.f32 %v691, %v1251
        %v1636 = vmul.f32 %v691, %v1252
        %v1637 = vmul.f32 %v691, %v1253
        %v1638 = vmul.f32 %v691, %v1254
        %v1639 = vmul.f32 %v691, %v1255
        %v1640 = vmul.f32 %v691, %v1256
        %v1641 = vadd.f32 %v1633, %v700
        %v1642 = vadd.f32 %v1634, %v700
        %v1643 = vadd.f32 %v1635, %v700
        %v1644 = vadd.f32 %v1636, %v700
        %v1645 = vadd.f32 %v1637, %v700
        %v1646 = vadd.f32 %v1638, %v700
        %v1647 = vadd.f32 %v1639, %v700
        %v1648 = vadd.f32 %v1640, %v700
        %v1649 = vadd.f32 %v1641, %v710
        %v1650 = vadd.f32 %v1642, %v710
        %v1651 = vadd.f32 %v1643, %v710
        %v1652 = vadd.f32 %v1644, %v710
        %v1653 = vadd.f32 %v1645, %v710
        %v1654 = vadd.f32 %v1646, %v710
        %v1655 = vadd.f32 %v1647, %v710
        %v1656 = vadd.f32 %v1648, %v710
        %v1657 = vmul.f32 %v719, %v1249
        %v1658 = vmul.f32 %v719, %v1250
        %v1659 = vmul.f32 %v719, %v1251
        %v1660 = vmul.f32 %v719, %v1252
        %v1661 = vmul.f32 %v719, %v1253
        %v1662 = vmul.f32 %v719, %v1254
        %v1663 = vmul.f32 %v719, %v1255
        %v1664 = vmul.f32 %v719, %v1256
        %v1665 = vadd.f32 %v1657, %v728
        %v1666 = vadd.f32 %v1658, %v728
        %v1667 = vadd.f32 %v1659, %v728
        %v1668 = vadd.f32 %v1660, %v728
        %v1669 = vadd.f32 %v1661, %v728
        %v1670 = vadd.f32 %v1662, %v728
        %v1671 = vadd.f32 %v1663, %v728
        %v1672 = vadd.f32 %v1664, %v728
        %v1673 = vadd.f32 %v1665, %v738
        %v1674 = vadd.f32 %v1666, %v738
        %v1675 = vadd.f32 %v1667, %v738
        %v1676 = vadd.f32 %v1668, %v738
        %v1677 = vadd.f32 %v1669, %v738
        %v1678 = vadd.f32 %v1670, %v738
        %v1679 = vadd.f32 %v1671, %v738
        %v1680 = vadd.f32 %v1672, %v738
        %v1681 = vmul.f32 %v747, %v1249
        %v1682 = vmul.f32 %v747, %v1250
        %v1683 = vmul.f32 %v747, %v1251
        %v1684 = vmul.f32 %v747, %v1252
        %v1685 = vmul.f32 %v747, %v1253
        %v1686 = vmul.f32 %v747, %v1254
        %v1687 = vmul.f32 %v747, %v1255
        %v1688 = vmul.f32 %v747, %v1256
        %v1689 = vadd.f32 %v1681, %v756
        %v1690 = vadd.f32 %v1682, %v756
        %v1691 = vadd.f32 %v1683, %v756
        %v1692 = vadd.f32 %v1684, %v756
        %v1693 = vadd.f32 %v1685, %v756
        %v1694 = vadd.f32 %v1686, %v756
        %v1695 = vadd.f32 %v1687, %v756
        %v1696 = vadd.f32 %v1688, %v756
        %v1697 = vadd.f32 %v1689, %v766
        %v1698 = vadd.f32 %v1690, %v766
        %v1699 = vadd.f32 %v1691, %v766
        %v1700 = vadd.f32 %v1692, %v766
        %v1701 = vadd.f32 %v1693, %v766
        %v1702 = vadd.f32 %v1694, %v766
        %v1703 = vadd.f32 %v1695, %v766
        %v1704 = vadd.f32 %v1696, %v766
        %v1705 = vmin.f32 %v1649, %v1673
        %v1706 = vmin.f32 %v1650, %v1674
        %v1707 = vmin.f32 %v1651, %v1675
        %v1708 = vmin.f32 %v1652, %v1676
        %v1709 = vmin.f32 %v1653, %v1677
        %v1710 = vmin.f32 %v1654, %v1678
        %v1711 = vmin.f32 %v1655, %v1679
        %v1712 = vmin.f32 %v1656, %v1680
        %v1713 = vmin.f32 %v1705, %v1697
        %v1714 = vmin.f32 %v1706, %v1698
        %v1715 = vmin.f32 %v1707, %v1699
        %v1716 = vmin.f32 %v1708, %v1700
        %v1717 = vmin.f32 %v1709, %v1701
        %v1718 = vmin.f32 %v1710, %v1702
        %v1719 = vmin.f32 %v1711, %v1703
        %v1720 = vmin.f32 %v1712, %v1704
        %v1721 = vmax.f32 %v1649, %v1673
        %v1722 = vmax.f32 %v1650, %v1674
        %v1723 = vmax.f32 %v1651, %v1675
        %v1724 = vmax.f32 %v1652, %v1676
        %v1725 = vmax.f32 %v1653, %v1677
        %v1726 = vmax.f32 %v1654, %v1678
        %v1727 = vmax.f32 %v1655, %v1679
        %v1728 = vmax.f32 %v1656, %v1680
        %v1729 = vmax.f32 %v1721, %v1697
        %v1730 = vmax.f32 %v1722, %v1698
        %v1731 = vmax.f32 %v1723, %v1699
        %v1732 = vmax.f32 %v1724, %v1700
        %v1733 = vmax.f32 %v1725, %v1701
        %v1734 = vmax.f32 %v1726, %v1702
        %v1735 = vmax.f32 %v1727, %v1703
        %v1736 = vmax.f32 %v1728, %v1704
        %v1737 = vmul.f32 %v1713, %v1729
        %v1738 = vmul.f32 %v1714, %v1730
        %v1739 = vmul.f32 %v1715, %v1731
        %v1740 = vmul.f32 %v1716, %v1732
        %v1741 = vmul.f32 %v1717, %v1733
        %v1742 = vmul.f32 %v1718, %v1734
        %v1743 = vmul.f32 %v1719, %v1735
        %v1744 = vmul.f32 %v1720, %v1736
        %vm1745 = vcmp.ge.f32.partialorder %v1737, 0.0
        %vm1746 = vcmp.ge.f32.partialorder %v1738, 0.0
        %vm1747 = vcmp.ge.f32.partialorder %v1739, 0.0
        %vm1748 = vcmp.ge.f32.partialorder %v1740, 0.0
        %vm1749 = vcmp.ge.f32.partialorder %v1741, 0.0
        %vm1750 = vcmp.ge.f32.partialorder %v1742, 0.0
        %vm1751 = vcmp.ge.f32.partialorder %v1743, 0.0
        %vm1752 = vcmp.ge.f32.partialorder %v1744, 0.0
        %vm1753 = vmor %vm1625, %vm1745
        %vm1754 = vmor %vm1626, %vm1746
        %vm1755 = vmor %vm1627, %vm1747
        %vm1756 = vmor %vm1628, %vm1748
        %vm1757 = vmor %vm1629, %vm1749
        %vm1758 = vmor %vm1630, %vm1750
        %vm1759 = vmor %vm1631, %vm1751
        %vm1760 = vmor %vm1632, %vm1752
        %v1761 = vsel %vm1753, 1, 0
        %v1762 = vsel %vm1754, 1, 0
        %v1763 = vsel %vm1755, 1, 0
        %v1764 = vsel %vm1756, 1, 0
        %v1765 = vsel %vm1757, 1, 0
        %v1766 = vsel %vm1758, 1, 0
        %v1767 = vsel %vm1759, 1, 0
        %v1768 = vsel %vm1760, 1, 0
        %v1769 = vcvt.s32.f32 %v1761
        %v1770 = vcvt.s32.f32 %v1762
        %v1771 = vcvt.s32.f32 %v1763
        %v1772 = vcvt.s32.f32 %v1764
        %v1773 = vcvt.s32.f32 %v1765
        %v1774 = vcvt.s32.f32 %v1766
        %v1775 = vcvt.s32.f32 %v1767
        %v1776 = vcvt.s32.f32 %v1768
        %v1777 = vadd.f32 %v1193, %v1769
        %v1778 = vadd.f32 %v1194, %v1770
        %v1779 = vadd.f32 %v1195, %v1771
        %v1780 = vadd.f32 %v1196, %v1772
        %v1781 = vadd.f32 %v1197, %v1773
        %v1782 = vadd.f32 %v1198, %v1774
        %v1783 = vadd.f32 %v1199, %v1775
        %v1784 = vadd.f32 %v1200, %v1776
        %v1785 = vadd.f32 %v1265, %v853
        %v1786 = vadd.f32 %v1266, %v853
        %v1787 = vadd.f32 %v1267, %v853
        %v1788 = vadd.f32 %v1268, %v853
        %v1789 = vadd.f32 %v1269, %v853
        %v1790 = vadd.f32 %v1270, %v853
        %v1791 = vadd.f32 %v1271, %v853
        %v1792 = vadd.f32 %v1272, %v853
        %v1793 = vadd.f32 %v1289, %v862
        %v1794 = vadd.f32 %v1290, %v862
        %v1795 = vadd.f32 %v1291, %v862
        %v1796 = vadd.f32 %v1292, %v862
        %v1797 = vadd.f32 %v1293, %v862
        %v1798 = vadd.f32 %v1294, %v862
        %v1799 = vadd.f32 %v1295, %v862
        %v1800 = vadd.f32 %v1296, %v862
        %v1801 = vadd.f32 %v1313, %v871
        %v1802 = vadd.f32 %v1314, %v871
        %v1803 = vadd.f32 %v1315, %v871
        %v1804 = vadd.f32 %v1316, %v871
        %v1805 = vadd.f32 %v1317, %v871
        %v1806 = vadd.f32 %v1318, %v871
        %v1807 = vadd.f32 %v1319, %v871
        %v1808 = vadd.f32 %v1320, %v871
        %v1809 = vmin.f32 %v1785, %v1793
        %v1810 = vmin.f32 %v1786, %v1794
        %v1811 = vmin.f32 %v1787, %v1795
        %v1812 = vmin.f32 %v1788, %v1796
        %v1813 = vmin.f32 %v1789, %v1797
        %v1814 = vmin.f32 %v1790, %v1798
        %v1815 = vmin.f32 %v1791, %v1799
        %v1816 = vmin.f32 %v1792, %v1800
        %v1817 = vmin.f32 %v1809, %v1801
        %v1818 = vmin.f32 %v1810, %v1802
        %v1819 = vmin.f32 %v1811, %v1803
        %v1820 = vmin.f32 %v1812, %v1804
        %v1821 = vmin.f32 %v1813, %v1805
        %v1822 = vmin.f32 %v1814, %v1806
        %v1823 = vmin.f32 %v1815, %v1807
        %v1824 = vmin.f32 %v1816, %v1808
        %v1825 = vmax.f32 %v1785, %v1793
        %v1826 = vmax.f32 %v1786, %v1794
        %v1827 = vmax.f32 %v1787, %v1795
        %v1828 = vmax.f32 %v1788, %v1796
        %v1829 = vmax.f32 %v1789, %v1797
        %v1830 = vmax.f32 %v1790, %v1798
        %v1831 = vmax.f32 %v1791, %v1799
        %v1832 = vmax.f32 %v1792, %v1800
        %v1833 = vmax.f32 %v1825, %v1801
        %v1834 = vmax.f32 %v1826, %v1802
        %v1835 = vmax.f32 %v1827, %v1803
        %v1836 = vmax.f32 %v1828, %v1804
        %v1837 = vmax.f32 %v1829, %v1805
        %v1838 = vmax.f32 %v1830, %v1806
        %v1839 = vmax.f32 %v1831, %v1807
        %v1840 = vmax.f32 %v1832, %v1808
        %v1841 = vmul.f32 %v1817, %v1833
        %v1842 = vmul.f32 %v1818, %v1834
        %v1843 = vmul.f32 %v1819, %v1835
        %v1844 = vmul.f32 %v1820, %v1836
        %v1845 = vmul.f32 %v1821, %v1837
        %v1846 = vmul.f32 %v1822, %v1838
        %v1847 = vmul.f32 %v1823, %v1839
        %v1848 = vmul.f32 %v1824, %v1840
        %vm1849 = vcmp.ge.f32.partialorder %v1841, 0.0
        %vm1850 = vcmp.ge.f32.partialorder %v1842, 0.0
        %vm1851 = vcmp.ge.f32.partialorder %v1843, 0.0
        %vm1852 = vcmp.ge.f32.partialorder %v1844, 0.0
        %vm1853 = vcmp.ge.f32.partialorder %v1845, 0.0
        %vm1854 = vcmp.ge.f32.partialorder %v1846, 0.0
        %vm1855 = vcmp.ge.f32.partialorder %v1847, 0.0
        %vm1856 = vcmp.ge.f32.partialorder %v1848, 0.0
        %v1857 = vadd.f32 %v1385, %v928
        %v1858 = vadd.f32 %v1386, %v928
        %v1859 = vadd.f32 %v1387, %v928
        %v1860 = vadd.f32 %v1388, %v928
        %v1861 = vadd.f32 %v1389, %v928
        %v1862 = vadd.f32 %v1390, %v928
        %v1863 = vadd.f32 %v1391, %v928
        %v1864 = vadd.f32 %v1392, %v928
        %v1865 = vadd.f32 %v1409, %v937
        %v1866 = vadd.f32 %v1410, %v937
        %v1867 = vadd.f32 %v1411, %v937
        %v1868 = vadd.f32 %v1412, %v937
        %v1869 = vadd.f32 %v1413, %v937
        %v1870 = vadd.f32 %v1414, %v937
        %v1871 = vadd.f32 %v1415, %v937
        %v1872 = vadd.f32 %v1416, %v937
        %v1873 = vadd.f32 %v1433, %v946
        %v1874 = vadd.f32 %v1434, %v946
        %v1875 = vadd.f32 %v1435, %v946
        %v1876 = vadd.f32 %v1436, %v946
        %v1877 = vadd.f32 %v1437, %v946
        %v1878 = vadd.f32 %v1438, %v946
        %v1879 = vadd.f32 %v1439, %v946
        %v1880 = vadd.f32 %v1440, %v946
        %v1881 = vmin.f32 %v1857, %v1865
        %v1882 = vmin.f32 %v1858, %v1866
        %v1883 = vmin.f32 %v1859, %v1867
        %v1884 = vmin.f32 %v1860, %v1868
        %v1885 = vmin.f32 %v1861, %v1869
        %v1886 = vmin.f32 %v1862, %v1870
        %v1887 = vmin.f32 %v1863, %v1871
        %v1888 = vmin.f32 %v1864, %v1872
        %v1889 = vmin.f32 %v1881, %v1873
        %v1890 = vmin.f32 %v1882, %v1874
        %v1891 = vmin.f32 %v1883, %v1875
        %v1892 = vmin.f32 %v1884, %v1876
        %v1893 = vmin.f32 %v1885, %v1877
        %v1894 = vmin.f32 %v1886, %v1878
        %v1895 = vmin.f32 %v1887, %v1879
        %v1896 = vmin.f32 %v1888, %v1880
        %v1897 = vmax.f32 %v1857, %v1865
        %v1898 = vmax.f32 %v1858, %v1866
        %v1899 = vmax.f32 %v1859, %v1867
        %v1900 = vmax.f32 %v1860, %v1868
        %v1901 = vmax.f32 %v1861, %v1869
        %v1902 = vmax.f32 %v1862, %v1870
        %v1903 = vmax.f32 %v1863, %v1871
        %v1904 = vmax.f32 %v1864, %v1872
        %v1905 = vmax.f32 %v1897, %v1873
        %v1906 = vmax.f32 %v1898, %v1874
        %v1907 = vmax.f32 %v1899, %v1875
        %v1908 = vmax.f32 %v1900, %v1876
        %v1909 = vmax.f32 %v1901, %v1877
        %v1910 = vmax.f32 %v1902, %v1878
        %v1911 = vmax.f32 %v1903, %v1879
        %v1912 = vmax.f32 %v1904, %v1880
        %v1913 = vmul.f32 %v1889, %v1905
        %v1914 = vmul.f32 %v1890, %v1906
        %v1915 = vmul.f32 %v1891, %v1907
        %v1916 = vmul.f32 %v1892, %v1908
        %v1917 = vmul.f32 %v1893, %v1909
        %v1918 = vmul.f32 %v1894, %v1910
        %v1919 = vmul.f32 %v1895, %v1911
        %v1920 = vmul.f32 %v1896, %v1912
        %vm1921 = vcmp.ge.f32.partialorder %v1913, 0.0
        %vm1922 = vcmp.ge.f32.partialorder %v1914, 0.0
        %vm1923 = vcmp.ge.f32.partialorder %v1915, 0.0
        %vm1924 = vcmp.ge.f32.partialorder %v1916, 0.0
        %vm1925 = vcmp.ge.f32.partialorder %v1917, 0.0
        %vm1926 = vcmp.ge.f32.partialorder %v1918, 0.0
        %vm1927 = vcmp.ge.f32.partialorder %v1919, 0.0
        %vm1928 = vcmp.ge.f32.partialorder %v1920, 0.0
        %vm1929 = vmor %vm1849, %vm1921
        %vm1930 = vmor %vm1850, %vm1922
        %vm1931 = vmor %vm1851, %vm1923
        %vm1932 = vmor %vm1852, %vm1924
        %vm1933 = vmor %vm1853, %vm1925
        %vm1934 = vmor %vm1854, %vm1926
        %vm1935 = vmor %vm1855, %vm1927
        %vm1936 = vmor %vm1856, %vm1928
        %v1937 = vadd.f32 %v1513, %v1011
        %v1938 = vadd.f32 %v1514, %v1011
        %v1939 = vadd.f32 %v1515, %v1011
        %v1940 = vadd.f32 %v1516, %v1011
        %v1941 = vadd.f32 %v1517, %v1011
        %v1942 = vadd.f32 %v1518, %v1011
        %v1943 = vadd.f32 %v1519, %v1011
        %v1944 = vadd.f32 %v1520, %v1011
        %v1945 = vadd.f32 %v1537, %v1020
        %v1946 = vadd.f32 %v1538, %v1020
        %v1947 = vadd.f32 %v1539, %v1020
        %v1948 = vadd.f32 %v1540, %v1020
        %v1949 = vadd.f32 %v1541, %v1020
        %v1950 = vadd.f32 %v1542, %v1020
        %v1951 = vadd.f32 %v1543, %v1020
        %v1952 = vadd.f32 %v1544, %v1020
        %v1953 = vadd.f32 %v1561, %v1029
        %v1954 = vadd.f32 %v1562, %v1029
        %v1955 = vadd.f32 %v1563, %v1029
        %v1956 = vadd.f32 %v1564, %v1029
        %v1957 = vadd.f32 %v1565, %v1029
        %v1958 = vadd.f32 %v1566, %v1029
        %v1959 = vadd.f32 %v1567, %v1029
        %v1960 = vadd.f32 %v1568, %v1029
        %v1961 = vmin.f32 %v1937, %v1945
        %v1962 = vmin.f32 %v1938, %v1946
        %v1963 = vmin.f32 %v1939, %v1947
        %v1964 = vmin.f32 %v1940, %v1948
        %v1965 = vmin.f32 %v1941, %v1949
        %v1966 = vmin.f32 %v1942, %v1950
        %v1967 = vmin.f32 %v1943, %v1951
        %v1968 = vmin.f32 %v1944, %v1952
        %v1969 = vmin.f32 %v1961, %v1953
        %v1970 = vmin.f32 %v1962, %v1954
        %v1971 = vmin.f32 %v1963, %v1955
        %v1972 = vmin.f32 %v1964, %v1956
        %v1973 = vmin.f32 %v1965, %v1957
        %v1974 = vmin.f32 %v1966, %v1958
        %v1975 = vmin.f32 %v1967, %v1959
        %v1976 = vmin.f32 %v1968, %v1960
        %v1977 = vmax.f32 %v1937, %v1945
        %v1978 = vmax.f32 %v1938, %v1946
        %v1979 = vmax.f32 %v1939, %v1947
        %v1980 = vmax.f32 %v1940, %v1948
        %v1981 = vmax.f32 %v1941, %v1949
        %v1982 = vmax.f32 %v1942, %v1950
        %v1983 = vmax.f32 %v1943, %v1951
        %v1984 = vmax.f32 %v1944, %v1952
        %v1985 = vmax.f32 %v1977, %v1953
        %v1986 = vmax.f32 %v1978, %v1954
        %v1987 = vmax.f32 %v1979, %v1955
        %v1988 = vmax.f32 %v1980, %v1956
        %v1989 = vmax.f32 %v1981, %v1957
        %v1990 = vmax.f32 %v1982, %v1958
        %v1991 = vmax.f32 %v1983, %v1959
        %v1992 = vmax.f32 %v1984, %v1960
        %v1993 = vmul.f32 %v1969, %v1985
        %v1994 = vmul.f32 %v1970, %v1986
        %v1995 = vmul.f32 %v1971, %v1987
        %v1996 = vmul.f32 %v1972, %v1988
        %v1997 = vmul.f32 %v1973, %v1989
        %v1998 = vmul.f32 %v1974, %v1990
        %v1999 = vmul.f32 %v1975, %v1991
        %v2000 = vmul.f32 %v1976, %v1992
        %vm2001 = vcmp.ge.f32.partialorder %v1993, 0.0
        %vm2002 = vcmp.ge.f32.partialorder %v1994, 0.0
        %vm2003 = vcmp.ge.f32.partialorder %v1995, 0.0
        %vm2004 = vcmp.ge.f32.partialorder %v1996, 0.0
        %vm2005 = vcmp.ge.f32.partialorder %v1997, 0.0
        %vm2006 = vcmp.ge.f32.partialorder %v1998, 0.0
        %vm2007 = vcmp.ge.f32.partialorder %v1999, 0.0
        %vm2008 = vcmp.ge.f32.partialorder %v2000, 0.0
        %vm2009 = vmor %vm1929, %vm2001
        %vm2010 = vmor %vm1930, %vm2002
        %vm2011 = vmor %vm1931, %vm2003
        %vm2012 = vmor %vm1932, %vm2004
        %vm2013 = vmor %vm1933, %vm2005
        %vm2014 = vmor %vm1934, %vm2006
        %vm2015 = vmor %vm1935, %vm2007
        %vm2016 = vmor %vm1936, %vm2008
        %v2017 = vadd.f32 %v1641, %v1094
        %v2018 = vadd.f32 %v1642, %v1094
        %v2019 = vadd.f32 %v1643, %v1094
        %v2020 = vadd.f32 %v1644, %v1094
        %v2021 = vadd.f32 %v1645, %v1094
        %v2022 = vadd.f32 %v1646, %v1094
        %v2023 = vadd.f32 %v1647, %v1094
        %v2024 = vadd.f32 %v1648, %v1094
        %v2025 = vadd.f32 %v1665, %v1103
        %v2026 = vadd.f32 %v1666, %v1103
        %v2027 = vadd.f32 %v1667, %v1103
        %v2028 = vadd.f32 %v1668, %v1103
        %v2029 = vadd.f32 %v1669, %v1103
        %v2030 = vadd.f32 %v1670, %v1103
        %v2031 = vadd.f32 %v1671, %v1103
        %v2032 = vadd.f32 %v1672, %v1103
        %v2033 = vadd.f32 %v1689, %v1112
        %v2034 = vadd.f32 %v1690, %v1112
        %v2035 = vadd.f32 %v1691, %v1112
        %v2036 = vadd.f32 %v1692, %v1112
        %v2037 = vadd.f32 %v1693, %v1112
        %v2038 = vadd.f32 %v1694, %v1112
        %v2039 = vadd.f32 %v1695, %v1112
        %v2040 = vadd.f32 %v1696, %v1112
        %v2041 = vmin.f32 %v2017, %v2025
        %v2042 = vmin.f32 %v2018, %v2026
        %v2043 = vmin.f32 %v2019, %v2027
        %v2044 = vmin.f32 %v2020, %v2028
        %v2045 = vmin.f32 %v2021, %v2029
        %v2046 = vmin.f32 %v2022, %v2030
        %v2047 = vmin.f32 %v2023, %v2031
        %v2048 = vmin.f32 %v2024, %v2032
        %v2049 = vmin.f32 %v2041, %v2033
        %v2050 = vmin.f32 %v2042, %v2034
        %v2051 = vmin.f32 %v2043, %v2035
        %v2052 = vmin.f32 %v2044, %v2036
        %v2053 = vmin.f32 %v2045, %v2037
        %v2054 = vmin.f32 %v2046, %v2038
        %v2055 = vmin.f32 %v2047, %v2039
        %v2056 = vmin.f32 %v2048, %v2040
        %v2057 = vmax.f32 %v2017, %v2025
        %v2058 = vmax.f32 %v2018, %v2026
        %v2059 = vmax.f32 %v2019, %v2027
        %v2060 = vmax.f32 %v2020, %v2028
        %v2061 = vmax.f32 %v2021, %v2029
        %v2062 = vmax.f32 %v2022, %v2030
        %v2063 = vmax.f32 %v2023, %v2031
        %v2064 = vmax.f32 %v2024, %v2032
        %v2065 = vmax.f32 %v2057, %v2033
        %v2066 = vmax.f32 %v2058, %v2034
        %v2067 = vmax.f32 %v2059, %v2035
        %v2068 = vmax.f32 %v2060, %v2036
        %v2069 = vmax.f32 %v2061, %v2037
        %v2070 = vmax.f32 %v2062, %v2038
        %v2071 = vmax.f32 %v2063, %v2039
        %v2072 = vmax.f32 %v2064, %v2040
        %v2073 = vmul.f32 %v2049, %v2065
        %v2074 = vmul.f32 %v2050, %v2066
        %v2075 = vmul.f32 %v2051, %v2067
        %v2076 = vmul.f32 %v2052, %v2068
        %v2077 = vmul.f32 %v2053, %v2069
        %v2078 = vmul.f32 %v2054, %v2070
        %v2079 = vmul.f32 %v2055, %v2071
        %v2080 = vmul.f32 %v2056, %v2072
        %vm2081 = vcmp.ge.f32.partialorder %v2073, 0.0
        %vm2082 = vcmp.ge.f32.partialorder %v2074, 0.0
        %vm2083 = vcmp.ge.f32.partialorder %v2075, 0.0
        %vm2084 = vcmp.ge.f32.partialorder %v2076, 0.0
        %vm2085 = vcmp.ge.f32.partialorder %v2077, 0.0
        %vm2086 = vcmp.ge.f32.partialorder %v2078, 0.0
        %vm2087 = vcmp.ge.f32.partialorder %v2079, 0.0
        %vm2088 = vcmp.ge.f32.partialorder %v2080, 0.0
        %vm2089 = vmor %vm2009, %vm2081
        %vm2090 = vmor %vm2010, %vm2082
        %vm2091 = vmor %vm2011, %vm2083
        %vm2092 = vmor %vm2012, %vm2084
        %vm2093 = vmor %vm2013, %vm2085
        %vm2094 = vmor %vm2014, %vm2086
        %vm2095 = vmor %vm2015, %vm2087
        %vm2096 = vmor %vm2016, %vm2088
        %v2097 = vsel %vm2089, 1, 0
        %v2098 = vsel %vm2090, 1, 0
        %v2099 = vsel %vm2091, 1, 0
        %v2100 = vsel %vm2092, 1, 0
        %v2101 = vsel %vm2093, 1, 0
        %v2102 = vsel %vm2094, 1, 0
        %v2103 = vsel %vm2095, 1, 0
        %v2104 = vsel %vm2096, 1, 0
        %v2105 = vcvt.s32.f32 %v2097
        %v2106 = vcvt.s32.f32 %v2098
        %v2107 = vcvt.s32.f32 %v2099
        %v2108 = vcvt.s32.f32 %v2100
        %v2109 = vcvt.s32.f32 %v2101
        %v2110 = vcvt.s32.f32 %v2102
        %v2111 = vcvt.s32.f32 %v2103
        %v2112 = vcvt.s32.f32 %v2104
        %v2113 = vadd.f32 %v1777, %v2105
        %v2114 = vadd.f32 %v1778, %v2106
        %v2115 = vadd.f32 %v1779, %v2107
        %v2116 = vadd.f32 %v1780, %v2108
        %v2117 = vadd.f32 %v1781, %v2109
        %v2118 = vadd.f32 %v1782, %v2110
        %v2119 = vadd.f32 %v1783, %v2111
        %v2120 = vadd.f32 %v1784, %v2112
        %v2121 = vmul.f32 %v2113, 0.25
        %v2122 = vmul.f32 %v2114, 0.25
        %v2123 = vmul.f32 %v2115, 0.25
        %v2124 = vmul.f32 %v2116, 0.25
        %v2125 = vmul.f32 %v2117, 0.25
        %v2126 = vmul.f32 %v2118, 0.25
        %v2127 = vmul.f32 %v2119, 0.25
        %v2128 = vmul.f32 %v2120, 0.25
        %vm2129 = vcmask 523264
        %2130 = vst.msk [vmem:[%s122] sm:$0xff] %vm2129, %v2121
        %2131 = vst.msk [vmem:[%s122 + $0x8] sm:$0xff] %vm2129, %v2122
        %2132 = vst.msk [vmem:[%s122 + $0x10] sm:$0xff] %vm2129, %v2123
        %2133 = vst.msk [vmem:[%s122 + $0x18] sm:$0xff] %vm2129, %v2124
        %2134 = vst.msk [vmem:[%s122 + $0x20] sm:$0xff] %vm2129, %v2125
        %2135 = vst.msk [vmem:[%s122 + $0x28] sm:$0xff] %vm2129, %v2126
        %2136 = vst.msk [vmem:[%s122 + $0x30] sm:$0xff] %vm2129, %v2127
        %2137 = vst.msk [vmem:[%s122 + $0x38] sm:$0xff] %vm2129, %v2128
        %s2138 = sand.u32 %s59, 1
        %s2139 = scalar_lea.sflag [#allocation3], %s2138
        %s2140 = sand.u32 %s59, 1
        %s2141 = smul.addr %s2140, 64
        %s2142 = scalar_lea.vmem [#allocation5], %s2141
        // Predicated region
        $region29: #{tpu_custom_call.1} parent=23 // pred_check
          %p2143 = pneg %p69
        $region30: #{tpu_custom_call.1} parent=23 // pred_check_branch
          %2145 = sbr.rel (%p2143) target = $region32
        $region31: #{tpu_custom_call.1} parent=23 // pred_region
          %s2146 = smul.u32 8, %s21
          %2148 = vsyncadd %s2139, 0
          %s2149 = smul.addr %s20, 8
          %s2150 = sadd.s32 %s2146, %s2149
          %s2151 = smul.addr %s2150, 8
          %s2152 = scalar_lea.hbm %s1, %s2151
          %s2153 = sshll.u32 %s2142, 4
          %s2154 = int_to_ptr.vmem [resolvable:$true] %s2153
          %s2155 = sshll.u32 %s2152, 4
          %s2156 = int_to_ptr.hbm [resolvable:$true] %s2155
          %2161 = dma.vmem_to_hbm [thread:$0]  %s2154, 1024, %s2156, %s2139, 128, 128, 8
        $region32: #{tpu_custom_call.1} parent=23 // pred_fallthru
          _
      $region24: #{tpu_custom_call.1} parent=5 // pred_fallthru
        _
      %p2162 = scmp.le.s32.totalorder 2, %s11
      // Predicated region
      $region33: #{tpu_custom_call.1} parent=5 // pred_check
        %p2163 = pneg %p2162
      $region34: #{tpu_custom_call.1} parent=5 // pred_check_branch
        %2165 = sbr.rel (%p2163) target = $region36
      $region35: #{tpu_custom_call.1} parent=5 // pred_region
        %s2166 = ssub.s32 %s11, 2
        // Predicated region
        $region37: #{tpu_custom_call.1} parent=35 // pred_check
          %p2167 = pneg %p75
        $region38: #{tpu_custom_call.1} parent=35 // pred_check_branch
          %2169 = sbr.rel (%p2167) target = $region40
        $region39: #{tpu_custom_call.1} parent=35 // pred_region
          %s2170 = sand.u32 %s60, 1
          %s2171 = scalar_lea.sflag [#allocation3], %s2170
          %s2172 = sand.u32 %s60, 1
          %s2173 = smul.addr %s2172, 64
          %s2174 = scalar_lea.vmem [#allocation5], %s2173
          %2176 = dma.done %s2171, 1024
        $region40: #{tpu_custom_call.1} parent=35 // pred_fallthru
          _
      $region36: #{tpu_custom_call.1} parent=5 // pred_fallthru
        _
    $region6: #{tpu_custom_call.1} parent=1 // loop_footer
      %s15 = sadd.s32 1, %s11
    $region7: #{tpu_custom_call.1} parent=1 // loop_footer_branch
      %10 = sbr.rel target = $region3
    $region8: #{tpu_custom_call.1} parent=1 // loop_exit
      _
    %2177 = vsyncpa [#allocation3], 1
    %s2178 = scalar_lea.sflag [#allocation3], 1
    %2179 = vsyncpa %s2178, 1
    %2180 = vsyncpa [#allocation4], 1
    %s2181 = scalar_lea.sflag [#allocation4], 1
    %2182 = vsyncpa %s2181, 1

</llo_original>
